<compile_context>
chip_gen: v7x
topology: tpu7x:2x2x1
jax: 0.10.0
libtpu: 0.0.40
codegen_flags: <defaults>
</compile_context>

<pallas_src>
import math

import jax
import jax.numpy as jnp
from jax.experimental import pallas as pl
from jax.experimental.pallas import tpu as pltpu

# ----------------------- mini-ViT configuration ----------------------------
BATCH = 2
IN_CHANS = 3
IMG = 16
PATCH = 4
N_PATCHES = (IMG // PATCH) * (IMG // PATCH)   # 16
TOKENS = N_PATCHES + 1                        # 17 (cls token)
PATCH_DIM = IN_CHANS * PATCH * PATCH          # 48
EMBED_DIM = 32
HEADS = 4
HEAD_DIM = EMBED_DIM // HEADS                 # 8
MLP_HIDDEN = 4 * EMBED_DIM                    # 128
DEPTH = 2
NUM_CLASSES = 10
NUM_CLASSES_PAD = 128                         # lane-dense head output
LN_EPS = 1e-6
ATTN_SCALE = 1.0 / math.sqrt(HEAD_DIM)


# ----------------------------- fused ViT kernel -----------------------------
def _vit_fused_kernel(tokens_ref, patch_w_ref, tok_add_ref,
                      ln1_g_ref, ln1_b_ref, qkv_w_ref, qkv_b_ref,
                      proj_w_ref, proj_b_ref, ln2_g_ref, ln2_b_ref,
                      fc1_w_ref, fc1_b_ref, fc2_w_ref, fc2_b_ref,
                      lnf_g_ref, lnf_b_ref, head_w_ref, head_b_ref,
                      out_ref):
    f32 = jnp.float32
    bf16 = jnp.bfloat16

    def mm(a, b):
        # bf16 MXU matmul with f32 accumulation.
        return jnp.dot(a.astype(bf16), b.astype(bf16),
                       preferred_element_type=f32)

    def mm_nt(a, b):
        # a @ b.T without materializing the transpose (contract last dims).
        return jax.lax.dot_general(
            a.astype(bf16), b.astype(bf16),
            dimension_numbers=(((1,), (1,)), ((), ())),
            preferred_element_type=f32)

    def layernorm(x, g, b):
        mu = jnp.mean(x, axis=-1, keepdims=True)
        xc = x - mu
        var = jnp.mean(xc * xc, axis=-1, keepdims=True)
        return xc * jax.lax.rsqrt(var + LN_EPS) * g + b

    def gelu_exact(x):
        # exact erf GELU -- matches nn.GELU() default used by timm ViT.
        # TODO(synk): tanh-approx GELU would hit the EUP but changes numerics.
        return 0.5 * x * (1.0 + jax.lax.erf(x * (1.0 / math.sqrt(2.0))))

    # ---- patch embedding + cls token + positional embedding ----
    # tokens row 0 is an all-zero "patch"; tok_add supplies (cls + pos) for it
    # and (patch_bias + pos) for the real patch rows, so one matmul covers all
    # TOKENS rows and no in-kernel concatenation is needed.
    x = mm(tokens_ref[0], patch_w_ref[...]) + tok_add_ref[...]        # (T, D) f32

    # ---- transformer blocks (DEPTH is small & static -> unrolled) ----
    for l in range(DEPTH):
        # --- MHSA (pre-LN); all intermediates stay in VMEM/vregs ---
        y = layernorm(x, ln1_g_ref[l], ln1_b_ref[l])
        qkv = mm(y, qkv_w_ref[l]) + qkv_b_ref[l]                      # (T, 3D)
        q = qkv[:, :EMBED_DIM]
        k = qkv[:, EMBED_DIM:2 * EMBED_DIM]
        v = qkv[:, 2 * EMBED_DIM:]
        pw = proj_w_ref[l]                                            # (D, D)
        attn_out = None
        for h in range(HEADS):                 # per-head 2D matmuls, static slices
            sl = slice(h * HEAD_DIM, (h + 1) * HEAD_DIM)
            s = mm_nt(q[:, sl], k[:, sl]) * ATTN_SCALE                # (T, T) f32
            mx = jnp.max(s, axis=-1, keepdims=True)
            p = jnp.exp(s - mx)
            inv = pl.reciprocal(jnp.sum(p, axis=-1, keepdims=True), approx=True)
            oh = mm(p * inv, v[:, sl])                                # (T, d)
            # fold this head's output straight into the output projection
            contrib = mm(oh, pw[sl, :])                               # (T, D)
            attn_out = contrib if attn_out is None else attn_out + contrib
        x = x + attn_out + proj_b_ref[l]                              # fused residual

        # --- MLP (pre-LN) ---
        y = layernorm(x, ln2_g_ref[l], ln2_b_ref[l])
        h1 = gelu_exact(mm(y, fc1_w_ref[l]) + fc1_b_ref[l])           # (T, 4D)
        x = x + mm(h1, fc2_w_ref[l]) + fc2_b_ref[l]                   # fused residual

    # ---- final LN (row-wise, so cls-row-only is exact) + lane-dense head ----
    cls_tok = layernorm(x[0:1, :], lnf_g_ref[...], lnf_b_ref[...])    # (1, D)
    logits = mm(cls_tok, head_w_ref[...]) + head_b_ref[...]           # (1, 128)
    out_ref[0] = logits.astype(out_ref.dtype)


# ------------------------------ parameters ---------------------------------
def init_params(key):
    def nrm(k, shape, std=0.02):
        return std * jax.random.normal(k, shape, dtype=jnp.float32)

    keys = iter(jax.random.split(key, 16))
    params = {
        "patch_w": nrm(next(keys), (PATCH_DIM, EMBED_DIM)),
        "patch_b": jnp.zeros((EMBED_DIM,), jnp.float32),
        "cls_token": nrm(next(keys), (1, EMBED_DIM)),
        "pos_embed": nrm(next(keys), (TOKENS, EMBED_DIM)),
        "ln_g": jnp.ones((EMBED_DIM,), jnp.float32),
        "ln_b": jnp.zeros((EMBED_DIM,), jnp.float32),
        "head_w": nrm(next(keys), (EMBED_DIM, NUM_CLASSES)),
        "head_b": jnp.zeros((NUM_CLASSES,), jnp.float32),
        # per-block params stacked on a leading depth axis so the fused kernel
        # indexes them with a static layer index (single DMA per array).
        "ln1_g": jnp.ones((DEPTH, 1, EMBED_DIM), jnp.float32),
        "ln1_b": jnp.zeros((DEPTH, 1, EMBED_DIM), jnp.float32),
        "qkv_w": nrm(next(keys), (DEPTH, EMBED_DIM, 3 * EMBED_DIM)),
        "qkv_b": jnp.zeros((DEPTH, 1, 3 * EMBED_DIM), jnp.float32),
        "proj_w": nrm(next(keys), (DEPTH, EMBED_DIM, EMBED_DIM)),
        "proj_b": jnp.zeros((DEPTH, 1, EMBED_DIM), jnp.float32),
        "ln2_g": jnp.ones((DEPTH, 1, EMBED_DIM), jnp.float32),
        "ln2_b": jnp.zeros((DEPTH, 1, EMBED_DIM), jnp.float32),
        "fc1_w": nrm(next(keys), (DEPTH, EMBED_DIM, MLP_HIDDEN)),
        "fc1_b": jnp.zeros((DEPTH, 1, MLP_HIDDEN), jnp.float32),
        "fc2_w": nrm(next(keys), (DEPTH, MLP_HIDDEN, EMBED_DIM)),
        "fc2_b": jnp.zeros((DEPTH, 1, EMBED_DIM), jnp.float32),
    }
    return params


# ------------------------------- forward -----------------------------------
def vit_forward(params, imgs):
    """imgs: (B, C, H, W) NCHW float32 -> logits (B, NUM_CLASSES)."""
    B, C, H, W = imgs.shape
    p = PATCH
    bf16 = jnp.bfloat16

    # Patch-embed conv (kernel=stride=p) == rearrange + matmul; rearrange is
    # one-time XLA layout glue.  Prepend a zero "patch" row for the cls token.
    x = imgs.reshape(B, C, H // p, p, W // p, p)
    x = x.transpose(0, 2, 4, 1, 3, 5).reshape(B, N_PATCHES, PATCH_DIM)
    tokens_in = jnp.concatenate(
        [jnp.zeros((B, 1, PATCH_DIM), imgs.dtype), x], axis=1)        # (B, T, 48)

    # Fold cls token, patch bias and positional embedding into one per-token
    # additive term (parameter-only preprocessing).
    tok_add = jnp.concatenate(
        [params["cls_token"],
         jnp.broadcast_to(params["patch_b"][None, :], (N_PATCHES, EMBED_DIM))],
        axis=0) + params["pos_embed"]                                  # (T, D)

    # Lane-dense padded classifier weights (slice back to NUM_CLASSES below).
    head_w = jnp.zeros((EMBED_DIM, NUM_CLASSES_PAD), jnp.float32)
    head_w = head_w.at[:, :NUM_CLASSES].set(params["head_w"])
    head_b = jnp.zeros((1, NUM_CLASSES_PAD), jnp.float32)
    head_b = head_b.at[0, :NUM_CLASSES].set(params["head_b"])

    ln_g = params["ln_g"].reshape(1, EMBED_DIM)
    ln_b = params["ln_b"].reshape(1, EMBED_DIM)

    full2 = lambda b: (0, 0)
    full3 = lambda b: (0, 0, 0)

    in_specs = [
        pl.BlockSpec((1, TOKENS, PATCH_DIM), lambda b: (b, 0, 0)),     # tokens_in
        pl.BlockSpec((PATCH_DIM, EMBED_DIM), full2),                   # patch_w
        pl.BlockSpec((TOKENS, EMBED_DIM), full2),                      # tok_add
        pl.BlockSpec((DEPTH, 1, EMBED_DIM), full3),                    # ln1_g
        pl.BlockSpec((DEPTH, 1, EMBED_DIM), full3),                    # ln1_b
        pl.BlockSpec((DEPTH, EMBED_DIM, 3 * EMBED_DIM), full3),        # qkv_w
        pl.BlockSpec((DEPTH, 1, 3 * EMBED_DIM), full3),                # qkv_b
        pl.BlockSpec((DEPTH, EMBED_DIM, EMBED_DIM), full3),            # proj_w
        pl.BlockSpec((DEPTH, 1, EMBED_DIM), full3),                    # proj_b
        pl.BlockSpec((DEPTH, 1, EMBED_DIM), full3),                    # ln2_g
        pl.BlockSpec((DEPTH, 1, EMBED_DIM), full3),                    # ln2_b
        pl.BlockSpec((DEPTH, EMBED_DIM, MLP_HIDDEN), full3),           # fc1_w
        pl.BlockSpec((DEPTH, 1, MLP_HIDDEN), full3),                   # fc1_b
        pl.BlockSpec((DEPTH, MLP_HIDDEN, EMBED_DIM), full3),           # fc2_w
        pl.BlockSpec((DEPTH, 1, EMBED_DIM), full3),                    # fc2_b
        pl.BlockSpec((1, EMBED_DIM), full2),                           # ln_g
        pl.BlockSpec((1, EMBED_DIM), full2),                           # ln_b
        pl.BlockSpec((EMBED_DIM, NUM_CLASSES_PAD), full2),             # head_w
        pl.BlockSpec((1, NUM_CLASSES_PAD), full2),                     # head_b
    ]

    logits_pad = pl.pallas_call(
        _vit_fused_kernel,
        out_shape=jax.ShapeDtypeStruct((B, 1, NUM_CLASSES_PAD), jnp.float32),
        grid=(B,),
        in_specs=in_specs,
        out_specs=pl.BlockSpec((1, 1, NUM_CLASSES_PAD), lambda b: (b, 0, 0)),
        compiler_params=pltpu.CompilerParams(
            dimension_semantics=("parallel",)),
    )(
        tokens_in,
        params["patch_w"].astype(bf16),          # bf16 weights -> half the DMA bytes
        tok_add,
        params["ln1_g"], params["ln1_b"],
        params["qkv_w"].astype(bf16), params["qkv_b"],
        params["proj_w"].astype(bf16), params["proj_b"],
        params["ln2_g"], params["ln2_b"],
        params["fc1_w"].astype(bf16), params["fc1_b"],
        params["fc2_w"].astype(bf16), params["fc2_b"],
        ln_g, ln_b,
        head_w.astype(bf16), head_b,
    )
    return logits_pad.reshape(B, NUM_CLASSES_PAD)[:, :NUM_CLASSES]


# --------------------------------- main -------------------------------------
if __name__ == "__main__":
    # TODO(synk): pretrained timm weight loading, nn.DataParallel and the
    # `.to(device)` dispatch have no Pallas equivalent; weights are synthetic.
    key = jax.random.PRNGKey(0)
    pkey, xkey = jax.random.split(key)
    params = init_params(pkey)
    imgs = jax.random.normal(xkey, (BATCH, IN_CHANS, IMG, IMG), dtype=jnp.float32)

    logits = jax.jit(vit_forward)(params, imgs)
    logits = jax.block_until_ready(logits)
    assert logits.shape == (BATCH, NUM_CLASSES)
    assert bool(jnp.all(jnp.isfinite(logits)))
    print("KERNEL_OK")
</pallas_src>

<mosaic_0001>
module attributes {stable_mosaic.version = 11 : i64} {
  func.func @_vit_fused_kernel(%arg0: i32, %arg1: memref<1x17x48xf32, #tpu.memory_space<vmem>>, %arg2: memref<48x32xbf16, #tpu.memory_space<vmem>>, %arg3: memref<17x32xf32, #tpu.memory_space<vmem>>, %arg4: memref<2x1x32xf32, #tpu.memory_space<vmem>>, %arg5: memref<2x1x32xf32, #tpu.memory_space<vmem>>, %arg6: memref<2x32x96xbf16, #tpu.memory_space<vmem>>, %arg7: memref<2x1x96xf32, #tpu.memory_space<vmem>>, %arg8: memref<2x32x32xbf16, #tpu.memory_space<vmem>>, %arg9: memref<2x1x32xf32, #tpu.memory_space<vmem>>, %arg10: memref<2x1x32xf32, #tpu.memory_space<vmem>>, %arg11: memref<2x1x32xf32, #tpu.memory_space<vmem>>, %arg12: memref<2x32x128xbf16, #tpu.memory_space<vmem>>, %arg13: memref<2x1x128xf32, #tpu.memory_space<vmem>>, %arg14: memref<2x128x32xbf16, #tpu.memory_space<vmem>>, %arg15: memref<2x1x32xf32, #tpu.memory_space<vmem>>, %arg16: memref<1x32xf32, #tpu.memory_space<vmem>>, %arg17: memref<1x32xf32, #tpu.memory_space<vmem>>, %arg18: memref<32x128xbf16, #tpu.memory_space<vmem>>, %arg19: memref<1x128xf32, #tpu.memory_space<vmem>>, %arg20: memref<1x1x128xf32, #tpu.memory_space<vmem>>) attributes {dimension_semantics = [#tpu.dimension_semantics<parallel>], iteration_bounds = array<i64: 2>, scalar_prefetch = 0 : i64, scratch_operands = 0 : i64, tpu.core_type = #tpu.core_type<tc>, window_params = [{transform_indices = @transform_0, window_bounds = array<i64: 1, 17, 48>}, {pipeline_mode = #tpu.pipeline_mode<synchronous>, transform_indices = @transform_1, window_bounds = array<i64: 48, 32>}, {pipeline_mode = #tpu.pipeline_mode<synchronous>, transform_indices = @transform_2, window_bounds = array<i64: 17, 32>}, {pipeline_mode = #tpu.pipeline_mode<synchronous>, transform_indices = @transform_3, window_bounds = array<i64: 2, 1, 32>}, {pipeline_mode = #tpu.pipeline_mode<synchronous>, transform_indices = @transform_4, window_bounds = array<i64: 2, 1, 32>}, {pipeline_mode = #tpu.pipeline_mode<synchronous>, transform_indices = @transform_5, window_bounds = array<i64: 2, 32, 96>}, {pipeline_mode = #tpu.pipeline_mode<synchronous>, transform_indices = @transform_6, window_bounds = array<i64: 2, 1, 96>}, {pipeline_mode = #tpu.pipeline_mode<synchronous>, transform_indices = @transform_7, window_bounds = array<i64: 2, 32, 32>}, {pipeline_mode = #tpu.pipeline_mode<synchronous>, transform_indices = @transform_8, window_bounds = array<i64: 2, 1, 32>}, {pipeline_mode = #tpu.pipeline_mode<synchronous>, transform_indices = @transform_9, window_bounds = array<i64: 2, 1, 32>}, {pipeline_mode = #tpu.pipeline_mode<synchronous>, transform_indices = @transform_10, window_bounds = array<i64: 2, 1, 32>}, {pipeline_mode = #tpu.pipeline_mode<synchronous>, transform_indices = @transform_11, window_bounds = array<i64: 2, 32, 128>}, {pipeline_mode = #tpu.pipeline_mode<synchronous>, transform_indices = @transform_12, window_bounds = array<i64: 2, 1, 128>}, {pipeline_mode = #tpu.pipeline_mode<synchronous>, transform_indices = @transform_13, window_bounds = array<i64: 2, 128, 32>}, {pipeline_mode = #tpu.pipeline_mode<synchronous>, transform_indices = @transform_14, window_bounds = array<i64: 2, 1, 32>}, {pipeline_mode = #tpu.pipeline_mode<synchronous>, transform_indices = @transform_15, window_bounds = array<i64: 1, 32>}, {pipeline_mode = #tpu.pipeline_mode<synchronous>, transform_indices = @transform_16, window_bounds = array<i64: 1, 32>}, {pipeline_mode = #tpu.pipeline_mode<synchronous>, transform_indices = @transform_17, window_bounds = array<i64: 32, 128>}, {pipeline_mode = #tpu.pipeline_mode<synchronous>, transform_indices = @transform_18, window_bounds = array<i64: 1, 128>}, {transform_indices = @transform_19, window_bounds = array<i64: 1, 1, 128>}]} {
    %c0 = arith.constant 0 : index
    %c0_0 = arith.constant 0 : index
    %c0_1 = arith.constant 0 : index
    %0 = vector.load %arg1[%c0, %c0_0, %c0_1] : memref<1x17x48xf32, #tpu.memory_space<vmem>>, vector<1x17x48xf32>
    %1 = vector.shape_cast %0 : vector<1x17x48xf32> to vector<17x48xf32>
    %c0_2 = arith.constant 0 : index
    %c0_3 = arith.constant 0 : index
    %2 = vector.load %arg2[%c0_2, %c0_3] : memref<48x32xbf16, #tpu.memory_space<vmem>>, vector<48x32xbf16>
    %3 = arith.truncf %1 : vector<17x48xf32> to vector<17x48xbf16>
    %cst = arith.constant dense<0.000000e+00> : vector<17x32xf32>
    %4 = tpu.matmul %3, %2, %cst {dimension_numbers = #tpu.dot_dimension_numbers<[1], [0], [0], [1], [0, 0, 1, 1], [], []>} : vector<17x48xbf16>, vector<48x32xbf16>, vector<17x32xf32> -> vector<17x32xf32>
    %c0_4 = arith.constant 0 : index
    %c0_5 = arith.constant 0 : index
    %5 = vector.load %arg3[%c0_4, %c0_5] : memref<17x32xf32, #tpu.memory_space<vmem>>, vector<17x32xf32>
    %6 = arith.addf %4, %5 : vector<17x32xf32>
    %c0_6 = arith.constant 0 : index
    %c0_7 = arith.constant 0 : index
    %c0_8 = arith.constant 0 : index
    %7 = vector.load %arg4[%c0_6, %c0_7, %c0_8] : memref<2x1x32xf32, #tpu.memory_space<vmem>>, vector<1x1x32xf32>
    %8 = vector.shape_cast %7 : vector<1x1x32xf32> to vector<1x32xf32>
    %c0_9 = arith.constant 0 : index
    %c0_10 = arith.constant 0 : index
    %c0_11 = arith.constant 0 : index
    %9 = vector.load %arg5[%c0_9, %c0_10, %c0_11] : memref<2x1x32xf32, #tpu.memory_space<vmem>>, vector<1x1x32xf32>
    %10 = vector.shape_cast %9 : vector<1x1x32xf32> to vector<1x32xf32>
    %cst_12 = arith.constant dense<0.000000e+00> : vector<17xf32>
    %11 = vector.multi_reduction <add>, %6, %cst_12 [1] : vector<17x32xf32> to vector<17xf32>
    %12 = vector.shape_cast %11 : vector<17xf32> to vector<17x1xf32>
    %cst_13 = arith.constant 3.200000e+01 : f32
    %13 = vector.broadcast %cst_13 : f32 to vector<17x1xf32>
    %14 = arith.divf %12, %13 : vector<17x1xf32>
    %15 = vector.broadcast %14 : vector<17x1xf32> to vector<17x32xf32>
    %16 = arith.subf %6, %15 : vector<17x32xf32>
    %17 = arith.mulf %16, %16 : vector<17x32xf32>
    %cst_14 = arith.constant dense<0.000000e+00> : vector<17xf32>
    %18 = vector.multi_reduction <add>, %17, %cst_14 [1] : vector<17x32xf32> to vector<17xf32>
    %19 = vector.shape_cast %18 : vector<17xf32> to vector<17x1xf32>
    %cst_15 = arith.constant 3.200000e+01 : f32
    %20 = vector.broadcast %cst_15 : f32 to vector<17x1xf32>
    %21 = arith.divf %19, %20 : vector<17x1xf32>
    %cst_16 = arith.constant 9.99999997E-7 : f32
    %22 = vector.broadcast %cst_16 : f32 to vector<17x1xf32>
    %23 = arith.addf %21, %22 : vector<17x1xf32>
    %24 = math.rsqrt %23 : vector<17x1xf32>
    %25 = vector.broadcast %24 : vector<17x1xf32> to vector<17x32xf32>
    %26 = arith.mulf %16, %25 : vector<17x32xf32>
    %27 = vector.broadcast %8 : vector<1x32xf32> to vector<17x32xf32>
    %28 = arith.mulf %26, %27 : vector<17x32xf32>
    %29 = vector.broadcast %10 : vector<1x32xf32> to vector<17x32xf32>
    %30 = arith.addf %28, %29 : vector<17x32xf32>
    %c0_17 = arith.constant 0 : index
    %c0_18 = arith.constant 0 : index
    %c0_19 = arith.constant 0 : index
    %31 = vector.load %arg6[%c0_17, %c0_18, %c0_19] : memref<2x32x96xbf16, #tpu.memory_space<vmem>>, vector<1x32x96xbf16>
    %32 = vector.shape_cast %31 : vector<1x32x96xbf16> to vector<32x96xbf16>
    %33 = arith.truncf %30 : vector<17x32xf32> to vector<17x32xbf16>
    %cst_20 = arith.constant dense<0.000000e+00> : vector<17x96xf32>
    %34 = tpu.matmul %33, %32, %cst_20 {dimension_numbers = #tpu.dot_dimension_numbers<[1], [0], [0], [1], [0, 0, 1, 1], [], []>} : vector<17x32xbf16>, vector<32x96xbf16>, vector<17x96xf32> -> vector<17x96xf32>
    %c0_21 = arith.constant 0 : index
    %c0_22 = arith.constant 0 : index
    %c0_23 = arith.constant 0 : index
    %35 = vector.load %arg7[%c0_21, %c0_22, %c0_23] : memref<2x1x96xf32, #tpu.memory_space<vmem>>, vector<1x1x96xf32>
    %36 = vector.shape_cast %35 : vector<1x1x96xf32> to vector<1x96xf32>
    %37 = vector.broadcast %36 : vector<1x96xf32> to vector<17x96xf32>
    %38 = arith.addf %34, %37 : vector<17x96xf32>
    %39 = vector.extract_strided_slice %38 {offsets = [0, 0], sizes = [17, 32], strides = [1, 1]} : vector<17x96xf32> to vector<17x32xf32>
    %40 = vector.extract_strided_slice %38 {offsets = [0, 32], sizes = [17, 32], strides = [1, 1]} : vector<17x96xf32> to vector<17x32xf32>
    %41 = vector.extract_strided_slice %38 {offsets = [0, 64], sizes = [17, 32], strides = [1, 1]} : vector<17x96xf32> to vector<17x32xf32>
    %c0_24 = arith.constant 0 : index
    %c0_25 = arith.constant 0 : index
    %c0_26 = arith.constant 0 : index
    %42 = vector.load %arg8[%c0_24, %c0_25, %c0_26] : memref<2x32x32xbf16, #tpu.memory_space<vmem>>, vector<1x32x32xbf16>
    %43 = vector.shape_cast %42 : vector<1x32x32xbf16> to vector<32x32xbf16>
    %44 = vector.extract_strided_slice %39 {offsets = [0, 0], sizes = [17, 8], strides = [1, 1]} : vector<17x32xf32> to vector<17x8xf32>
    %45 = vector.extract_strided_slice %40 {offsets = [0, 0], sizes = [17, 8], strides = [1, 1]} : vector<17x32xf32> to vector<17x8xf32>
    %46 = arith.truncf %44 : vector<17x8xf32> to vector<17x8xbf16>
    %47 = arith.truncf %45 : vector<17x8xf32> to vector<17x8xbf16>
    %cst_27 = arith.constant dense<0.000000e+00> : vector<17x17xf32>
    %48 = tpu.matmul %46, %47, %cst_27 {dimension_numbers = #tpu.dot_dimension_numbers<[1], [1], [0], [0], [0, 0, 1, 0], [], []>} : vector<17x8xbf16>, vector<17x8xbf16>, vector<17x17xf32> -> vector<17x17xf32>
    %cst_28 = arith.constant 0.353553385 : f32
    %49 = vector.broadcast %cst_28 : f32 to vector<17x17xf32>
    %50 = arith.mulf %48, %49 : vector<17x17xf32>
    %cst_29 = arith.constant dense<0xFF800000> : vector<17xf32>
    %51 = vector.multi_reduction <maximumf>, %50, %cst_29 [1] : vector<17x17xf32> to vector<17xf32>
    %52 = vector.shape_cast %51 : vector<17xf32> to vector<17x1xf32>
    %53 = vector.broadcast %52 : vector<17x1xf32> to vector<17x17xf32>
    %54 = arith.subf %50, %53 : vector<17x17xf32>
    %55 = math.exp %54 : vector<17x17xf32>
    %cst_30 = arith.constant dense<0.000000e+00> : vector<17xf32>
    %56 = vector.multi_reduction <add>, %55, %cst_30 [1] : vector<17x17xf32> to vector<17xf32>
    %57 = vector.shape_cast %56 : vector<17xf32> to vector<17x1xf32>
    %58 = tpu.reciprocal %57 {approx = true} : vector<17x1xf32> -> vector<17x1xf32>
    %59 = vector.broadcast %58 : vector<17x1xf32> to vector<17x17xf32>
    %60 = arith.mulf %55, %59 : vector<17x17xf32>
    %61 = vector.extract_strided_slice %41 {offsets = [0, 0], sizes = [17, 8], strides = [1, 1]} : vector<17x32xf32> to vector<17x8xf32>
    %62 = arith.truncf %60 : vector<17x17xf32> to vector<17x17xbf16>
    %63 = arith.truncf %61 : vector<17x8xf32> to vector<17x8xbf16>
    %cst_31 = arith.constant dense<0.000000e+00> : vector<17x8xf32>
    %64 = tpu.matmul %62, %63, %cst_31 {dimension_numbers = #tpu.dot_dimension_numbers<[1], [0], [0], [1], [0, 0, 1, 1], [], []>} : vector<17x17xbf16>, vector<17x8xbf16>, vector<17x8xf32> -> vector<17x8xf32>
    %65 = vector.extract_strided_slice %43 {offsets = [0, 0], sizes = [8, 32], strides = [1, 1]} : vector<32x32xbf16> to vector<8x32xbf16>
    %66 = arith.truncf %64 : vector<17x8xf32> to vector<17x8xbf16>
    %cst_32 = arith.constant dense<0.000000e+00> : vector<17x32xf32>
    %67 = tpu.matmul %66, %65, %cst_32 {dimension_numbers = #tpu.dot_dimension_numbers<[1], [0], [0], [1], [0, 0, 1, 1], [], []>} : vector<17x8xbf16>, vector<8x32xbf16>, vector<17x32xf32> -> vector<17x32xf32>
    %68 = vector.extract_strided_slice %39 {offsets = [0, 8], sizes = [17, 8], strides = [1, 1]} : vector<17x32xf32> to vector<17x8xf32>
    %69 = vector.extract_strided_slice %40 {offsets = [0, 8], sizes = [17, 8], strides = [1, 1]} : vector<17x32xf32> to vector<17x8xf32>
    %70 = arith.truncf %68 : vector<17x8xf32> to vector<17x8xbf16>
    %71 = arith.truncf %69 : vector<17x8xf32> to vector<17x8xbf16>
    %cst_33 = arith.constant dense<0.000000e+00> : vector<17x17xf32>
    %72 = tpu.matmul %70, %71, %cst_33 {dimension_numbers = #tpu.dot_dimension_numbers<[1], [1], [0], [0], [0, 0, 1, 0], [], []>} : vector<17x8xbf16>, vector<17x8xbf16>, vector<17x17xf32> -> vector<17x17xf32>
    %cst_34 = arith.constant 0.353553385 : f32
    %73 = vector.broadcast %cst_34 : f32 to vector<17x17xf32>
    %74 = arith.mulf %72, %73 : vector<17x17xf32>
    %cst_35 = arith.constant dense<0xFF800000> : vector<17xf32>
    %75 = vector.multi_reduction <maximumf>, %74, %cst_35 [1] : vector<17x17xf32> to vector<17xf32>
    %76 = vector.shape_cast %75 : vector<17xf32> to vector<17x1xf32>
    %77 = vector.broadcast %76 : vector<17x1xf32> to vector<17x17xf32>
    %78 = arith.subf %74, %77 : vector<17x17xf32>
    %79 = math.exp %78 : vector<17x17xf32>
    %cst_36 = arith.constant dense<0.000000e+00> : vector<17xf32>
    %80 = vector.multi_reduction <add>, %79, %cst_36 [1] : vector<17x17xf32> to vector<17xf32>
    %81 = vector.shape_cast %80 : vector<17xf32> to vector<17x1xf32>
    %82 = tpu.reciprocal %81 {approx = true} : vector<17x1xf32> -> vector<17x1xf32>
    %83 = vector.broadcast %82 : vector<17x1xf32> to vector<17x17xf32>
    %84 = arith.mulf %79, %83 : vector<17x17xf32>
    %85 = vector.extract_strided_slice %41 {offsets = [0, 8], sizes = [17, 8], strides = [1, 1]} : vector<17x32xf32> to vector<17x8xf32>
    %86 = arith.truncf %84 : vector<17x17xf32> to vector<17x17xbf16>
    %87 = arith.truncf %85 : vector<17x8xf32> to vector<17x8xbf16>
    %cst_37 = arith.constant dense<0.000000e+00> : vector<17x8xf32>
    %88 = tpu.matmul %86, %87, %cst_37 {dimension_numbers = #tpu.dot_dimension_numbers<[1], [0], [0], [1], [0, 0, 1, 1], [], []>} : vector<17x17xbf16>, vector<17x8xbf16>, vector<17x8xf32> -> vector<17x8xf32>
    %89 = vector.extract_strided_slice %43 {offsets = [8, 0], sizes = [8, 32], strides = [1, 1]} : vector<32x32xbf16> to vector<8x32xbf16>
    %90 = arith.truncf %88 : vector<17x8xf32> to vector<17x8xbf16>
    %cst_38 = arith.constant dense<0.000000e+00> : vector<17x32xf32>
    %91 = tpu.matmul %90, %89, %cst_38 {dimension_numbers = #tpu.dot_dimension_numbers<[1], [0], [0], [1], [0, 0, 1, 1], [], []>} : vector<17x8xbf16>, vector<8x32xbf16>, vector<17x32xf32> -> vector<17x32xf32>
    %92 = arith.addf %67, %91 : vector<17x32xf32>
    %93 = vector.extract_strided_slice %39 {offsets = [0, 16], sizes = [17, 8], strides = [1, 1]} : vector<17x32xf32> to vector<17x8xf32>
    %94 = vector.extract_strided_slice %40 {offsets = [0, 16], sizes = [17, 8], strides = [1, 1]} : vector<17x32xf32> to vector<17x8xf32>
    %95 = arith.truncf %93 : vector<17x8xf32> to vector<17x8xbf16>
    %96 = arith.truncf %94 : vector<17x8xf32> to vector<17x8xbf16>
    %cst_39 = arith.constant dense<0.000000e+00> : vector<17x17xf32>
    %97 = tpu.matmul %95, %96, %cst_39 {dimension_numbers = #tpu.dot_dimension_numbers<[1], [1], [0], [0], [0, 0, 1, 0], [], []>} : vector<17x8xbf16>, vector<17x8xbf16>, vector<17x17xf32> -> vector<17x17xf32>
    %cst_40 = arith.constant 0.353553385 : f32
    %98 = vector.broadcast %cst_40 : f32 to vector<17x17xf32>
    %99 = arith.mulf %97, %98 : vector<17x17xf32>
    %cst_41 = arith.constant dense<0xFF800000> : vector<17xf32>
    %100 = vector.multi_reduction <maximumf>, %99, %cst_41 [1] : vector<17x17xf32> to vector<17xf32>
    %101 = vector.shape_cast %100 : vector<17xf32> to vector<17x1xf32>
    %102 = vector.broadcast %101 : vector<17x1xf32> to vector<17x17xf32>
    %103 = arith.subf %99, %102 : vector<17x17xf32>
    %104 = math.exp %103 : vector<17x17xf32>
    %cst_42 = arith.constant dense<0.000000e+00> : vector<17xf32>
    %105 = vector.multi_reduction <add>, %104, %cst_42 [1] : vector<17x17xf32> to vector<17xf32>
    %106 = vector.shape_cast %105 : vector<17xf32> to vector<17x1xf32>
    %107 = tpu.reciprocal %106 {approx = true} : vector<17x1xf32> -> vector<17x1xf32>
    %108 = vector.broadcast %107 : vector<17x1xf32> to vector<17x17xf32>
    %109 = arith.mulf %104, %108 : vector<17x17xf32>
    %110 = vector.extract_strided_slice %41 {offsets = [0, 16], sizes = [17, 8], strides = [1, 1]} : vector<17x32xf32> to vector<17x8xf32>
    %111 = arith.truncf %109 : vector<17x17xf32> to vector<17x17xbf16>
    %112 = arith.truncf %110 : vector<17x8xf32> to vector<17x8xbf16>
    %cst_43 = arith.constant dense<0.000000e+00> : vector<17x8xf32>
    %113 = tpu.matmul %111, %112, %cst_43 {dimension_numbers = #tpu.dot_dimension_numbers<[1], [0], [0], [1], [0, 0, 1, 1], [], []>} : vector<17x17xbf16>, vector<17x8xbf16>, vector<17x8xf32> -> vector<17x8xf32>
    %114 = vector.extract_strided_slice %43 {offsets = [16, 0], sizes = [8, 32], strides = [1, 1]} : vector<32x32xbf16> to vector<8x32xbf16>
    %115 = arith.truncf %113 : vector<17x8xf32> to vector<17x8xbf16>
    %cst_44 = arith.constant dense<0.000000e+00> : vector<17x32xf32>
    %116 = tpu.matmul %115, %114, %cst_44 {dimension_numbers = #tpu.dot_dimension_numbers<[1], [0], [0], [1], [0, 0, 1, 1], [], []>} : vector<17x8xbf16>, vector<8x32xbf16>, vector<17x32xf32> -> vector<17x32xf32>
    %117 = arith.addf %92, %116 : vector<17x32xf32>
    %118 = vector.extract_strided_slice %39 {offsets = [0, 24], sizes = [17, 8], strides = [1, 1]} : vector<17x32xf32> to vector<17x8xf32>
    %119 = vector.extract_strided_slice %40 {offsets = [0, 24], sizes = [17, 8], strides = [1, 1]} : vector<17x32xf32> to vector<17x8xf32>
    %120 = arith.truncf %118 : vector<17x8xf32> to vector<17x8xbf16>
    %121 = arith.truncf %119 : vector<17x8xf32> to vector<17x8xbf16>
    %cst_45 = arith.constant dense<0.000000e+00> : vector<17x17xf32>
    %122 = tpu.matmul %120, %121, %cst_45 {dimension_numbers = #tpu.dot_dimension_numbers<[1], [1], [0], [0], [0, 0, 1, 0], [], []>} : vector<17x8xbf16>, vector<17x8xbf16>, vector<17x17xf32> -> vector<17x17xf32>
    %cst_46 = arith.constant 0.353553385 : f32
    %123 = vector.broadcast %cst_46 : f32 to vector<17x17xf32>
    %124 = arith.mulf %122, %123 : vector<17x17xf32>
    %cst_47 = arith.constant dense<0xFF800000> : vector<17xf32>
    %125 = vector.multi_reduction <maximumf>, %124, %cst_47 [1] : vector<17x17xf32> to vector<17xf32>
    %126 = vector.shape_cast %125 : vector<17xf32> to vector<17x1xf32>
    %127 = vector.broadcast %126 : vector<17x1xf32> to vector<17x17xf32>
    %128 = arith.subf %124, %127 : vector<17x17xf32>
    %129 = math.exp %128 : vector<17x17xf32>
    %cst_48 = arith.constant dense<0.000000e+00> : vector<17xf32>
    %130 = vector.multi_reduction <add>, %129, %cst_48 [1] : vector<17x17xf32> to vector<17xf32>
    %131 = vector.shape_cast %130 : vector<17xf32> to vector<17x1xf32>
    %132 = tpu.reciprocal %131 {approx = true} : vector<17x1xf32> -> vector<17x1xf32>
    %133 = vector.broadcast %132 : vector<17x1xf32> to vector<17x17xf32>
    %134 = arith.mulf %129, %133 : vector<17x17xf32>
    %135 = vector.extract_strided_slice %41 {offsets = [0, 24], sizes = [17, 8], strides = [1, 1]} : vector<17x32xf32> to vector<17x8xf32>
    %136 = arith.truncf %134 : vector<17x17xf32> to vector<17x17xbf16>
    %137 = arith.truncf %135 : vector<17x8xf32> to vector<17x8xbf16>
    %cst_49 = arith.constant dense<0.000000e+00> : vector<17x8xf32>
    %138 = tpu.matmul %136, %137, %cst_49 {dimension_numbers = #tpu.dot_dimension_numbers<[1], [0], [0], [1], [0, 0, 1, 1], [], []>} : vector<17x17xbf16>, vector<17x8xbf16>, vector<17x8xf32> -> vector<17x8xf32>
    %139 = vector.extract_strided_slice %43 {offsets = [24, 0], sizes = [8, 32], strides = [1, 1]} : vector<32x32xbf16> to vector<8x32xbf16>
    %140 = arith.truncf %138 : vector<17x8xf32> to vector<17x8xbf16>
    %cst_50 = arith.constant dense<0.000000e+00> : vector<17x32xf32>
    %141 = tpu.matmul %140, %139, %cst_50 {dimension_numbers = #tpu.dot_dimension_numbers<[1], [0], [0], [1], [0, 0, 1, 1], [], []>} : vector<17x8xbf16>, vector<8x32xbf16>, vector<17x32xf32> -> vector<17x32xf32>
    %142 = arith.addf %117, %141 : vector<17x32xf32>
    %143 = arith.addf %6, %142 : vector<17x32xf32>
    %c0_51 = arith.constant 0 : index
    %c0_52 = arith.constant 0 : index
    %c0_53 = arith.constant 0 : index
    %144 = vector.load %arg9[%c0_51, %c0_52, %c0_53] : memref<2x1x32xf32, #tpu.memory_space<vmem>>, vector<1x1x32xf32>
    %145 = vector.shape_cast %144 : vector<1x1x32xf32> to vector<1x32xf32>
    %146 = vector.broadcast %145 : vector<1x32xf32> to vector<17x32xf32>
    %147 = arith.addf %143, %146 : vector<17x32xf32>
    %c0_54 = arith.constant 0 : index
    %c0_55 = arith.constant 0 : index
    %c0_56 = arith.constant 0 : index
    %148 = vector.load %arg10[%c0_54, %c0_55, %c0_56] : memref<2x1x32xf32, #tpu.memory_space<vmem>>, vector<1x1x32xf32>
    %149 = vector.shape_cast %148 : vector<1x1x32xf32> to vector<1x32xf32>
    %c0_57 = arith.constant 0 : index
    %c0_58 = arith.constant 0 : index
    %c0_59 = arith.constant 0 : index
    %150 = vector.load %arg11[%c0_57, %c0_58, %c0_59] : memref<2x1x32xf32, #tpu.memory_space<vmem>>, vector<1x1x32xf32>
    %151 = vector.shape_cast %150 : vector<1x1x32xf32> to vector<1x32xf32>
    %cst_60 = arith.constant dense<0.000000e+00> : vector<17xf32>
    %152 = vector.multi_reduction <add>, %147, %cst_60 [1] : vector<17x32xf32> to vector<17xf32>
    %153 = vector.shape_cast %152 : vector<17xf32> to vector<17x1xf32>
    %cst_61 = arith.constant 3.200000e+01 : f32
    %154 = vector.broadcast %cst_61 : f32 to vector<17x1xf32>
    %155 = arith.divf %153, %154 : vector<17x1xf32>
    %156 = vector.broadcast %155 : vector<17x1xf32> to vector<17x32xf32>
    %157 = arith.subf %147, %156 : vector<17x32xf32>
    %158 = arith.mulf %157, %157 : vector<17x32xf32>
    %cst_62 = arith.constant dense<0.000000e+00> : vector<17xf32>
    %159 = vector.multi_reduction <add>, %158, %cst_62 [1] : vector<17x32xf32> to vector<17xf32>
    %160 = vector.shape_cast %159 : vector<17xf32> to vector<17x1xf32>
    %cst_63 = arith.constant 3.200000e+01 : f32
    %161 = vector.broadcast %cst_63 : f32 to vector<17x1xf32>
    %162 = arith.divf %160, %161 : vector<17x1xf32>
    %cst_64 = arith.constant 9.99999997E-7 : f32
    %163 = vector.broadcast %cst_64 : f32 to vector<17x1xf32>
    %164 = arith.addf %162, %163 : vector<17x1xf32>
    %165 = math.rsqrt %164 : vector<17x1xf32>
    %166 = vector.broadcast %165 : vector<17x1xf32> to vector<17x32xf32>
    %167 = arith.mulf %157, %166 : vector<17x32xf32>
    %168 = vector.broadcast %149 : vector<1x32xf32> to vector<17x32xf32>
    %169 = arith.mulf %167, %168 : vector<17x32xf32>
    %170 = vector.broadcast %151 : vector<1x32xf32> to vector<17x32xf32>
    %171 = arith.addf %169, %170 : vector<17x32xf32>
    %c0_65 = arith.constant 0 : index
    %c0_66 = arith.constant 0 : index
    %c0_67 = arith.constant 0 : index
    %172 = vector.load %arg12[%c0_65, %c0_66, %c0_67] : memref<2x32x128xbf16, #tpu.memory_space<vmem>>, vector<1x32x128xbf16>
    %173 = vector.shape_cast %172 : vector<1x32x128xbf16> to vector<32x128xbf16>
    %174 = arith.truncf %171 : vector<17x32xf32> to vector<17x32xbf16>
    %cst_68 = arith.constant dense<0.000000e+00> : vector<17x128xf32>
    %175 = tpu.matmul %174, %173, %cst_68 {dimension_numbers = #tpu.dot_dimension_numbers<[1], [0], [0], [1], [0, 0, 1, 1], [], []>} : vector<17x32xbf16>, vector<32x128xbf16>, vector<17x128xf32> -> vector<17x128xf32>
    %c0_69 = arith.constant 0 : index
    %c0_70 = arith.constant 0 : index
    %c0_71 = arith.constant 0 : index
    %176 = vector.load %arg13[%c0_69, %c0_70, %c0_71] : memref<2x1x128xf32, #tpu.memory_space<vmem>>, vector<1x1x128xf32>
    %177 = vector.shape_cast %176 : vector<1x1x128xf32> to vector<1x128xf32>
    %178 = vector.broadcast %177 : vector<1x128xf32> to vector<17x128xf32>
    %179 = arith.addf %175, %178 : vector<17x128xf32>
    %cst_72 = arith.constant 5.000000e-01 : f32
    %180 = vector.broadcast %cst_72 : f32 to vector<17x128xf32>
    %181 = arith.mulf %180, %179 : vector<17x128xf32>
    %cst_73 = arith.constant 0.707106769 : f32
    %182 = vector.broadcast %cst_73 : f32 to vector<17x128xf32>
    %183 = arith.mulf %179, %182 : vector<17x128xf32>
    %184 = math.erf %183 : vector<17x128xf32>
    %cst_74 = arith.constant 1.000000e+00 : f32
    %185 = vector.broadcast %cst_74 : f32 to vector<17x128xf32>
    %186 = arith.addf %185, %184 : vector<17x128xf32>
    %187 = arith.mulf %181, %186 : vector<17x128xf32>
    %c0_75 = arith.constant 0 : index
    %c0_76 = arith.constant 0 : index
    %c0_77 = arith.constant 0 : index
    %188 = vector.load %arg14[%c0_75, %c0_76, %c0_77] : memref<2x128x32xbf16, #tpu.memory_space<vmem>>, vector<1x128x32xbf16>
    %189 = vector.shape_cast %188 : vector<1x128x32xbf16> to vector<128x32xbf16>
    %190 = arith.truncf %187 : vector<17x128xf32> to vector<17x128xbf16>
    %cst_78 = arith.constant dense<0.000000e+00> : vector<17x32xf32>
    %191 = tpu.matmul %190, %189, %cst_78 {dimension_numbers = #tpu.dot_dimension_numbers<[1], [0], [0], [1], [0, 0, 1, 1], [], []>} : vector<17x128xbf16>, vector<128x32xbf16>, vector<17x32xf32> -> vector<17x32xf32>
    %192 = arith.addf %147, %191 : vector<17x32xf32>
    %c0_79 = arith.constant 0 : index
    %c0_80 = arith.constant 0 : index
    %c0_81 = arith.constant 0 : index
    %193 = vector.load %arg15[%c0_79, %c0_80, %c0_81] : memref<2x1x32xf32, #tpu.memory_space<vmem>>, vector<1x1x32xf32>
    %194 = vector.shape_cast %193 : vector<1x1x32xf32> to vector<1x32xf32>
    %195 = vector.broadcast %194 : vector<1x32xf32> to vector<17x32xf32>
    %196 = arith.addf %192, %195 : vector<17x32xf32>
    %c1 = arith.constant 1 : index
    %c0_82 = arith.constant 0 : index
    %c0_83 = arith.constant 0 : index
    %197 = vector.load %arg4[%c1, %c0_82, %c0_83] : memref<2x1x32xf32, #tpu.memory_space<vmem>>, vector<1x1x32xf32>
    %198 = vector.shape_cast %197 : vector<1x1x32xf32> to vector<1x32xf32>
    %c1_84 = arith.constant 1 : index
    %c0_85 = arith.constant 0 : index
    %c0_86 = arith.constant 0 : index
    %199 = vector.load %arg5[%c1_84, %c0_85, %c0_86] : memref<2x1x32xf32, #tpu.memory_space<vmem>>, vector<1x1x32xf32>
    %200 = vector.shape_cast %199 : vector<1x1x32xf32> to vector<1x32xf32>
    %cst_87 = arith.constant dense<0.000000e+00> : vector<17xf32>
    %201 = vector.multi_reduction <add>, %196, %cst_87 [1] : vector<17x32xf32> to vector<17xf32>
    %202 = vector.shape_cast %201 : vector<17xf32> to vector<17x1xf32>
    %cst_88 = arith.constant 3.200000e+01 : f32
    %203 = vector.broadcast %cst_88 : f32 to vector<17x1xf32>
    %204 = arith.divf %202, %203 : vector<17x1xf32>
    %205 = vector.broadcast %204 : vector<17x1xf32> to vector<17x32xf32>
    %206 = arith.subf %196, %205 : vector<17x32xf32>
    %207 = arith.mulf %206, %206 : vector<17x32xf32>
    %cst_89 = arith.constant dense<0.000000e+00> : vector<17xf32>
    %208 = vector.multi_reduction <add>, %207, %cst_89 [1] : vector<17x32xf32> to vector<17xf32>
    %209 = vector.shape_cast %208 : vector<17xf32> to vector<17x1xf32>
    %cst_90 = arith.constant 3.200000e+01 : f32
    %210 = vector.broadcast %cst_90 : f32 to vector<17x1xf32>
    %211 = arith.divf %209, %210 : vector<17x1xf32>
    %cst_91 = arith.constant 9.99999997E-7 : f32
    %212 = vector.broadcast %cst_91 : f32 to vector<17x1xf32>
    %213 = arith.addf %211, %212 : vector<17x1xf32>
    %214 = math.rsqrt %213 : vector<17x1xf32>
    %215 = vector.broadcast %214 : vector<17x1xf32> to vector<17x32xf32>
    %216 = arith.mulf %206, %215 : vector<17x32xf32>
    %217 = vector.broadcast %198 : vector<1x32xf32> to vector<17x32xf32>
    %218 = arith.mulf %216, %217 : vector<17x32xf32>
    %219 = vector.broadcast %200 : vector<1x32xf32> to vector<17x32xf32>
    %220 = arith.addf %218, %219 : vector<17x32xf32>
    %c1_92 = arith.constant 1 : index
    %c0_93 = arith.constant 0 : index
    %c0_94 = arith.constant 0 : index
    %221 = vector.load %arg6[%c1_92, %c0_93, %c0_94] : memref<2x32x96xbf16, #tpu.memory_space<vmem>>, vector<1x32x96xbf16>
    %222 = vector.shape_cast %221 : vector<1x32x96xbf16> to vector<32x96xbf16>
    %223 = arith.truncf %220 : vector<17x32xf32> to vector<17x32xbf16>
    %cst_95 = arith.constant dense<0.000000e+00> : vector<17x96xf32>
    %224 = tpu.matmul %223, %222, %cst_95 {dimension_numbers = #tpu.dot_dimension_numbers<[1], [0], [0], [1], [0, 0, 1, 1], [], []>} : vector<17x32xbf16>, vector<32x96xbf16>, vector<17x96xf32> -> vector<17x96xf32>
    %c1_96 = arith.constant 1 : index
    %c0_97 = arith.constant 0 : index
    %c0_98 = arith.constant 0 : index
    %225 = vector.load %arg7[%c1_96, %c0_97, %c0_98] : memref<2x1x96xf32, #tpu.memory_space<vmem>>, vector<1x1x96xf32>
    %226 = vector.shape_cast %225 : vector<1x1x96xf32> to vector<1x96xf32>
    %227 = vector.broadcast %226 : vector<1x96xf32> to vector<17x96xf32>
    %228 = arith.addf %224, %227 : vector<17x96xf32>
    %229 = vector.extract_strided_slice %228 {offsets = [0, 0], sizes = [17, 32], strides = [1, 1]} : vector<17x96xf32> to vector<17x32xf32>
    %230 = vector.extract_strided_slice %228 {offsets = [0, 32], sizes = [17, 32], strides = [1, 1]} : vector<17x96xf32> to vector<17x32xf32>
    %231 = vector.extract_strided_slice %228 {offsets = [0, 64], sizes = [17, 32], strides = [1, 1]} : vector<17x96xf32> to vector<17x32xf32>
    %c1_99 = arith.constant 1 : index
    %c0_100 = arith.constant 0 : index
    %c0_101 = arith.constant 0 : index
    %232 = vector.load %arg8[%c1_99, %c0_100, %c0_101] : memref<2x32x32xbf16, #tpu.memory_space<vmem>>, vector<1x32x32xbf16>
    %233 = vector.shape_cast %232 : vector<1x32x32xbf16> to vector<32x32xbf16>
    %234 = vector.extract_strided_slice %229 {offsets = [0, 0], sizes = [17, 8], strides = [1, 1]} : vector<17x32xf32> to vector<17x8xf32>
    %235 = vector.extract_strided_slice %230 {offsets = [0, 0], sizes = [17, 8], strides = [1, 1]} : vector<17x32xf32> to vector<17x8xf32>
    %236 = arith.truncf %234 : vector<17x8xf32> to vector<17x8xbf16>
    %237 = arith.truncf %235 : vector<17x8xf32> to vector<17x8xbf16>
    %cst_102 = arith.constant dense<0.000000e+00> : vector<17x17xf32>
    %238 = tpu.matmul %236, %237, %cst_102 {dimension_numbers = #tpu.dot_dimension_numbers<[1], [1], [0], [0], [0, 0, 1, 0], [], []>} : vector<17x8xbf16>, vector<17x8xbf16>, vector<17x17xf32> -> vector<17x17xf32>
    %cst_103 = arith.constant 0.353553385 : f32
    %239 = vector.broadcast %cst_103 : f32 to vector<17x17xf32>
    %240 = arith.mulf %238, %239 : vector<17x17xf32>
    %cst_104 = arith.constant dense<0xFF800000> : vector<17xf32>
    %241 = vector.multi_reduction <maximumf>, %240, %cst_104 [1] : vector<17x17xf32> to vector<17xf32>
    %242 = vector.shape_cast %241 : vector<17xf32> to vector<17x1xf32>
    %243 = vector.broadcast %242 : vector<17x1xf32> to vector<17x17xf32>
    %244 = arith.subf %240, %243 : vector<17x17xf32>
    %245 = math.exp %244 : vector<17x17xf32>
    %cst_105 = arith.constant dense<0.000000e+00> : vector<17xf32>
    %246 = vector.multi_reduction <add>, %245, %cst_105 [1] : vector<17x17xf32> to vector<17xf32>
    %247 = vector.shape_cast %246 : vector<17xf32> to vector<17x1xf32>
    %248 = tpu.reciprocal %247 {approx = true} : vector<17x1xf32> -> vector<17x1xf32>
    %249 = vector.broadcast %248 : vector<17x1xf32> to vector<17x17xf32>
    %250 = arith.mulf %245, %249 : vector<17x17xf32>
    %251 = vector.extract_strided_slice %231 {offsets = [0, 0], sizes = [17, 8], strides = [1, 1]} : vector<17x32xf32> to vector<17x8xf32>
    %252 = arith.truncf %250 : vector<17x17xf32> to vector<17x17xbf16>
    %253 = arith.truncf %251 : vector<17x8xf32> to vector<17x8xbf16>
    %cst_106 = arith.constant dense<0.000000e+00> : vector<17x8xf32>
    %254 = tpu.matmul %252, %253, %cst_106 {dimension_numbers = #tpu.dot_dimension_numbers<[1], [0], [0], [1], [0, 0, 1, 1], [], []>} : vector<17x17xbf16>, vector<17x8xbf16>, vector<17x8xf32> -> vector<17x8xf32>
    %255 = vector.extract_strided_slice %233 {offsets = [0, 0], sizes = [8, 32], strides = [1, 1]} : vector<32x32xbf16> to vector<8x32xbf16>
    %256 = arith.truncf %254 : vector<17x8xf32> to vector<17x8xbf16>
    %cst_107 = arith.constant dense<0.000000e+00> : vector<17x32xf32>
    %257 = tpu.matmul %256, %255, %cst_107 {dimension_numbers = #tpu.dot_dimension_numbers<[1], [0], [0], [1], [0, 0, 1, 1], [], []>} : vector<17x8xbf16>, vector<8x32xbf16>, vector<17x32xf32> -> vector<17x32xf32>
    %258 = vector.extract_strided_slice %229 {offsets = [0, 8], sizes = [17, 8], strides = [1, 1]} : vector<17x32xf32> to vector<17x8xf32>
    %259 = vector.extract_strided_slice %230 {offsets = [0, 8], sizes = [17, 8], strides = [1, 1]} : vector<17x32xf32> to vector<17x8xf32>
    %260 = arith.truncf %258 : vector<17x8xf32> to vector<17x8xbf16>
    %261 = arith.truncf %259 : vector<17x8xf32> to vector<17x8xbf16>
    %cst_108 = arith.constant dense<0.000000e+00> : vector<17x17xf32>
    %262 = tpu.matmul %260, %261, %cst_108 {dimension_numbers = #tpu.dot_dimension_numbers<[1], [1], [0], [0], [0, 0, 1, 0], [], []>} : vector<17x8xbf16>, vector<17x8xbf16>, vector<17x17xf32> -> vector<17x17xf32>
    %cst_109 = arith.constant 0.353553385 : f32
    %263 = vector.broadcast %cst_109 : f32 to vector<17x17xf32>
    %264 = arith.mulf %262, %263 : vector<17x17xf32>
    %cst_110 = arith.constant dense<0xFF800000> : vector<17xf32>
    %265 = vector.multi_reduction <maximumf>, %264, %cst_110 [1] : vector<17x17xf32> to vector<17xf32>
    %266 = vector.shape_cast %265 : vector<17xf32> to vector<17x1xf32>
    %267 = vector.broadcast %266 : vector<17x1xf32> to vector<17x17xf32>
    %268 = arith.subf %264, %267 : vector<17x17xf32>
    %269 = math.exp %268 : vector<17x17xf32>
    %cst_111 = arith.constant dense<0.000000e+00> : vector<17xf32>
    %270 = vector.multi_reduction <add>, %269, %cst_111 [1] : vector<17x17xf32> to vector<17xf32>
    %271 = vector.shape_cast %270 : vector<17xf32> to vector<17x1xf32>
    %272 = tpu.reciprocal %271 {approx = true} : vector<17x1xf32> -> vector<17x1xf32>
    %273 = vector.broadcast %272 : vector<17x1xf32> to vector<17x17xf32>
    %274 = arith.mulf %269, %273 : vector<17x17xf32>
    %275 = vector.extract_strided_slice %231 {offsets = [0, 8], sizes = [17, 8], strides = [1, 1]} : vector<17x32xf32> to vector<17x8xf32>
    %276 = arith.truncf %274 : vector<17x17xf32> to vector<17x17xbf16>
    %277 = arith.truncf %275 : vector<17x8xf32> to vector<17x8xbf16>
    %cst_112 = arith.constant dense<0.000000e+00> : vector<17x8xf32>
    %278 = tpu.matmul %276, %277, %cst_112 {dimension_numbers = #tpu.dot_dimension_numbers<[1], [0], [0], [1], [0, 0, 1, 1], [], []>} : vector<17x17xbf16>, vector<17x8xbf16>, vector<17x8xf32> -> vector<17x8xf32>
    %279 = vector.extract_strided_slice %233 {offsets = [8, 0], sizes = [8, 32], strides = [1, 1]} : vector<32x32xbf16> to vector<8x32xbf16>
    %280 = arith.truncf %278 : vector<17x8xf32> to vector<17x8xbf16>
    %cst_113 = arith.constant dense<0.000000e+00> : vector<17x32xf32>
    %281 = tpu.matmul %280, %279, %cst_113 {dimension_numbers = #tpu.dot_dimension_numbers<[1], [0], [0], [1], [0, 0, 1, 1], [], []>} : vector<17x8xbf16>, vector<8x32xbf16>, vector<17x32xf32> -> vector<17x32xf32>
    %282 = arith.addf %257, %281 : vector<17x32xf32>
    %283 = vector.extract_strided_slice %229 {offsets = [0, 16], sizes = [17, 8], strides = [1, 1]} : vector<17x32xf32> to vector<17x8xf32>
    %284 = vector.extract_strided_slice %230 {offsets = [0, 16], sizes = [17, 8], strides = [1, 1]} : vector<17x32xf32> to vector<17x8xf32>
    %285 = arith.truncf %283 : vector<17x8xf32> to vector<17x8xbf16>
    %286 = arith.truncf %284 : vector<17x8xf32> to vector<17x8xbf16>
    %cst_114 = arith.constant dense<0.000000e+00> : vector<17x17xf32>
    %287 = tpu.matmul %285, %286, %cst_114 {dimension_numbers = #tpu.dot_dimension_numbers<[1], [1], [0], [0], [0, 0, 1, 0], [], []>} : vector<17x8xbf16>, vector<17x8xbf16>, vector<17x17xf32> -> vector<17x17xf32>
    %cst_115 = arith.constant 0.353553385 : f32
    %288 = vector.broadcast %cst_115 : f32 to vector<17x17xf32>
    %289 = arith.mulf %287, %288 : vector<17x17xf32>
    %cst_116 = arith.constant dense<0xFF800000> : vector<17xf32>
    %290 = vector.multi_reduction <maximumf>, %289, %cst_116 [1] : vector<17x17xf32> to vector<17xf32>
    %291 = vector.shape_cast %290 : vector<17xf32> to vector<17x1xf32>
    %292 = vector.broadcast %291 : vector<17x1xf32> to vector<17x17xf32>
    %293 = arith.subf %289, %292 : vector<17x17xf32>
    %294 = math.exp %293 : vector<17x17xf32>
    %cst_117 = arith.constant dense<0.000000e+00> : vector<17xf32>
    %295 = vector.multi_reduction <add>, %294, %cst_117 [1] : vector<17x17xf32> to vector<17xf32>
    %296 = vector.shape_cast %295 : vector<17xf32> to vector<17x1xf32>
    %297 = tpu.reciprocal %296 {approx = true} : vector<17x1xf32> -> vector<17x1xf32>
    %298 = vector.broadcast %297 : vector<17x1xf32> to vector<17x17xf32>
    %299 = arith.mulf %294, %298 : vector<17x17xf32>
    %300 = vector.extract_strided_slice %231 {offsets = [0, 16], sizes = [17, 8], strides = [1, 1]} : vector<17x32xf32> to vector<17x8xf32>
    %301 = arith.truncf %299 : vector<17x17xf32> to vector<17x17xbf16>
    %302 = arith.truncf %300 : vector<17x8xf32> to vector<17x8xbf16>
    %cst_118 = arith.constant dense<0.000000e+00> : vector<17x8xf32>
    %303 = tpu.matmul %301, %302, %cst_118 {dimension_numbers = #tpu.dot_dimension_numbers<[1], [0], [0], [1], [0, 0, 1, 1], [], []>} : vector<17x17xbf16>, vector<17x8xbf16>, vector<17x8xf32> -> vector<17x8xf32>
    %304 = vector.extract_strided_slice %233 {offsets = [16, 0], sizes = [8, 32], strides = [1, 1]} : vector<32x32xbf16> to vector<8x32xbf16>
    %305 = arith.truncf %303 : vector<17x8xf32> to vector<17x8xbf16>
    %cst_119 = arith.constant dense<0.000000e+00> : vector<17x32xf32>
    %306 = tpu.matmul %305, %304, %cst_119 {dimension_numbers = #tpu.dot_dimension_numbers<[1], [0], [0], [1], [0, 0, 1, 1], [], []>} : vector<17x8xbf16>, vector<8x32xbf16>, vector<17x32xf32> -> vector<17x32xf32>
    %307 = arith.addf %282, %306 : vector<17x32xf32>
    %308 = vector.extract_strided_slice %229 {offsets = [0, 24], sizes = [17, 8], strides = [1, 1]} : vector<17x32xf32> to vector<17x8xf32>
    %309 = vector.extract_strided_slice %230 {offsets = [0, 24], sizes = [17, 8], strides = [1, 1]} : vector<17x32xf32> to vector<17x8xf32>
    %310 = arith.truncf %308 : vector<17x8xf32> to vector<17x8xbf16>
    %311 = arith.truncf %309 : vector<17x8xf32> to vector<17x8xbf16>
    %cst_120 = arith.constant dense<0.000000e+00> : vector<17x17xf32>
    %312 = tpu.matmul %310, %311, %cst_120 {dimension_numbers = #tpu.dot_dimension_numbers<[1], [1], [0], [0], [0, 0, 1, 0], [], []>} : vector<17x8xbf16>, vector<17x8xbf16>, vector<17x17xf32> -> vector<17x17xf32>
    %cst_121 = arith.constant 0.353553385 : f32
    %313 = vector.broadcast %cst_121 : f32 to vector<17x17xf32>
    %314 = arith.mulf %312, %313 : vector<17x17xf32>
    %cst_122 = arith.constant dense<0xFF800000> : vector<17xf32>
    %315 = vector.multi_reduction <maximumf>, %314, %cst_122 [1] : vector<17x17xf32> to vector<17xf32>
    %316 = vector.shape_cast %315 : vector<17xf32> to vector<17x1xf32>
    %317 = vector.broadcast %316 : vector<17x1xf32> to vector<17x17xf32>
    %318 = arith.subf %314, %317 : vector<17x17xf32>
    %319 = math.exp %318 : vector<17x17xf32>
    %cst_123 = arith.constant dense<0.000000e+00> : vector<17xf32>
    %320 = vector.multi_reduction <add>, %319, %cst_123 [1] : vector<17x17xf32> to vector<17xf32>
    %321 = vector.shape_cast %320 : vector<17xf32> to vector<17x1xf32>
    %322 = tpu.reciprocal %321 {approx = true} : vector<17x1xf32> -> vector<17x1xf32>
    %323 = vector.broadcast %322 : vector<17x1xf32> to vector<17x17xf32>
    %324 = arith.mulf %319, %323 : vector<17x17xf32>
    %325 = vector.extract_strided_slice %231 {offsets = [0, 24], sizes = [17, 8], strides = [1, 1]} : vector<17x32xf32> to vector<17x8xf32>
    %326 = arith.truncf %324 : vector<17x17xf32> to vector<17x17xbf16>
    %327 = arith.truncf %325 : vector<17x8xf32> to vector<17x8xbf16>
    %cst_124 = arith.constant dense<0.000000e+00> : vector<17x8xf32>
    %328 = tpu.matmul %326, %327, %cst_124 {dimension_numbers = #tpu.dot_dimension_numbers<[1], [0], [0], [1], [0, 0, 1, 1], [], []>} : vector<17x17xbf16>, vector<17x8xbf16>, vector<17x8xf32> -> vector<17x8xf32>
    %329 = vector.extract_strided_slice %233 {offsets = [24, 0], sizes = [8, 32], strides = [1, 1]} : vector<32x32xbf16> to vector<8x32xbf16>
    %330 = arith.truncf %328 : vector<17x8xf32> to vector<17x8xbf16>
    %cst_125 = arith.constant dense<0.000000e+00> : vector<17x32xf32>
    %331 = tpu.matmul %330, %329, %cst_125 {dimension_numbers = #tpu.dot_dimension_numbers<[1], [0], [0], [1], [0, 0, 1, 1], [], []>} : vector<17x8xbf16>, vector<8x32xbf16>, vector<17x32xf32> -> vector<17x32xf32>
    %332 = arith.addf %307, %331 : vector<17x32xf32>
    %333 = arith.addf %196, %332 : vector<17x32xf32>
    %c1_126 = arith.constant 1 : index
    %c0_127 = arith.constant 0 : index
    %c0_128 = arith.constant 0 : index
    %334 = vector.load %arg9[%c1_126, %c0_127, %c0_128] : memref<2x1x32xf32, #tpu.memory_space<vmem>>, vector<1x1x32xf32>
    %335 = vector.shape_cast %334 : vector<1x1x32xf32> to vector<1x32xf32>
    %336 = vector.broadcast %335 : vector<1x32xf32> to vector<17x32xf32>
    %337 = arith.addf %333, %336 : vector<17x32xf32>
    %c1_129 = arith.constant 1 : index
    %c0_130 = arith.constant 0 : index
    %c0_131 = arith.constant 0 : index
    %338 = vector.load %arg10[%c1_129, %c0_130, %c0_131] : memref<2x1x32xf32, #tpu.memory_space<vmem>>, vector<1x1x32xf32>
    %339 = vector.shape_cast %338 : vector<1x1x32xf32> to vector<1x32xf32>
    %c1_132 = arith.constant 1 : index
    %c0_133 = arith.constant 0 : index
    %c0_134 = arith.constant 0 : index
    %340 = vector.load %arg11[%c1_132, %c0_133, %c0_134] : memref<2x1x32xf32, #tpu.memory_space<vmem>>, vector<1x1x32xf32>
    %341 = vector.shape_cast %340 : vector<1x1x32xf32> to vector<1x32xf32>
    %cst_135 = arith.constant dense<0.000000e+00> : vector<17xf32>
    %342 = vector.multi_reduction <add>, %337, %cst_135 [1] : vector<17x32xf32> to vector<17xf32>
    %343 = vector.shape_cast %342 : vector<17xf32> to vector<17x1xf32>
    %cst_136 = arith.constant 3.200000e+01 : f32
    %344 = vector.broadcast %cst_136 : f32 to vector<17x1xf32>
    %345 = arith.divf %343, %344 : vector<17x1xf32>
    %346 = vector.broadcast %345 : vector<17x1xf32> to vector<17x32xf32>
    %347 = arith.subf %337, %346 : vector<17x32xf32>
    %348 = arith.mulf %347, %347 : vector<17x32xf32>
    %cst_137 = arith.constant dense<0.000000e+00> : vector<17xf32>
    %349 = vector.multi_reduction <add>, %348, %cst_137 [1] : vector<17x32xf32> to vector<17xf32>
    %350 = vector.shape_cast %349 : vector<17xf32> to vector<17x1xf32>
    %cst_138 = arith.constant 3.200000e+01 : f32
    %351 = vector.broadcast %cst_138 : f32 to vector<17x1xf32>
    %352 = arith.divf %350, %351 : vector<17x1xf32>
    %cst_139 = arith.constant 9.99999997E-7 : f32
    %353 = vector.broadcast %cst_139 : f32 to vector<17x1xf32>
    %354 = arith.addf %352, %353 : vector<17x1xf32>
    %355 = math.rsqrt %354 : vector<17x1xf32>
    %356 = vector.broadcast %355 : vector<17x1xf32> to vector<17x32xf32>
    %357 = arith.mulf %347, %356 : vector<17x32xf32>
    %358 = vector.broadcast %339 : vector<1x32xf32> to vector<17x32xf32>
    %359 = arith.mulf %357, %358 : vector<17x32xf32>
    %360 = vector.broadcast %341 : vector<1x32xf32> to vector<17x32xf32>
    %361 = arith.addf %359, %360 : vector<17x32xf32>
    %c1_140 = arith.constant 1 : index
    %c0_141 = arith.constant 0 : index
    %c0_142 = arith.constant 0 : index
    %362 = vector.load %arg12[%c1_140, %c0_141, %c0_142] : memref<2x32x128xbf16, #tpu.memory_space<vmem>>, vector<1x32x128xbf16>
    %363 = vector.shape_cast %362 : vector<1x32x128xbf16> to vector<32x128xbf16>
    %364 = arith.truncf %361 : vector<17x32xf32> to vector<17x32xbf16>
    %cst_143 = arith.constant dense<0.000000e+00> : vector<17x128xf32>
    %365 = tpu.matmul %364, %363, %cst_143 {dimension_numbers = #tpu.dot_dimension_numbers<[1], [0], [0], [1], [0, 0, 1, 1], [], []>} : vector<17x32xbf16>, vector<32x128xbf16>, vector<17x128xf32> -> vector<17x128xf32>
    %c1_144 = arith.constant 1 : index
    %c0_145 = arith.constant 0 : index
    %c0_146 = arith.constant 0 : index
    %366 = vector.load %arg13[%c1_144, %c0_145, %c0_146] : memref<2x1x128xf32, #tpu.memory_space<vmem>>, vector<1x1x128xf32>
    %367 = vector.shape_cast %366 : vector<1x1x128xf32> to vector<1x128xf32>
    %368 = vector.broadcast %367 : vector<1x128xf32> to vector<17x128xf32>
    %369 = arith.addf %365, %368 : vector<17x128xf32>
    %cst_147 = arith.constant 5.000000e-01 : f32
    %370 = vector.broadcast %cst_147 : f32 to vector<17x128xf32>
    %371 = arith.mulf %370, %369 : vector<17x128xf32>
    %cst_148 = arith.constant 0.707106769 : f32
    %372 = vector.broadcast %cst_148 : f32 to vector<17x128xf32>
    %373 = arith.mulf %369, %372 : vector<17x128xf32>
    %374 = math.erf %373 : vector<17x128xf32>
    %cst_149 = arith.constant 1.000000e+00 : f32
    %375 = vector.broadcast %cst_149 : f32 to vector<17x128xf32>
    %376 = arith.addf %375, %374 : vector<17x128xf32>
    %377 = arith.mulf %371, %376 : vector<17x128xf32>
    %c1_150 = arith.constant 1 : index
    %c0_151 = arith.constant 0 : index
    %c0_152 = arith.constant 0 : index
    %378 = vector.load %arg14[%c1_150, %c0_151, %c0_152] : memref<2x128x32xbf16, #tpu.memory_space<vmem>>, vector<1x128x32xbf16>
    %379 = vector.shape_cast %378 : vector<1x128x32xbf16> to vector<128x32xbf16>
    %380 = arith.truncf %377 : vector<17x128xf32> to vector<17x128xbf16>
    %cst_153 = arith.constant dense<0.000000e+00> : vector<17x32xf32>
    %381 = tpu.matmul %380, %379, %cst_153 {dimension_numbers = #tpu.dot_dimension_numbers<[1], [0], [0], [1], [0, 0, 1, 1], [], []>} : vector<17x128xbf16>, vector<128x32xbf16>, vector<17x32xf32> -> vector<17x32xf32>
    %382 = arith.addf %337, %381 : vector<17x32xf32>
    %c1_154 = arith.constant 1 : index
    %c0_155 = arith.constant 0 : index
    %c0_156 = arith.constant 0 : index
    %383 = vector.load %arg15[%c1_154, %c0_155, %c0_156] : memref<2x1x32xf32, #tpu.memory_space<vmem>>, vector<1x1x32xf32>
    %384 = vector.shape_cast %383 : vector<1x1x32xf32> to vector<1x32xf32>
    %385 = vector.broadcast %384 : vector<1x32xf32> to vector<17x32xf32>
    %386 = arith.addf %382, %385 : vector<17x32xf32>
    %387 = vector.extract_strided_slice %386 {offsets = [0, 0], sizes = [1, 32], strides = [1, 1]} : vector<17x32xf32> to vector<1x32xf32>
    %c0_157 = arith.constant 0 : index
    %c0_158 = arith.constant 0 : index
    %388 = vector.load %arg16[%c0_157, %c0_158] : memref<1x32xf32, #tpu.memory_space<vmem>>, vector<1x32xf32>
    %c0_159 = arith.constant 0 : index
    %c0_160 = arith.constant 0 : index
    %389 = vector.load %arg17[%c0_159, %c0_160] : memref<1x32xf32, #tpu.memory_space<vmem>>, vector<1x32xf32>
    %cst_161 = arith.constant dense<0.000000e+00> : vector<1xf32>
    %390 = vector.multi_reduction <add>, %387, %cst_161 [1] : vector<1x32xf32> to vector<1xf32>
    %391 = vector.shape_cast %390 : vector<1xf32> to vector<1x1xf32>
    %cst_162 = arith.constant 3.200000e+01 : f32
    %392 = vector.broadcast %cst_162 : f32 to vector<1x1xf32>
    %393 = arith.divf %391, %392 : vector<1x1xf32>
    %394 = vector.broadcast %393 : vector<1x1xf32> to vector<1x32xf32>
    %395 = arith.subf %387, %394 : vector<1x32xf32>
    %396 = arith.mulf %395, %395 : vector<1x32xf32>
    %cst_163 = arith.constant dense<0.000000e+00> : vector<1xf32>
    %397 = vector.multi_reduction <add>, %396, %cst_163 [1] : vector<1x32xf32> to vector<1xf32>
    %398 = vector.shape_cast %397 : vector<1xf32> to vector<1x1xf32>
    %cst_164 = arith.constant 3.200000e+01 : f32
    %399 = vector.broadcast %cst_164 : f32 to vector<1x1xf32>
    %400 = arith.divf %398, %399 : vector<1x1xf32>
    %cst_165 = arith.constant 9.99999997E-7 : f32
    %401 = vector.broadcast %cst_165 : f32 to vector<1x1xf32>
    %402 = arith.addf %400, %401 : vector<1x1xf32>
    %403 = math.rsqrt %402 : vector<1x1xf32>
    %404 = vector.broadcast %403 : vector<1x1xf32> to vector<1x32xf32>
    %405 = arith.mulf %395, %404 : vector<1x32xf32>
    %406 = arith.mulf %405, %388 : vector<1x32xf32>
    %407 = arith.addf %406, %389 : vector<1x32xf32>
    %c0_166 = arith.constant 0 : index
    %c0_167 = arith.constant 0 : index
    %408 = vector.load %arg18[%c0_166, %c0_167] : memref<32x128xbf16, #tpu.memory_space<vmem>>, vector<32x128xbf16>
    %409 = arith.truncf %407 : vector<1x32xf32> to vector<1x32xbf16>
    %cst_168 = arith.constant dense<0.000000e+00> : vector<1x128xf32>
    %410 = tpu.matmul %409, %408, %cst_168 {dimension_numbers = #tpu.dot_dimension_numbers<[1], [0], [0], [1], [0, 0, 1, 1], [], []>} : vector<1x32xbf16>, vector<32x128xbf16>, vector<1x128xf32> -> vector<1x128xf32>
    %c0_169 = arith.constant 0 : index
    %c0_170 = arith.constant 0 : index
    %411 = vector.load %arg19[%c0_169, %c0_170] : memref<1x128xf32, #tpu.memory_space<vmem>>, vector<1x128xf32>
    %412 = arith.addf %410, %411 : vector<1x128xf32>
    %c0_171 = arith.constant 0 : index
    %c0_172 = arith.constant 0 : index
    %c0_173 = arith.constant 0 : index
    %413 = vector.load %arg20[%c0_171, %c0_172, %c0_173] : memref<1x1x128xf32, #tpu.memory_space<vmem>>, vector<1x1x128xf32>
    %414 = vector.shape_cast %413 : vector<1x1x128xf32> to vector<1x128xf32>
    %415 = vector.shape_cast %412 : vector<1x128xf32> to vector<1x1x128xf32>
    tpu.vector_store %arg20[%c0_171, %c0_172, %c0_173], %415 {strides = array<i32>} : memref<1x1x128xf32, #tpu.memory_space<vmem>>, vector<1x1x128xf32>,
    return
  }
  func.func @transform_0(%arg0: i32) -> (i32, i32, i32) {
    %c0_i32 = arith.constant 0 : i32
    %c0_i32_0 = arith.constant 0 : i32
    %c0_i32_1 = arith.constant 0 : i32
    return %arg0, %c0_i32, %c0_i32_0 : i32, i32, i32
  }
  func.func @transform_1(%arg0: i32) -> (i32, i32) {
    %c0_i32 = arith.constant 0 : i32
    %c0_i32_0 = arith.constant 0 : i32
    %c0_i32_1 = arith.constant 0 : i32
    return %c0_i32, %c0_i32_0 : i32, i32
  }
  func.func @transform_2(%arg0: i32) -> (i32, i32) {
    %c0_i32 = arith.constant 0 : i32
    %c0_i32_0 = arith.constant 0 : i32
    %c0_i32_1 = arith.constant 0 : i32
    return %c0_i32, %c0_i32_0 : i32, i32
  }
  func.func @transform_3(%arg0: i32) -> (i32, i32, i32) {
    %c0_i32 = arith.constant 0 : i32
    %c0_i32_0 = arith.constant 0 : i32
    %c0_i32_1 = arith.constant 0 : i32
    %c0_i32_2 = arith.constant 0 : i32
    return %c0_i32, %c0_i32_0, %c0_i32_1 : i32, i32, i32
  }
  func.func @transform_4(%arg0: i32) -> (i32, i32, i32) {
    %c0_i32 = arith.constant 0 : i32
    %c0_i32_0 = arith.constant 0 : i32
    %c0_i32_1 = arith.constant 0 : i32
    %c0_i32_2 = arith.constant 0 : i32
    return %c0_i32, %c0_i32_0, %c0_i32_1 : i32, i32, i32
  }
  func.func @transform_5(%arg0: i32) -> (i32, i32, i32) {
    %c0_i32 = arith.constant 0 : i32
    %c0_i32_0 = arith.constant 0 : i32
    %c0_i32_1 = arith.constant 0 : i32
    %c0_i32_2 = arith.constant 0 : i32
    return %c0_i32, %c0_i32_0, %c0_i32_1 : i32, i32, i32
  }
  func.func @transform_6(%arg0: i32) -> (i32, i32, i32) {
    %c0_i32 = arith.constant 0 : i32
    %c0_i32_0 = arith.constant 0 : i32
    %c0_i32_1 = arith.constant 0 : i32
    %c0_i32_2 = arith.constant 0 : i32
    return %c0_i32, %c0_i32_0, %c0_i32_1 : i32, i32, i32
  }
  func.func @transform_7(%arg0: i32) -> (i32, i32, i32) {
    %c0_i32 = arith.constant 0 : i32
    %c0_i32_0 = arith.constant 0 : i32
    %c0_i32_1 = arith.constant 0 : i32
    %c0_i32_2 = arith.constant 0 : i32
    return %c0_i32, %c0_i32_0, %c0_i32_1 : i32, i32, i32
  }
  func.func @transform_8(%arg0: i32) -> (i32, i32, i32) {
    %c0_i32 = arith.constant 0 : i32
    %c0_i32_0 = arith.constant 0 : i32
    %c0_i32_1 = arith.constant 0 : i32
    %c0_i32_2 = arith.constant 0 : i32
    return %c0_i32, %c0_i32_0, %c0_i32_1 : i32, i32, i32
  }
  func.func @transform_9(%arg0: i32) -> (i32, i32, i32) {
    %c0_i32 = arith.constant 0 : i32
    %c0_i32_0 = arith.constant 0 : i32
    %c0_i32_1 = arith.constant 0 : i32
    %c0_i32_2 = arith.constant 0 : i32
    return %c0_i32, %c0_i32_0, %c0_i32_1 : i32, i32, i32
  }
  func.func @transform_10(%arg0: i32) -> (i32, i32, i32) {
    %c0_i32 = arith.constant 0 : i32
    %c0_i32_0 = arith.constant 0 : i32
    %c0_i32_1 = arith.constant 0 : i32
    %c0_i32_2 = arith.constant 0 : i32
    return %c0_i32, %c0_i32_0, %c0_i32_1 : i32, i32, i32
  }
  func.func @transform_11(%arg0: i32) -> (i32, i32, i32) {
    %c0_i32 = arith.constant 0 : i32
    %c0_i32_0 = arith.constant 0 : i32
    %c0_i32_1 = arith.constant 0 : i32
    %c0_i32_2 = arith.constant 0 : i32
    return %c0_i32, %c0_i32_0, %c0_i32_1 : i32, i32, i32
  }
  func.func @transform_12(%arg0: i32) -> (i32, i32, i32) {
    %c0_i32 = arith.constant 0 : i32
    %c0_i32_0 = arith.constant 0 : i32
    %c0_i32_1 = arith.constant 0 : i32
    %c0_i32_2 = arith.constant 0 : i32
    return %c0_i32, %c0_i32_0, %c0_i32_1 : i32, i32, i32
  }
  func.func @transform_13(%arg0: i32) -> (i32, i32, i32) {
    %c0_i32 = arith.constant 0 : i32
    %c0_i32_0 = arith.constant 0 : i32
    %c0_i32_1 = arith.constant 0 : i32
    %c0_i32_2 = arith.constant 0 : i32
    return %c0_i32, %c0_i32_0, %c0_i32_1 : i32, i32, i32
  }
  func.func @transform_14(%arg0: i32) -> (i32, i32, i32) {
    %c0_i32 = arith.constant 0 : i32
    %c0_i32_0 = arith.constant 0 : i32
    %c0_i32_1 = arith.constant 0 : i32
    %c0_i32_2 = arith.constant 0 : i32
    return %c0_i32, %c0_i32_0, %c0_i32_1 : i32, i32, i32
  }
  func.func @transform_15(%arg0: i32) -> (i32, i32) {
    %c0_i32 = arith.constant 0 : i32
    %c0_i32_0 = arith.constant 0 : i32
    %c0_i32_1 = arith.constant 0 : i32
    return %c0_i32, %c0_i32_0 : i32, i32
  }
  func.func @transform_16(%arg0: i32) -> (i32, i32) {
    %c0_i32 = arith.constant 0 : i32
    %c0_i32_0 = arith.constant 0 : i32
    %c0_i32_1 = arith.constant 0 : i32
    return %c0_i32, %c0_i32_0 : i32, i32
  }
  func.func @transform_17(%arg0: i32) -> (i32, i32) {
    %c0_i32 = arith.constant 0 : i32
    %c0_i32_0 = arith.constant 0 : i32
    %c0_i32_1 = arith.constant 0 : i32
    return %c0_i32, %c0_i32_0 : i32, i32
  }
  func.func @transform_18(%arg0: i32) -> (i32, i32) {
    %c0_i32 = arith.constant 0 : i32
    %c0_i32_0 = arith.constant 0 : i32
    %c0_i32_1 = arith.constant 0 : i32
    return %c0_i32, %c0_i32_0 : i32, i32
  }
  func.func @transform_19(%arg0: i32) -> (i32, i32, i32) {
    %c0_i32 = arith.constant 0 : i32
    %c0_i32_0 = arith.constant 0 : i32
    %c0_i32_1 = arith.constant 0 : i32
    return %arg0, %c0_i32, %c0_i32_0 : i32, i32, i32
  }
}

</mosaic_0001>

<llo_original>
// kernel: vit_forward.1
$region0: #{vit_forward.1}
  #allocation0 [shape = 'u32[]', space=smem, size = 0x4, offset = 0x4, fixed_abs, tag = 'smem constant byte address 0x4 - core index']
  #allocation1 [shape = 'u32[144,128]{1,0:T(1,128)}', space=vmem, size = 0x12000, scoped, tag = 'internal scratch']
  %s0 = inlined_call_operand.vmem [shape: f32[2,17,48], index: 0, kind: input, shape index: {}]
  %s1 = inlined_call_operand.vmem [shape: bf16[48,32], index: 1, kind: input, shape index: {}]
  %s2 = inlined_call_operand.vmem [shape: f32[17,32], index: 2, kind: input, shape index: {}]
  %s3 = inlined_call_operand.vmem [shape: f32[2,1,32], index: 3, kind: input, shape index: {}]
  %s4 = inlined_call_operand.vmem [shape: f32[2,1,32], index: 4, kind: input, shape index: {}]
  %s5 = inlined_call_operand.vmem [shape: bf16[2,32,96], index: 5, kind: input, shape index: {}]
  %s6 = inlined_call_operand.vmem [shape: f32[2,1,96], index: 6, kind: input, shape index: {}]
  %s7 = inlined_call_operand.vmem [shape: bf16[2,32,32], index: 7, kind: input, shape index: {}]
  %s8 = inlined_call_operand.vmem [shape: f32[2,1,32], index: 8, kind: input, shape index: {}]
  %s9 = inlined_call_operand.vmem [shape: f32[2,1,32], index: 9, kind: input, shape index: {}]
  %s10 = inlined_call_operand.vmem [shape: f32[2,1,32], index: 10, kind: input, shape index: {}]
  %s11 = inlined_call_operand.vmem [shape: bf16[2,32,128], index: 11, kind: input, shape index: {}]
  %s12 = inlined_call_operand.vmem [shape: f32[2,1,128], index: 12, kind: input, shape index: {}]
  %s13 = inlined_call_operand.vmem [shape: bf16[2,128,32], index: 13, kind: input, shape index: {}]
  %s14 = inlined_call_operand.vmem [shape: f32[2,1,32], index: 14, kind: input, shape index: {}]
  %s15 = inlined_call_operand.vmem [shape: f32[1,32], index: 15, kind: input, shape index: {}]
  %s16 = inlined_call_operand.vmem [shape: f32[1,32], index: 16, kind: input, shape index: {}]
  %s17 = inlined_call_operand.vmem [shape: bf16[32,128], index: 17, kind: input, shape index: {}]
  %s18 = inlined_call_operand.vmem [shape: f32[1,128], index: 18, kind: input, shape index: {}]
  %s19 = inlined_call_operand.hbm [shape: f32[2,1,128], index: 19, kind: output, shape index: {}]
  %s20 = sld [smem:[#allocation0]]
  $region109: #{vit_forward.1} parent=0
    _
  %s22 = ssub.s32 1, %s20
  %s23 = scalar_select 0, %s22, %s20
  $region1: #{vit_forward.1} parent=0
    #allocation2 [shape = 'u8[1024]{0}', space=vmem, size = 0x400, scoped, tag = 'output window, operand 0']
    #allocation3 [shape = 's32[2]{0}', space=sflag, size = 0x8, scoped, tag = 'scoped memory for vit_forward.1']
    %24 = vsyncpa [#allocation3], 0
    %s25 = scalar_lea.sflag [#allocation3], 1
    %26 = vsyncpa %s25, 0
    loop: start=0, step=1, limit=4
    $region2: #{vit_forward.1} parent=1 // loop_pre_header
      _
    $region3: #{vit_forward.1} parent=1 // loop_header
      %s28 = sphi 0, %s32
      %p29 = scmp.ge.s32.totalorder %s28, 4
      %s38 = sphi 0, %s40
      %s41 = sphi 0, %s38
      %s42 = sphi 0, %s41
      %s58 = sphi 0, %s42
      %s62 = sphi 0, %s62
      %s64 = sphi 0, %s62
      %s65 = sphi 0, %s64
      %s79 = sphi 0, %s65
      %s83 = sphi 0, %s83
      %s85 = sphi 0, %s83
      %s86 = sphi 0, %s85
      %s100 = sphi 0, %s86
      %s104 = sphi 0, %s104
      %s106 = sphi 0, %s104
      %s107 = sphi 0, %s106
      %s121 = sphi 0, %s107
      %s125 = sphi 0, %s125
      %s127 = sphi 0, %s125
      %s128 = sphi 0, %s127
      %s142 = sphi 0, %s128
      %s146 = sphi 0, %s146
      %s148 = sphi 0, %s146
      %s149 = sphi 0, %s148
      %s163 = sphi 0, %s149
      %s167 = sphi 0, %s167
      %s169 = sphi 0, %s167
      %s170 = sphi 0, %s169
      %s184 = sphi 0, %s170
      %s188 = sphi 0, %s188
      %s190 = sphi 0, %s188
      %s191 = sphi 0, %s190
      %s205 = sphi 0, %s191
      %s209 = sphi 0, %s209
      %s211 = sphi 0, %s209
      %s212 = sphi 0, %s211
      %s226 = sphi 0, %s212
      %s230 = sphi 0, %s230
      %s232 = sphi 0, %s230
      %s233 = sphi 0, %s232
      %s247 = sphi 0, %s233
      %s251 = sphi 0, %s251
      %s253 = sphi 0, %s251
      %s254 = sphi 0, %s253
      %s268 = sphi 0, %s254
      %s272 = sphi 0, %s272
      %s274 = sphi 0, %s272
      %s275 = sphi 0, %s274
      %s289 = sphi 0, %s275
      %s293 = sphi 0, %s293
      %s295 = sphi 0, %s293
      %s296 = sphi 0, %s295
      %s310 = sphi 0, %s296
      %s314 = sphi 0, %s314
      %s316 = sphi 0, %s314
      %s317 = sphi 0, %s316
      %s331 = sphi 0, %s317
      %s335 = sphi 0, %s335
      %s337 = sphi 0, %s335
      %s338 = sphi 0, %s337
      %s352 = sphi 0, %s338
      %s356 = sphi 0, %s356
      %s358 = sphi 0, %s356
      %s359 = sphi 0, %s358
      %s373 = sphi 0, %s359
      %s377 = sphi 0, %s377
      %s379 = sphi 0, %s377
      %s380 = sphi 0, %s379
      %s394 = sphi 0, %s380
      %s398 = sphi 0, %s398
      %s400 = sphi 0, %s398
      %s401 = sphi 0, %s400
      %s415 = sphi 0, %s401
      %s419 = sphi 0, %s419
      %s421 = sphi 0, %s419
      %s422 = sphi 0, %s421
      %s436 = sphi 0, %s422
      %s442 = sphi 0, %s444
      %s445 = sphi 0, %s442
      %s446 = sphi 0, %s445
      %s462 = sphi 0, %s446
    $region4: #{vit_forward.1} parent=1 // loop_header_branch
      %31 = sbr.rel (%p29) target = $region8
    $region5: #{vit_forward.1} parent=1 // loop_body
      %s33 = ssub.s32 %s28, 1
      %s34 = ssub.s32 %s28, 2
      %s35 = sadd.s32 %s28, 1
      %s36 = ssub.s32 %s28, %s35
      %p37 = scmp.eq.s32.totalorder %s36, 0
      %s39 = sadd.s32 %s38, 1
      %s40 = scalar_select %p37, %s38, %s39
      %p43 = pneg %p37
      %p44 = scmp.eq.s32.totalorder %s28, 1
      %p45 = por %p43, %p44
      %p46 = scmp.ne.s32.totalorder %s38, %s41
      %p47 = scmp.eq.s32.totalorder %s28, 0
      %p48 = por %p46, %p47
      %p49 = scmp.ne.s32.totalorder %s38, %s41
      %p50 = scmp.eq.s32.totalorder %s33, 1
      %p51 = por %p49, %p50
      %p52 = scmp.ne.s32.totalorder %s41, %s42
      %p53 = scmp.eq.s32.totalorder %s33, 0
      %p54 = por %p52, %p53
      %p55 = scmp.ne.s32.totalorder %s41, %s42
      %p56 = scmp.eq.s32.totalorder %s34, 1
      %p57 = por %p55, %p56
      %p59 = scmp.ne.s32.totalorder %s42, %s58
      %p60 = scmp.eq.s32.totalorder %s34, 0
      %p61 = por %p59, %p60
      %s63 = sadd.s32 %s62, 1
      %p66 = scmp.eq.s32.totalorder %s28, 1
      %p67 = scmp.ne.s32.totalorder %s62, %s64
      %p68 = scmp.eq.s32.totalorder %s28, 0
      %p69 = por %p67, %p68
      %p70 = scmp.ne.s32.totalorder %s62, %s64
      %p71 = scmp.eq.s32.totalorder %s33, 1
      %p72 = por %p70, %p71
      %p73 = scmp.ne.s32.totalorder %s64, %s65
      %p74 = scmp.eq.s32.totalorder %s33, 0
      %p75 = por %p73, %p74
      %p76 = scmp.ne.s32.totalorder %s64, %s65
      %p77 = scmp.eq.s32.totalorder %s34, 1
      %p78 = por %p76, %p77
      %p80 = scmp.ne.s32.totalorder %s65, %s79
      %p81 = scmp.eq.s32.totalorder %s34, 0
      %p82 = por %p80, %p81
      %s84 = sadd.s32 %s83, 1
      %p87 = scmp.eq.s32.totalorder %s28, 1
      %p88 = scmp.ne.s32.totalorder %s83, %s85
      %p89 = scmp.eq.s32.totalorder %s28, 0
      %p90 = por %p88, %p89
      %p91 = scmp.ne.s32.totalorder %s83, %s85
      %p92 = scmp.eq.s32.totalorder %s33, 1
      %p93 = por %p91, %p92
      %p94 = scmp.ne.s32.totalorder %s85, %s86
      %p95 = scmp.eq.s32.totalorder %s33, 0
      %p96 = por %p94, %p95
      %p97 = scmp.ne.s32.totalorder %s85, %s86
      %p98 = scmp.eq.s32.totalorder %s34, 1
      %p99 = por %p97, %p98
      %p101 = scmp.ne.s32.totalorder %s86, %s100
      %p102 = scmp.eq.s32.totalorder %s34, 0
      %p103 = por %p101, %p102
      %s105 = sadd.s32 %s104, 1
      %p108 = scmp.eq.s32.totalorder %s28, 1
      %p109 = scmp.ne.s32.totalorder %s104, %s106
      %p110 = scmp.eq.s32.totalorder %s28, 0
      %p111 = por %p109, %p110
      %p112 = scmp.ne.s32.totalorder %s104, %s106
      %p113 = scmp.eq.s32.totalorder %s33, 1
      %p114 = por %p112, %p113
      %p115 = scmp.ne.s32.totalorder %s106, %s107
      %p116 = scmp.eq.s32.totalorder %s33, 0
      %p117 = por %p115, %p116
      %p118 = scmp.ne.s32.totalorder %s106, %s107
      %p119 = scmp.eq.s32.totalorder %s34, 1
      %p120 = por %p118, %p119
      %p122 = scmp.ne.s32.totalorder %s107, %s121
      %p123 = scmp.eq.s32.totalorder %s34, 0
      %p124 = por %p122, %p123
      %s126 = sadd.s32 %s125, 1
      %p129 = scmp.eq.s32.totalorder %s28, 1
      %p130 = scmp.ne.s32.totalorder %s125, %s127
      %p131 = scmp.eq.s32.totalorder %s28, 0
      %p132 = por %p130, %p131
      %p133 = scmp.ne.s32.totalorder %s125, %s127
      %p134 = scmp.eq.s32.totalorder %s33, 1
      %p135 = por %p133, %p134
      %p136 = scmp.ne.s32.totalorder %s127, %s128
      %p137 = scmp.eq.s32.totalorder %s33, 0
      %p138 = por %p136, %p137
      %p139 = scmp.ne.s32.totalorder %s127, %s128
      %p140 = scmp.eq.s32.totalorder %s34, 1
      %p141 = por %p139, %p140
      %p143 = scmp.ne.s32.totalorder %s128, %s142
      %p144 = scmp.eq.s32.totalorder %s34, 0
      %p145 = por %p143, %p144
      %s147 = sadd.s32 %s146, 1
      %p150 = scmp.eq.s32.totalorder %s28, 1
      %p151 = scmp.ne.s32.totalorder %s146, %s148
      %p152 = scmp.eq.s32.totalorder %s28, 0
      %p153 = por %p151, %p152
      %p154 = scmp.ne.s32.totalorder %s146, %s148
      %p155 = scmp.eq.s32.totalorder %s33, 1
      %p156 = por %p154, %p155
      %p157 = scmp.ne.s32.totalorder %s148, %s149
      %p158 = scmp.eq.s32.totalorder %s33, 0
      %p159 = por %p157, %p158
      %p160 = scmp.ne.s32.totalorder %s148, %s149
      %p161 = scmp.eq.s32.totalorder %s34, 1
      %p162 = por %p160, %p161
      %p164 = scmp.ne.s32.totalorder %s149, %s163
      %p165 = scmp.eq.s32.totalorder %s34, 0
      %p166 = por %p164, %p165
      %s168 = sadd.s32 %s167, 1
      %p171 = scmp.eq.s32.totalorder %s28, 1
      %p172 = scmp.ne.s32.totalorder %s167, %s169
      %p173 = scmp.eq.s32.totalorder %s28, 0
      %p174 = por %p172, %p173
      %p175 = scmp.ne.s32.totalorder %s167, %s169
      %p176 = scmp.eq.s32.totalorder %s33, 1
      %p177 = por %p175, %p176
      %p178 = scmp.ne.s32.totalorder %s169, %s170
      %p179 = scmp.eq.s32.totalorder %s33, 0
      %p180 = por %p178, %p179
      %p181 = scmp.ne.s32.totalorder %s169, %s170
      %p182 = scmp.eq.s32.totalorder %s34, 1
      %p183 = por %p181, %p182
      %p185 = scmp.ne.s32.totalorder %s170, %s184
      %p186 = scmp.eq.s32.totalorder %s34, 0
      %p187 = por %p185, %p186
      %s189 = sadd.s32 %s188, 1
      %p192 = scmp.eq.s32.totalorder %s28, 1
      %p193 = scmp.ne.s32.totalorder %s188, %s190
      %p194 = scmp.eq.s32.totalorder %s28, 0
      %p195 = por %p193, %p194
      %p196 = scmp.ne.s32.totalorder %s188, %s190
      %p197 = scmp.eq.s32.totalorder %s33, 1
      %p198 = por %p196, %p197
      %p199 = scmp.ne.s32.totalorder %s190, %s191
      %p200 = scmp.eq.s32.totalorder %s33, 0
      %p201 = por %p199, %p200
      %p202 = scmp.ne.s32.totalorder %s190, %s191
      %p203 = scmp.eq.s32.totalorder %s34, 1
      %p204 = por %p202, %p203
      %p206 = scmp.ne.s32.totalorder %s191, %s205
      %p207 = scmp.eq.s32.totalorder %s34, 0
      %p208 = por %p206, %p207
      %s210 = sadd.s32 %s209, 1
      %p213 = scmp.eq.s32.totalorder %s28, 1
      %p214 = scmp.ne.s32.totalorder %s209, %s211
      %p215 = scmp.eq.s32.totalorder %s28, 0
      %p216 = por %p214, %p215
      %p217 = scmp.ne.s32.totalorder %s209, %s211
      %p218 = scmp.eq.s32.totalorder %s33, 1
      %p219 = por %p217, %p218
      %p220 = scmp.ne.s32.totalorder %s211, %s212
      %p221 = scmp.eq.s32.totalorder %s33, 0
      %p222 = por %p220, %p221
      %p223 = scmp.ne.s32.totalorder %s211, %s212
      %p224 = scmp.eq.s32.totalorder %s34, 1
      %p225 = por %p223, %p224
      %p227 = scmp.ne.s32.totalorder %s212, %s226
      %p228 = scmp.eq.s32.totalorder %s34, 0
      %p229 = por %p227, %p228
      %s231 = sadd.s32 %s230, 1
      %p234 = scmp.eq.s32.totalorder %s28, 1
      %p235 = scmp.ne.s32.totalorder %s230, %s232
      %p236 = scmp.eq.s32.totalorder %s28, 0
      %p237 = por %p235, %p236
      %p238 = scmp.ne.s32.totalorder %s230, %s232
      %p239 = scmp.eq.s32.totalorder %s33, 1
      %p240 = por %p238, %p239
      %p241 = scmp.ne.s32.totalorder %s232, %s233
      %p242 = scmp.eq.s32.totalorder %s33, 0
      %p243 = por %p241, %p242
      %p244 = scmp.ne.s32.totalorder %s232, %s233
      %p245 = scmp.eq.s32.totalorder %s34, 1
      %p246 = por %p244, %p245
      %p248 = scmp.ne.s32.totalorder %s233, %s247
      %p249 = scmp.eq.s32.totalorder %s34, 0
      %p250 = por %p248, %p249
      %s252 = sadd.s32 %s251, 1
      %p255 = scmp.eq.s32.totalorder %s28, 1
      %p256 = scmp.ne.s32.totalorder %s251, %s253
      %p257 = scmp.eq.s32.totalorder %s28, 0
      %p258 = por %p256, %p257
      %p259 = scmp.ne.s32.totalorder %s251, %s253
      %p260 = scmp.eq.s32.totalorder %s33, 1
      %p261 = por %p259, %p260
      %p262 = scmp.ne.s32.totalorder %s253, %s254
      %p263 = scmp.eq.s32.totalorder %s33, 0
      %p264 = por %p262, %p263
      %p265 = scmp.ne.s32.totalorder %s253, %s254
      %p266 = scmp.eq.s32.totalorder %s34, 1
      %p267 = por %p265, %p266
      %p269 = scmp.ne.s32.totalorder %s254, %s268
      %p270 = scmp.eq.s32.totalorder %s34, 0
      %p271 = por %p269, %p270
      %s273 = sadd.s32 %s272, 1
      %p276 = scmp.eq.s32.totalorder %s28, 1
      %p277 = scmp.ne.s32.totalorder %s272, %s274
      %p278 = scmp.eq.s32.totalorder %s28, 0
      %p279 = por %p277, %p278
      %p280 = scmp.ne.s32.totalorder %s272, %s274
      %p281 = scmp.eq.s32.totalorder %s33, 1
      %p282 = por %p280, %p281
      %p283 = scmp.ne.s32.totalorder %s274, %s275
      %p284 = scmp.eq.s32.totalorder %s33, 0
      %p285 = por %p283, %p284
      %p286 = scmp.ne.s32.totalorder %s274, %s275
      %p287 = scmp.eq.s32.totalorder %s34, 1
      %p288 = por %p286, %p287
      %p290 = scmp.ne.s32.totalorder %s275, %s289
      %p291 = scmp.eq.s32.totalorder %s34, 0
      %p292 = por %p290, %p291
      %s294 = sadd.s32 %s293, 1
      %p297 = scmp.eq.s32.totalorder %s28, 1
      %p298 = scmp.ne.s32.totalorder %s293, %s295
      %p299 = scmp.eq.s32.totalorder %s28, 0
      %p300 = por %p298, %p299
      %p301 = scmp.ne.s32.totalorder %s293, %s295
      %p302 = scmp.eq.s32.totalorder %s33, 1
      %p303 = por %p301, %p302
      %p304 = scmp.ne.s32.totalorder %s295, %s296
      %p305 = scmp.eq.s32.totalorder %s33, 0
      %p306 = por %p304, %p305
      %p307 = scmp.ne.s32.totalorder %s295, %s296
      %p308 = scmp.eq.s32.totalorder %s34, 1
      %p309 = por %p307, %p308
      %p311 = scmp.ne.s32.totalorder %s296, %s310
      %p312 = scmp.eq.s32.totalorder %s34, 0
      %p313 = por %p311, %p312
      %s315 = sadd.s32 %s314, 1
      %p318 = scmp.eq.s32.totalorder %s28, 1
      %p319 = scmp.ne.s32.totalorder %s314, %s316
      %p320 = scmp.eq.s32.totalorder %s28, 0
      %p321 = por %p319, %p320
      %p322 = scmp.ne.s32.totalorder %s314, %s316
      %p323 = scmp.eq.s32.totalorder %s33, 1
      %p324 = por %p322, %p323
      %p325 = scmp.ne.s32.totalorder %s316, %s317
      %p326 = scmp.eq.s32.totalorder %s33, 0
      %p327 = por %p325, %p326
      %p328 = scmp.ne.s32.totalorder %s316, %s317
      %p329 = scmp.eq.s32.totalorder %s34, 1
      %p330 = por %p328, %p329
      %p332 = scmp.ne.s32.totalorder %s317, %s331
      %p333 = scmp.eq.s32.totalorder %s34, 0
      %p334 = por %p332, %p333
      %s336 = sadd.s32 %s335, 1
      %p339 = scmp.eq.s32.totalorder %s28, 1
      %p340 = scmp.ne.s32.totalorder %s335, %s337
      %p341 = scmp.eq.s32.totalorder %s28, 0
      %p342 = por %p340, %p341
      %p343 = scmp.ne.s32.totalorder %s335, %s337
      %p344 = scmp.eq.s32.totalorder %s33, 1
      %p345 = por %p343, %p344
      %p346 = scmp.ne.s32.totalorder %s337, %s338
      %p347 = scmp.eq.s32.totalorder %s33, 0
      %p348 = por %p346, %p347
      %p349 = scmp.ne.s32.totalorder %s337, %s338
      %p350 = scmp.eq.s32.totalorder %s34, 1
      %p351 = por %p349, %p350
      %p353 = scmp.ne.s32.totalorder %s338, %s352
      %p354 = scmp.eq.s32.totalorder %s34, 0
      %p355 = por %p353, %p354
      %s357 = sadd.s32 %s356, 1
      %p360 = scmp.eq.s32.totalorder %s28, 1
      %p361 = scmp.ne.s32.totalorder %s356, %s358
      %p362 = scmp.eq.s32.totalorder %s28, 0
      %p363 = por %p361, %p362
      %p364 = scmp.ne.s32.totalorder %s356, %s358
      %p365 = scmp.eq.s32.totalorder %s33, 1
      %p366 = por %p364, %p365
      %p367 = scmp.ne.s32.totalorder %s358, %s359
      %p368 = scmp.eq.s32.totalorder %s33, 0
      %p369 = por %p367, %p368
      %p370 = scmp.ne.s32.totalorder %s358, %s359
      %p371 = scmp.eq.s32.totalorder %s34, 1
      %p372 = por %p370, %p371
      %p374 = scmp.ne.s32.totalorder %s359, %s373
      %p375 = scmp.eq.s32.totalorder %s34, 0
      %p376 = por %p374, %p375
      %s378 = sadd.s32 %s377, 1
      %p381 = scmp.eq.s32.totalorder %s28, 1
      %p382 = scmp.ne.s32.totalorder %s377, %s379
      %p383 = scmp.eq.s32.totalorder %s28, 0
      %p384 = por %p382, %p383
      %p385 = scmp.ne.s32.totalorder %s377, %s379
      %p386 = scmp.eq.s32.totalorder %s33, 1
      %p387 = por %p385, %p386
      %p388 = scmp.ne.s32.totalorder %s379, %s380
      %p389 = scmp.eq.s32.totalorder %s33, 0
      %p390 = por %p388, %p389
      %p391 = scmp.ne.s32.totalorder %s379, %s380
      %p392 = scmp.eq.s32.totalorder %s34, 1
      %p393 = por %p391, %p392
      %p395 = scmp.ne.s32.totalorder %s380, %s394
      %p396 = scmp.eq.s32.totalorder %s34, 0
      %p397 = por %p395, %p396
      %s399 = sadd.s32 %s398, 1
      %p402 = scmp.eq.s32.totalorder %s28, 1
      %p403 = scmp.ne.s32.totalorder %s398, %s400
      %p404 = scmp.eq.s32.totalorder %s28, 0
      %p405 = por %p403, %p404
      %p406 = scmp.ne.s32.totalorder %s398, %s400
      %p407 = scmp.eq.s32.totalorder %s33, 1
      %p408 = por %p406, %p407
      %p409 = scmp.ne.s32.totalorder %s400, %s401
      %p410 = scmp.eq.s32.totalorder %s33, 0
      %p411 = por %p409, %p410
      %p412 = scmp.ne.s32.totalorder %s400, %s401
      %p413 = scmp.eq.s32.totalorder %s34, 1
      %p414 = por %p412, %p413
      %p416 = scmp.ne.s32.totalorder %s401, %s415
      %p417 = scmp.eq.s32.totalorder %s34, 0
      %p418 = por %p416, %p417
      %s420 = sadd.s32 %s419, 1
      %p423 = scmp.eq.s32.totalorder %s28, 1
      %p424 = scmp.ne.s32.totalorder %s419, %s421
      %p425 = scmp.eq.s32.totalorder %s28, 0
      %p426 = por %p424, %p425
      %p427 = scmp.ne.s32.totalorder %s419, %s421
      %p428 = scmp.eq.s32.totalorder %s33, 1
      %p429 = por %p427, %p428
      %p430 = scmp.ne.s32.totalorder %s421, %s422
      %p431 = scmp.eq.s32.totalorder %s33, 0
      %p432 = por %p430, %p431
      %p433 = scmp.ne.s32.totalorder %s421, %s422
      %p434 = scmp.eq.s32.totalorder %s34, 1
      %p435 = por %p433, %p434
      %p437 = scmp.ne.s32.totalorder %s422, %s436
      %p438 = scmp.eq.s32.totalorder %s34, 0
      %p439 = por %p437, %p438
      %s440 = ssub.s32 %s28, %s35
      %p441 = scmp.eq.s32.totalorder %s440, 0
      %s443 = sadd.s32 %s442, 1
      %s444 = scalar_select %p441, %s442, %s443
      %p447 = pneg %p441
      %p448 = scmp.eq.s32.totalorder %s28, 1
      %p449 = por %p447, %p448
      %p450 = scmp.ne.s32.totalorder %s442, %s445
      %p451 = scmp.eq.s32.totalorder %s28, 0
      %p452 = por %p450, %p451
      %p453 = scmp.ne.s32.totalorder %s442, %s445
      %p454 = scmp.eq.s32.totalorder %s33, 1
      %p455 = por %p453, %p454
      %p456 = scmp.ne.s32.totalorder %s445, %s446
      %p457 = scmp.eq.s32.totalorder %s33, 0
      %p458 = por %p456, %p457
      %p459 = scmp.ne.s32.totalorder %s445, %s446
      %p460 = scmp.eq.s32.totalorder %s34, 1
      %p461 = por %p459, %p460
      %p463 = scmp.ne.s32.totalorder %s446, %s462
      %p464 = scmp.eq.s32.totalorder %s34, 0
      %p465 = por %p463, %p464
      %p466 = scmp.le.s32.totalorder 1, %s28
      %p467 = scmp.lt.s32.totalorder %s28, 3
      %p468 = pnand %p466, %p467
      %p469 = pneg %p468
      // Predicated region
      $region9: #{vit_forward.1} parent=5 // pred_check
        _
      $region10: #{vit_forward.1} parent=5 // pred_check_branch
        %471 = sbr.rel (%p468) target = $region12
      $region11: #{vit_forward.1} parent=5 // pred_region
        %s472 = ssub.s32 %s28, 1
        // Predicated region
        $region13: #{vit_forward.1} parent=11 // pred_check
          %p473 = pneg %p75
        $region14: #{vit_forward.1} parent=11 // pred_check_branch
          %475 = sbr.rel (%p473) target = $region16
        $region15: #{vit_forward.1} parent=11 // pred_region
          _
        $region16: #{vit_forward.1} parent=11 // pred_fallthru
          _
        // Predicated region
        $region17: #{vit_forward.1} parent=11 // pred_check
          %p476 = pneg %p96
        $region18: #{vit_forward.1} parent=11 // pred_check_branch
          %478 = sbr.rel (%p476) target = $region20
        $region19: #{vit_forward.1} parent=11 // pred_region
          _
        $region20: #{vit_forward.1} parent=11 // pred_fallthru
          _
        // Predicated region
        $region21: #{vit_forward.1} parent=11 // pred_check
          %p479 = pneg %p117
        $region22: #{vit_forward.1} parent=11 // pred_check_branch
          %481 = sbr.rel (%p479) target = $region24
        $region23: #{vit_forward.1} parent=11 // pred_region
          _
        $region24: #{vit_forward.1} parent=11 // pred_fallthru
          _
        // Predicated region
        $region25: #{vit_forward.1} parent=11 // pred_check
          %p482 = pneg %p138
        $region26: #{vit_forward.1} parent=11 // pred_check_branch
          %484 = sbr.rel (%p482) target = $region28
        $region27: #{vit_forward.1} parent=11 // pred_region
          _
        $region28: #{vit_forward.1} parent=11 // pred_fallthru
          _
        // Predicated region
        $region29: #{vit_forward.1} parent=11 // pred_check
          %p485 = pneg %p159
        $region30: #{vit_forward.1} parent=11 // pred_check_branch
          %487 = sbr.rel (%p485) target = $region32
        $region31: #{vit_forward.1} parent=11 // pred_region
          _
        $region32: #{vit_forward.1} parent=11 // pred_fallthru
          _
        // Predicated region
        $region33: #{vit_forward.1} parent=11 // pred_check
          %p488 = pneg %p180
        $region34: #{vit_forward.1} parent=11 // pred_check_branch
          %490 = sbr.rel (%p488) target = $region36
        $region35: #{vit_forward.1} parent=11 // pred_region
          _
        $region36: #{vit_forward.1} parent=11 // pred_fallthru
          _
        // Predicated region
        $region37: #{vit_forward.1} parent=11 // pred_check
          %p491 = pneg %p201
        $region38: #{vit_forward.1} parent=11 // pred_check_branch
          %493 = sbr.rel (%p491) target = $region40
        $region39: #{vit_forward.1} parent=11 // pred_region
          _
        $region40: #{vit_forward.1} parent=11 // pred_fallthru
          _
        // Predicated region
        $region41: #{vit_forward.1} parent=11 // pred_check
          %p494 = pneg %p222
        $region42: #{vit_forward.1} parent=11 // pred_check_branch
          %496 = sbr.rel (%p494) target = $region44
        $region43: #{vit_forward.1} parent=11 // pred_region
          _
        $region44: #{vit_forward.1} parent=11 // pred_fallthru
          _
        // Predicated region
        $region45: #{vit_forward.1} parent=11 // pred_check
          %p497 = pneg %p243
        $region46: #{vit_forward.1} parent=11 // pred_check_branch
          %499 = sbr.rel (%p497) target = $region48
        $region47: #{vit_forward.1} parent=11 // pred_region
          _
        $region48: #{vit_forward.1} parent=11 // pred_fallthru
          _
        // Predicated region
        $region49: #{vit_forward.1} parent=11 // pred_check
          %p500 = pneg %p264
        $region50: #{vit_forward.1} parent=11 // pred_check_branch
          %502 = sbr.rel (%p500) target = $region52
        $region51: #{vit_forward.1} parent=11 // pred_region
          _
        $region52: #{vit_forward.1} parent=11 // pred_fallthru
          _
        // Predicated region
        $region53: #{vit_forward.1} parent=11 // pred_check
          %p503 = pneg %p285
        $region54: #{vit_forward.1} parent=11 // pred_check_branch
          %505 = sbr.rel (%p503) target = $region56
        $region55: #{vit_forward.1} parent=11 // pred_region
          _
        $region56: #{vit_forward.1} parent=11 // pred_fallthru
          _
        // Predicated region
        $region57: #{vit_forward.1} parent=11 // pred_check
          %p506 = pneg %p306
        $region58: #{vit_forward.1} parent=11 // pred_check_branch
          %508 = sbr.rel (%p506) target = $region60
        $region59: #{vit_forward.1} parent=11 // pred_region
          _
        $region60: #{vit_forward.1} parent=11 // pred_fallthru
          _
        // Predicated region
        $region61: #{vit_forward.1} parent=11 // pred_check
          %p509 = pneg %p327
        $region62: #{vit_forward.1} parent=11 // pred_check_branch
          %511 = sbr.rel (%p509) target = $region64
        $region63: #{vit_forward.1} parent=11 // pred_region
          _
        $region64: #{vit_forward.1} parent=11 // pred_fallthru
          _
        // Predicated region
        $region65: #{vit_forward.1} parent=11 // pred_check
          %p512 = pneg %p348
        $region66: #{vit_forward.1} parent=11 // pred_check_branch
          %514 = sbr.rel (%p512) target = $region68
        $region67: #{vit_forward.1} parent=11 // pred_region
          _
        $region68: #{vit_forward.1} parent=11 // pred_fallthru
          _
        // Predicated region
        $region69: #{vit_forward.1} parent=11 // pred_check
          %p515 = pneg %p369
        $region70: #{vit_forward.1} parent=11 // pred_check_branch
          %517 = sbr.rel (%p515) target = $region72
        $region71: #{vit_forward.1} parent=11 // pred_region
          _
        $region72: #{vit_forward.1} parent=11 // pred_fallthru
          _
        // Predicated region
        $region73: #{vit_forward.1} parent=11 // pred_check
          %p518 = pneg %p390
        $region74: #{vit_forward.1} parent=11 // pred_check_branch
          %520 = sbr.rel (%p518) target = $region76
        $region75: #{vit_forward.1} parent=11 // pred_region
          _
        $region76: #{vit_forward.1} parent=11 // pred_fallthru
          _
        // Predicated region
        $region77: #{vit_forward.1} parent=11 // pred_check
          %p521 = pneg %p411
        $region78: #{vit_forward.1} parent=11 // pred_check_branch
          %523 = sbr.rel (%p521) target = $region80
        $region79: #{vit_forward.1} parent=11 // pred_region
          _
        $region80: #{vit_forward.1} parent=11 // pred_fallthru
          _
        // Predicated region
        $region81: #{vit_forward.1} parent=11 // pred_check
          %p524 = pneg %p432
        $region82: #{vit_forward.1} parent=11 // pred_check_branch
          %526 = sbr.rel (%p524) target = $region84
        $region83: #{vit_forward.1} parent=11 // pred_region
          _
        $region84: #{vit_forward.1} parent=11 // pred_fallthru
          _
      $region12: #{vit_forward.1} parent=5 // pred_fallthru
        _
      %p527 = scmp.lt.s32.totalorder %s28, 2
      // Predicated region
      $region85: #{vit_forward.1} parent=5 // pred_check
        %p528 = pneg %p527
      $region86: #{vit_forward.1} parent=5 // pred_check_branch
        %530 = sbr.rel (%p528) target = $region88
      $region87: #{vit_forward.1} parent=5 // pred_region
        // Predicated region
        $region89: #{vit_forward.1} parent=87 // pred_check
          %p531 = pneg %p48
        $region90: #{vit_forward.1} parent=87 // pred_check_branch
          %533 = sbr.rel (%p531) target = $region92
        $region91: #{vit_forward.1} parent=87 // pred_region
          %p534 = scmp.lt.s32.totalorder %s28, 1
          %s535 = scalar_select %p534, %s28, 1
          %s536 = smul.addr %s535, 3
          %s537 = smul.addr %s536, 8
          %s538 = scalar_lea.vmem %s0, %s537
        $region92: #{vit_forward.1} parent=87 // pred_fallthru
          _
      $region88: #{vit_forward.1} parent=5 // pred_fallthru
        _
      %p539 = scmp.le.s32.totalorder 1, %s28
      %p540 = scmp.lt.s32.totalorder %s28, 3
      %p541 = pnand %p539, %p540
      %p542 = pneg %p541
      // Predicated region
      $region93: #{vit_forward.1} parent=5 // pred_check
        _
      $region94: #{vit_forward.1} parent=5 // pred_check_branch
        %544 = sbr.rel (%p541) target = $region96
      $region95: #{vit_forward.1} parent=5 // pred_region
        %s545 = ssub.s32 %s28, 1
        %p546 = scmp.lt.s32.totalorder %s33, 1
        %s547 = scalar_select %p546, %s33, 1
        %s548 = smul.addr %s547, 3
        %s549 = smul.addr %s548, 8
        %s550 = scalar_lea.vmem %s0, %s549
        %p551 = pneg %p54
        %p552 = pneg %p51
        %p553 = pneg %p75
        %p554 = pneg %p72
        %p555 = pneg %p96
        %p556 = pneg %p93
        %p557 = pneg %p117
        %p558 = pneg %p114
        %p559 = pneg %p138
        %p560 = pneg %p135
        %p561 = pneg %p159
        %p562 = pneg %p156
        %p563 = pneg %p180
        %p564 = pneg %p177
        %p565 = pneg %p201
        %p566 = pneg %p198
        %p567 = pneg %p222
        %p568 = pneg %p219
        %p569 = pneg %p243
        %p570 = pneg %p240
        %p571 = pneg %p264
        %p572 = pneg %p261
        %p573 = pneg %p285
        %p574 = pneg %p282
        %p575 = pneg %p306
        %p576 = pneg %p303
        %p577 = pneg %p327
        %p578 = pneg %p324
        %p579 = pneg %p348
        %p580 = pneg %p345
        %p581 = pneg %p369
        %p582 = pneg %p366
        %p583 = pneg %p390
        %p584 = pneg %p387
        %p585 = pneg %p411
        %p586 = pneg %p408
        %p587 = pneg %p432
        %p588 = pneg %p429
        %p589 = pneg %p458
        %p590 = pneg %p455
        %s591 = sand.u32 %s445, 1
        %s592 = scalar_lea.sflag [#allocation3], %s591
        %s593 = sand.u32 %s445, 1
        %s594 = scalar_lea.vmem [#allocation2], %s593
        %p595 = scmp.lt.s32.totalorder %s33, 1
        %s596 = scalar_select %p595, %s33, 1
        %s597 = smul.addr %s596, 3
        %s598 = smul.addr %s597, 8
        %s599 = scalar_lea.vmem %s0, %s598
        %v601 = vld [vmem:[%s599] sm:$0xff]
        %v602 = vld [vmem:[%s599 + $0x8] sm:$0xff]
        %v603 = vld [vmem:[%s599 + $0x10] sm:$0x1]
        %v604 = vld [vmem:[%s1] sm:$0xf]
        %v605 = vld [vmem:[%s1 + $0x4] sm:$0xf]
        %v606 = vld [vmem:[%s1 + $0x8] sm:$0xf]
        %v607 = vld [vmem:[%s1 + $0xc] sm:$0xf]
        %v608 = vld [vmem:[%s1 + $0x10] sm:$0xf]
        %v609 = vld [vmem:[%s1 + $0x14] sm:$0xf]
        %v610 = vpack.c.bf16 %v602, %v601
        %v611 = vpack.c.bf16 %v603, %v603
        %v612 = vld [vmem:[%s2] sm:$0xff]
        %v613 = vld [vmem:[%s2 + $0x8] sm:$0xff]
        %v614 = vld [vmem:[%s2 + $0x10] sm:$0x1]
        %v621 = vunpack.c.l.b16 %v604
        %v622 = vunpack.c.l.b16 %v605
        %v623 = vunpack.c.l.b16 %v606
        %v624 = vunpack.c.l.b16 %v607
        %v625 = vunpack.c.l.b16 %v608
        %v626 = vunpack.c.l.b16 %v609
        %v627 = vpack.c.b16 %v622, %v621
        %v628 = vpack.c.b16 %v624, %v623
        %v629 = vpack.c.b16 %v626, %v625
        %vm633 = vcmask 392192
        %v635 = vsel %vm633, %v610, 0
        %v638 = vsel %vm633, %v611, 0
        %640 = vmatprep.subr.bf16.mxu0 0
        %641 = vmatpush1.bf16.msra.mxu0 %v627
        %642 = vmatprep.subr.bf16.mxu0 0
        %643 = vmatpush1.bf16.msra.mxu0 %v628
        %644 = vmatprep.subr.bf16.mxu0 0
        %645 = vmatpush1.bf16.msra.mxu0 %v629
        %646 = vmatprep.subr.bf16.mxu0 0
        %647 = vmatpush1.bf16.msra.mxu0 0
        %648 = vmatprep.subr.bf16.mxu0 0
        %649 = vmatpush1.bf16.msra.mxu0 0
        %650 = vmatprep.subr.bf16.mxu0 0
        %651 = vmatpush1.bf16.msra.mxu0 0
        %652 = vmatprep.subr.bf16.mxu0 0
        %653 = vmatpush1.bf16.msra.mxu0 0
        %654 = vmatprep.subr.bf16.mxu0 0
        %655 = vmatpush1.bf16.msra.mxu0 0
        %656 = vmatprep.subr.bf16.mxu0 0
        %657 = vmatpush1.bf16.msra.mxu0 0
        %658 = vmatprep.subr.bf16.mxu0 0
        %659 = vmatpush1.bf16.msra.mxu0 0
        %660 = vmatprep.subr.bf16.mxu0 0
        %661 = vmatpush1.bf16.msra.mxu0 0
        %662 = vmatprep.subr.bf16.mxu0 0
        %663 = vmatpush1.bf16.msra.mxu0 0
        %664 = vmatprep.subr.bf16.mxu0 0
        %665 = vmatpush1.bf16.msra.mxu0 0
        %666 = vmatprep.subr.bf16.mxu0 0
        %667 = vmatpush1.bf16.msra.mxu0 0
        %668 = vmatprep.subr.bf16.mxu0 0
        %669 = vmatpush1.bf16.msra.mxu0 0
        %670 = vmatprep.subr.bf16.mxu0 0
        %671 = vmatpush1.bf16.msra.mxu0 0
        %672 = vmatprep.mubr.bf16.mxu0 0
        %673 = vmatmul.mubr.bf16.gmra.mrb[0].mxu0 %v635
        %v674 = vpop.f32.mrb[0].mxu0
        %v675 = vadd.f32 %v612, %v674
        %v676 = vpop.f32.mrb[0].mxu0
        %v677 = vpop.f32.mrb[0].mxu0
        %v678 = vadd.f32 %v613, %v677
        %v679 = vpop.f32.mrb[0].mxu0
        %680 = vmatprep.mubr.bf16.mxu0 0
        %681 = vmatmul.mubr.bf16.gmra.mrb[0].mxu0 %v638
        %v682 = vpop.f32.mrb[0].mxu0
        %v683 = vadd.f32 %v614, %v682
        %v684 = vpop.f32.mrb[0].mxu0
        %v685 = vpop.f32.mrb[0].mxu0
        %v686 = vpop.f32.mrb[0].mxu0
        %687 = vdwg.mxu0
        %v688 = vld [vmem:[%s3] sm:$0x1]
        %v689 = vld [vmem:[%s4] sm:$0x1]
        %vm690 = vcmask 261120
        %v691 = vsel %vm690, %v675, 0.0
        %692 = vadd.xlane.f32.xlu0 %v691
        %v693 = vpop.xlane.xlu0 %692
        %v694 = vsel %vm690, %v678, 0.0
        %695 = vadd.xlane.f32.xlu0 %v694
        %v696 = vpop.xlane.xlu0 %695
        %vm697 = vcmask 253952
        %v698 = vsel %vm697, %v683, 0.0
        %699 = vadd.xlane.f32.xlu0 %v698
        %v700 = vpop.xlane.xlu0 %699
        %v701 = vrcp.pop 32.0
        %v702 = vmul.f32 %v693, %v701
        %v703 = vmul.f32 %v696, %v701
        %v704 = vmul.f32 %v700, %v701
        %v705 = vsub.f32 %v675, %v702
        %v706 = vsub.f32 %v678, %v703
        %v707 = vsub.f32 %v683, %v704
        %v708 = vmul.f32 %v705, %v705
        %v709 = vmul.f32 %v706, %v706
        %v710 = vmul.f32 %v707, %v707
        %v711 = vsel %vm690, %v708, 0.0
        %712 = vadd.xlane.f32.xlu0 %v711
        %v713 = vpop.xlane.xlu0 %712
        %v714 = vsel %vm690, %v709, 0.0
        %715 = vadd.xlane.f32.xlu0 %v714
        %v716 = vpop.xlane.xlu0 %715
        %v717 = vsel %vm697, %v710, 0.0
        %718 = vadd.xlane.f32.xlu0 %v717
        %v719 = vpop.xlane.xlu0 %718
        %v720 = vmul.f32 %v713, %v701
        %v721 = vmul.f32 %v716, %v701
        %v722 = vmul.f32 %v719, %v701
        %v723 = vadd.f32 %v720, 1e-06
        %v724 = vadd.f32 %v721, 1e-06
        %v725 = vadd.f32 %v722, 1e-06
        %v726 = vrsqrt.pop %v723
        %v727 = vrsqrt.pop %v724
        %v728 = vrsqrt.pop %v725
        %v729 = vmul.f32 %v705, %v726
        %v730 = vmul.f32 %v706, %v727
        %v731 = vmul.f32 %v707, %v728
        %v733 = vlaneseq
        %v734 = vshrl.u32 %v733, 7
        %v735 = vsub.s32 0, %v734
        %v736 = vrot.slane %v688, %v735
        %v738 = vmul.f32 %v729, %v736
        %v739 = vmul.f32 %v730, %v736
        %v740 = vmul.f32 %v731, %v736
        %v742 = vlaneseq
        %v743 = vshrl.u32 %v742, 7
        %v744 = vsub.s32 0, %v743
        %v745 = vrot.slane %v689, %v744
        %v747 = vadd.f32 %v738, %v745
        %v748 = vadd.f32 %v739, %v745
        %v749 = vadd.f32 %v740, %v745
        %v750 = vld [vmem:[%s5] sm:$0xf]
        %v751 = vld [vmem:[%s5 + $0x4] sm:$0xf]
        %v752 = vld [vmem:[%s5 + $0x8] sm:$0xf]
        %v753 = vld [vmem:[%s5 + $0xc] sm:$0xf]
        %v754 = vpack.c.bf16 %v748, %v747
        %v755 = vpack.c.bf16 %v749, %v749
        %v756 = vld [vmem:[%s6] sm:$0x1]
        %v758 = vlaneseq
        %v759 = vshrl.u32 %v758, 7
        %v760 = vsub.s32 0, %v759
        %v761 = vrot.slane %v756, %v760
        %v767 = vunpack.c.l.b16 %v750
        %v768 = vunpack.c.l.b16 %v751
        %v769 = vunpack.c.l.b16 %v752
        %v770 = vunpack.c.l.b16 %v753
        %v771 = vpack.c.b16 %v768, %v767
        %v772 = vpack.c.b16 %v770, %v769
        %v776 = vsel %vm690, %v754, 0
        %v779 = vsel %vm690, %v755, 0
        %781 = vmatprep.subr.bf16.mxu0 0
        %782 = vmatpush1.bf16.msra.mxu0 %v771
        %783 = vmatprep.subr.bf16.mxu0 0
        %784 = vmatpush1.bf16.msra.mxu0 %v772
        %785 = vmatprep.subr.bf16.mxu0 0
        %786 = vmatpush1.bf16.msra.mxu0 0
        %787 = vmatprep.subr.bf16.mxu0 0
        %788 = vmatpush1.bf16.msra.mxu0 0
        %789 = vmatprep.subr.bf16.mxu0 0
        %790 = vmatpush1.bf16.msra.mxu0 0
        %791 = vmatprep.subr.bf16.mxu0 0
        %792 = vmatpush1.bf16.msra.mxu0 0
        %793 = vmatprep.subr.bf16.mxu0 0
        %794 = vmatpush1.bf16.msra.mxu0 0
        %795 = vmatprep.subr.bf16.mxu0 0
        %796 = vmatpush1.bf16.msra.mxu0 0
        %797 = vmatprep.subr.bf16.mxu0 0
        %798 = vmatpush1.bf16.msra.mxu0 0
        %799 = vmatprep.subr.bf16.mxu0 0
        %800 = vmatpush1.bf16.msra.mxu0 0
        %801 = vmatprep.subr.bf16.mxu0 0
        %802 = vmatpush1.bf16.msra.mxu0 0
        %803 = vmatprep.subr.bf16.mxu0 0
        %804 = vmatpush1.bf16.msra.mxu0 0
        %805 = vmatprep.subr.bf16.mxu0 0
        %806 = vmatpush1.bf16.msra.mxu0 0
        %807 = vmatprep.subr.bf16.mxu0 0
        %808 = vmatpush1.bf16.msra.mxu0 0
        %809 = vmatprep.subr.bf16.mxu0 0
        %810 = vmatpush1.bf16.msra.mxu0 0
        %811 = vmatprep.subr.bf16.mxu0 0
        %812 = vmatpush1.bf16.msra.mxu0 0
        %813 = vmatprep.mubr.bf16.mxu0 0
        %814 = vmatmul.mubr.bf16.gmra.mrb[0].mxu0 %v776
        %v815 = vpop.f32.mrb[0].mxu0
        %v816 = vadd.f32 %v761, %v815
        %v817 = vpop.f32.mrb[0].mxu0
        %v818 = vpop.f32.mrb[0].mxu0
        %v819 = vadd.f32 %v761, %v818
        %v820 = vpop.f32.mrb[0].mxu0
        %821 = vmatprep.mubr.bf16.mxu0 0
        %822 = vmatmul.mubr.bf16.gmra.mrb[0].mxu0 %v779
        %v823 = vpop.f32.mrb[0].mxu0
        %v824 = vadd.f32 %v761, %v823
        %v825 = vpop.f32.mrb[0].mxu0
        %v826 = vpop.f32.mrb[0].mxu0
        %v827 = vpop.f32.mrb[0].mxu0
        %828 = vdwg.mxu0
        %v829 = vld [vmem:[%s7] sm:$0xf]
        %v830 = vld [vmem:[%s7 + $0x4] sm:$0xf]
        %v831 = vld [vmem:[%s7 + $0x8] sm:$0xf]
        %v832 = vld [vmem:[%s7 + $0xc] sm:$0xf]
        %v833 = vpack.c.bf16 %v819, %v816
        %v834 = vpack.c.bf16 %v824, %v824
        %837 = vrot.lane.b32.xlu0 %v833, 96
        %v838 = vpop.permute.xlu0 %837
        %839 = vrot.lane.b32.xlu0 %v834, 96
        %v840 = vpop.permute.xlu0 %839
        %vm841 = vcmask 64512
        %v843 = vsel %vm841, %v833, 0
        %v846 = vsel %vm841, %v834, 0
        %v849 = vsel %vm841, %v838, 0
        %v852 = vsel %vm841, %v840, 0
        %854 = vmatprep.subr.bf16.mxu0 0
        %855 = vmatpush1.bf16.xpose.msra.mxu0 %v849
        %856 = vmatprep.subr.bf16.mxu0 0
        %857 = vmatpush1.bf16.xpose.msra.mxu0 %v852
        %858 = vmatprep.subr.bf16.mxu0 0
        %859 = vmatpush1.bf16.xpose.msra.mxu0 0
        %860 = vmatprep.subr.bf16.mxu0 0
        %861 = vmatpush1.bf16.xpose.msra.mxu0 0
        %862 = vmatprep.subr.bf16.mxu0 0
        %863 = vmatpush1.bf16.xpose.msra.mxu0 0
        %864 = vmatprep.subr.bf16.mxu0 0
        %865 = vmatpush1.bf16.xpose.msra.mxu0 0
        %866 = vmatprep.subr.bf16.mxu0 0
        %867 = vmatpush1.bf16.xpose.msra.mxu0 0
        %868 = vmatprep.subr.bf16.mxu0 0
        %869 = vmatpush1.bf16.xpose.msra.mxu0 0
        %870 = vmatprep.subr.bf16.mxu0 0
        %871 = vmatpush1.bf16.xpose.msra.mxu0 0
        %872 = vmatprep.subr.bf16.mxu0 0
        %873 = vmatpush1.bf16.xpose.msra.mxu0 0
        %874 = vmatprep.subr.bf16.mxu0 0
        %875 = vmatpush1.bf16.xpose.msra.mxu0 0
        %876 = vmatprep.subr.bf16.mxu0 0
        %877 = vmatpush1.bf16.xpose.msra.mxu0 0
        %878 = vmatprep.subr.bf16.mxu0 0
        %879 = vmatpush1.bf16.xpose.msra.mxu0 0
        %880 = vmatprep.subr.bf16.mxu0 0
        %881 = vmatpush1.bf16.xpose.msra.mxu0 0
        %882 = vmatprep.subr.bf16.mxu0 0
        %883 = vmatpush1.bf16.xpose.msra.mxu0 0
        %884 = vmatprep.subr.bf16.mxu0 0
        %885 = vmatpush1.bf16.xpose.msra.mxu0 0
        %886 = vmatprep.mubr.bf16.mxu0 0
        %887 = vmatmul.mubr.bf16.gmra.mrb[0].mxu0 %v843
        %v888 = vpop.f32.mrb[0].mxu0
        %v889 = vadd.f32 0.0, %v888
        %v890 = vpop.f32.mrb[0].mxu0
        %v891 = vpop.f32.mrb[0].mxu0
        %v892 = vadd.f32 0.0, %v891
        %v893 = vpop.f32.mrb[0].mxu0
        %894 = vmatprep.mubr.bf16.mxu0 0
        %895 = vmatmul.mubr.bf16.gmra.mrb[0].mxu0 %v846
        %v896 = vpop.f32.mrb[0].mxu0
        %v897 = vadd.f32 0.0, %v896
        %v898 = vpop.f32.mrb[0].mxu0
        %v899 = vpop.f32.mrb[0].mxu0
        %v900 = vpop.f32.mrb[0].mxu0
        %901 = vdwg.mxu0
        %v902 = vmul.f32 %v889, 0.35355338
        %v903 = vmul.f32 %v892, 0.35355338
        %v904 = vmul.f32 %v897, 0.35355338
        %vm905 = vcmask 138240
        %v906 = vsel %vm905, %v902, -inf
        %907 = vmax.xlane.f32.xlu0 %v906
        %v908 = vpop.xlane.xlu0 %907
        %v909 = vsel %vm905, %v903, -inf
        %910 = vmax.xlane.f32.xlu0 %v909
        %v911 = vpop.xlane.xlu0 %910
        %vm912 = vcmask 131072
        %v913 = vsel %vm912, %v904, -inf
        %914 = vmax.xlane.f32.xlu0 %v913
        %v915 = vpop.xlane.xlu0 %914
        %v916 = vsub.f32 %v902, %v908
        %v917 = vsub.f32 %v903, %v911
        %v918 = vsub.f32 %v904, %v915
        %v919 = vmul.f32 %v916, 1.442695
        %v920 = vpow.pop %v919
        %v921 = vmul.f32 %v917, 1.442695
        %v922 = vpow.pop %v921
        %v923 = vmul.f32 %v918, 1.442695
        %v924 = vpow.pop %v923
        %v925 = vsel %vm905, %v920, 0.0
        %926 = vadd.xlane.f32.xlu0 %v925
        %v927 = vpop.xlane.xlu0 %926
        %v928 = vsel %vm905, %v922, 0.0
        %929 = vadd.xlane.f32.xlu0 %v928
        %v930 = vpop.xlane.xlu0 %929
        %v931 = vsel %vm912, %v924, 0.0
        %932 = vadd.xlane.f32.xlu0 %v931
        %v933 = vpop.xlane.xlu0 %932
        %v934 = vrcp.pop %v927
        %v935 = vrcp.pop %v930
        %v936 = vrcp.pop %v933
        %v937 = vmul.f32 %v920, %v934
        %v938 = vmul.f32 %v922, %v935
        %v939 = vmul.f32 %v924, %v936
        %v940 = vpack.c.bf16 %v938, %v937
        %v941 = vpack.c.bf16 %v939, %v939
        %942 = vrot.lane.b32.xlu0 %v833, 64
        %v943 = vpop.permute.xlu0 %942
        %944 = vrot.lane.b32.xlu0 %v834, 64
        %v945 = vpop.permute.xlu0 %944
        %v948 = vsel %vm905, %v940, 0
        %v951 = vsel %vm905, %v941, 0
        %vm953 = vcmask 1040384
        %v954 = vsel 0, 4294967295, 65535
        %v955 = vsel %vm953, %v954, 0
        %v957 = vand.u32 %v945, %v955
        %959 = vmatprep.subr.bf16.mxu0 0
        %960 = vmatpush1.bf16.msra.mxu0 %v943
        %961 = vmatprep.subr.bf16.mxu0 0
        %962 = vmatpush1.bf16.msra.mxu0 %v957
        %963 = vmatprep.subr.bf16.mxu0 0
        %964 = vmatpush1.bf16.msra.mxu0 0
        %965 = vmatprep.subr.bf16.mxu0 0
        %966 = vmatpush1.bf16.msra.mxu0 0
        %967 = vmatprep.subr.bf16.mxu0 0
        %968 = vmatpush1.bf16.msra.mxu0 0
        %969 = vmatprep.subr.bf16.mxu0 0
        %970 = vmatpush1.bf16.msra.mxu0 0
        %971 = vmatprep.subr.bf16.mxu0 0
        %972 = vmatpush1.bf16.msra.mxu0 0
        %973 = vmatprep.subr.bf16.mxu0 0
        %974 = vmatpush1.bf16.msra.mxu0 0
        %975 = vmatprep.subr.bf16.mxu0 0
        %976 = vmatpush1.bf16.msra.mxu0 0
        %977 = vmatprep.subr.bf16.mxu0 0
        %978 = vmatpush1.bf16.msra.mxu0 0
        %979 = vmatprep.subr.bf16.mxu0 0
        %980 = vmatpush1.bf16.msra.mxu0 0
        %981 = vmatprep.subr.bf16.mxu0 0
        %982 = vmatpush1.bf16.msra.mxu0 0
        %983 = vmatprep.subr.bf16.mxu0 0
        %984 = vmatpush1.bf16.msra.mxu0 0
        %985 = vmatprep.subr.bf16.mxu0 0
        %986 = vmatpush1.bf16.msra.mxu0 0
        %987 = vmatprep.subr.bf16.mxu0 0
        %988 = vmatpush1.bf16.msra.mxu0 0
        %989 = vmatprep.subr.bf16.mxu0 0
        %990 = vmatpush1.bf16.msra.mxu0 0
        %991 = vmatprep.mubr.bf16.mxu0 0
        %992 = vmatmul.mubr.bf16.gmra.mrb[0].mxu0 %v948
        %v993 = vpop.f32.mrb[0].mxu0
        %v994 = vadd.f32 0.0, %v993
        %v995 = vpop.f32.mrb[0].mxu0
        %v996 = vpop.f32.mrb[0].mxu0
        %v997 = vadd.f32 0.0, %v996
        %v998 = vpop.f32.mrb[0].mxu0
        %999 = vmatprep.mubr.bf16.mxu0 0
        %1000 = vmatmul.mubr.bf16.gmra.mrb[0].mxu0 %v951
        %v1001 = vpop.f32.mrb[0].mxu0
        %v1002 = vadd.f32 0.0, %v1001
        %v1003 = vpop.f32.mrb[0].mxu0
        %v1004 = vpop.f32.mrb[0].mxu0
        %v1005 = vpop.f32.mrb[0].mxu0
        %1006 = vdwg.mxu0
        %v1007 = vpack.c.bf16 %v997, %v994
        %v1008 = vpack.c.bf16 %v1002, %v1002
        %1009 = vrot.lane.b32.xlu0 %v833, 120
        %v1010 = vpop.permute.xlu0 %1009
        %1011 = vrot.lane.b32.xlu0 %v834, 120
        %v1012 = vpop.permute.xlu0 %1011
        %1013 = vrot.lane.b32.xlu0 %v833, 88
        %v1014 = vpop.permute.xlu0 %1013
        %1015 = vrot.lane.b32.xlu0 %v834, 88
        %v1016 = vpop.permute.xlu0 %1015
        %v1018 = vsel %vm841, %v1010, 0
        %v1021 = vsel %vm841, %v1012, 0
        %v1024 = vsel %vm841, %v1014, 0
        %v1027 = vsel %vm841, %v1016, 0
        %1029 = vmatprep.subr.bf16.mxu0 0
        %1030 = vmatpush1.bf16.xpose.msra.mxu0 %v1024
        %1031 = vmatprep.subr.bf16.mxu0 0
        %1032 = vmatpush1.bf16.xpose.msra.mxu0 %v1027
        %1033 = vmatprep.subr.bf16.mxu0 0
        %1034 = vmatpush1.bf16.xpose.msra.mxu0 0
        %1035 = vmatprep.subr.bf16.mxu0 0
        %1036 = vmatpush1.bf16.xpose.msra.mxu0 0
        %1037 = vmatprep.subr.bf16.mxu0 0
        %1038 = vmatpush1.bf16.xpose.msra.mxu0 0
        %1039 = vmatprep.subr.bf16.mxu0 0
        %1040 = vmatpush1.bf16.xpose.msra.mxu0 0
        %1041 = vmatprep.subr.bf16.mxu0 0
        %1042 = vmatpush1.bf16.xpose.msra.mxu0 0
        %1043 = vmatprep.subr.bf16.mxu0 0
        %1044 = vmatpush1.bf16.xpose.msra.mxu0 0
        %1045 = vmatprep.subr.bf16.mxu0 0
        %1046 = vmatpush1.bf16.xpose.msra.mxu0 0
        %1047 = vmatprep.subr.bf16.mxu0 0
        %1048 = vmatpush1.bf16.xpose.msra.mxu0 0
        %1049 = vmatprep.subr.bf16.mxu0 0
        %1050 = vmatpush1.bf16.xpose.msra.mxu0 0
        %1051 = vmatprep.subr.bf16.mxu0 0
        %1052 = vmatpush1.bf16.xpose.msra.mxu0 0
        %1053 = vmatprep.subr.bf16.mxu0 0
        %1054 = vmatpush1.bf16.xpose.msra.mxu0 0
        %1055 = vmatprep.subr.bf16.mxu0 0
        %1056 = vmatpush1.bf16.xpose.msra.mxu0 0
        %1057 = vmatprep.subr.bf16.mxu0 0
        %1058 = vmatpush1.bf16.xpose.msra.mxu0 0
        %1059 = vmatprep.subr.bf16.mxu0 0
        %1060 = vmatpush1.bf16.xpose.msra.mxu0 0
        %1061 = vmatprep.mubr.bf16.mxu0 0
        %1062 = vmatmul.mubr.bf16.gmra.mrb[0].mxu0 %v1018
        %v1063 = vpop.f32.mrb[0].mxu0
        %v1064 = vadd.f32 0.0, %v1063
        %v1065 = vpop.f32.mrb[0].mxu0
        %v1066 = vpop.f32.mrb[0].mxu0
        %v1067 = vadd.f32 0.0, %v1066
        %v1068 = vpop.f32.mrb[0].mxu0
        %1069 = vmatprep.mubr.bf16.mxu0 0
        %1070 = vmatmul.mubr.bf16.gmra.mrb[0].mxu0 %v1021
        %v1071 = vpop.f32.mrb[0].mxu0
        %v1072 = vadd.f32 0.0, %v1071
        %v1073 = vpop.f32.mrb[0].mxu0
        %v1074 = vpop.f32.mrb[0].mxu0
        %v1075 = vpop.f32.mrb[0].mxu0
        %1076 = vdwg.mxu0
        %v1077 = vmul.f32 %v1064, 0.35355338
        %v1078 = vmul.f32 %v1067, 0.35355338
        %v1079 = vmul.f32 %v1072, 0.35355338
        %v1080 = vsel %vm905, %v1077, -inf
        %1081 = vmax.xlane.f32.xlu0 %v1080
        %v1082 = vpop.xlane.xlu0 %1081
        %v1083 = vsel %vm905, %v1078, -inf
        %1084 = vmax.xlane.f32.xlu0 %v1083
        %v1085 = vpop.xlane.xlu0 %1084
        %v1086 = vsel %vm912, %v1079, -inf
        %1087 = vmax.xlane.f32.xlu0 %v1086
        %v1088 = vpop.xlane.xlu0 %1087
        %v1089 = vsub.f32 %v1077, %v1082
        %v1090 = vsub.f32 %v1078, %v1085
        %v1091 = vsub.f32 %v1079, %v1088
        %v1092 = vmul.f32 %v1089, 1.442695
        %v1093 = vpow.pop %v1092
        %v1094 = vmul.f32 %v1090, 1.442695
        %v1095 = vpow.pop %v1094
        %v1096 = vmul.f32 %v1091, 1.442695
        %v1097 = vpow.pop %v1096
        %v1098 = vsel %vm905, %v1093, 0.0
        %1099 = vadd.xlane.f32.xlu0 %v1098
        %v1100 = vpop.xlane.xlu0 %1099
        %v1101 = vsel %vm905, %v1095, 0.0
        %1102 = vadd.xlane.f32.xlu0 %v1101
        %v1103 = vpop.xlane.xlu0 %1102
        %v1104 = vsel %vm912, %v1097, 0.0
        %1105 = vadd.xlane.f32.xlu0 %v1104
        %v1106 = vpop.xlane.xlu0 %1105
        %v1107 = vrcp.pop %v1100
        %v1108 = vrcp.pop %v1103
        %v1109 = vrcp.pop %v1106
        %v1110 = vmul.f32 %v1093, %v1107
        %v1111 = vmul.f32 %v1095, %v1108
        %v1112 = vmul.f32 %v1097, %v1109
        %v1113 = vpack.c.bf16 %v1111, %v1110
        %v1114 = vpack.c.bf16 %v1112, %v1112
        %1115 = vrot.lane.b32.xlu0 %v833, 56
        %v1116 = vpop.permute.xlu0 %1115
        %1117 = vrot.lane.b32.xlu0 %v834, 56
        %v1118 = vpop.permute.xlu0 %1117
        %v1121 = vsel %vm905, %v1113, 0
        %v1124 = vsel %vm905, %v1114, 0
        %v1127 = vand.u32 %v1118, %v955
        %1129 = vmatprep.subr.bf16.mxu0 0
        %1130 = vmatpush1.bf16.msra.mxu0 %v1116
        %1131 = vmatprep.subr.bf16.mxu0 0
        %1132 = vmatpush1.bf16.msra.mxu0 %v1127
        %1133 = vmatprep.subr.bf16.mxu0 0
        %1134 = vmatpush1.bf16.msra.mxu0 0
        %1135 = vmatprep.subr.bf16.mxu0 0
        %1136 = vmatpush1.bf16.msra.mxu0 0
        %1137 = vmatprep.subr.bf16.mxu0 0
        %1138 = vmatpush1.bf16.msra.mxu0 0
        %1139 = vmatprep.subr.bf16.mxu0 0
        %1140 = vmatpush1.bf16.msra.mxu0 0
        %1141 = vmatprep.subr.bf16.mxu0 0
        %1142 = vmatpush1.bf16.msra.mxu0 0
        %1143 = vmatprep.subr.bf16.mxu0 0
        %1144 = vmatpush1.bf16.msra.mxu0 0
        %1145 = vmatprep.subr.bf16.mxu0 0
        %1146 = vmatpush1.bf16.msra.mxu0 0
        %1147 = vmatprep.subr.bf16.mxu0 0
        %1148 = vmatpush1.bf16.msra.mxu0 0
        %1149 = vmatprep.subr.bf16.mxu0 0
        %1150 = vmatpush1.bf16.msra.mxu0 0
        %1151 = vmatprep.subr.bf16.mxu0 0
        %1152 = vmatpush1.bf16.msra.mxu0 0
        %1153 = vmatprep.subr.bf16.mxu0 0
        %1154 = vmatpush1.bf16.msra.mxu0 0
        %1155 = vmatprep.subr.bf16.mxu0 0
        %1156 = vmatpush1.bf16.msra.mxu0 0
        %1157 = vmatprep.subr.bf16.mxu0 0
        %1158 = vmatpush1.bf16.msra.mxu0 0
        %1159 = vmatprep.subr.bf16.mxu0 0
        %1160 = vmatpush1.bf16.msra.mxu0 0
        %1161 = vmatprep.mubr.bf16.mxu0 0
        %1162 = vmatmul.mubr.bf16.gmra.mrb[0].mxu0 %v1121
        %v1163 = vpop.f32.mrb[0].mxu0
        %v1164 = vadd.f32 0.0, %v1163
        %v1165 = vpop.f32.mrb[0].mxu0
        %v1166 = vpop.f32.mrb[0].mxu0
        %v1167 = vadd.f32 0.0, %v1166
        %v1168 = vpop.f32.mrb[0].mxu0
        %1169 = vmatprep.mubr.bf16.mxu0 0
        %1170 = vmatmul.mubr.bf16.gmra.mrb[0].mxu0 %v1124
        %v1171 = vpop.f32.mrb[0].mxu0
        %v1172 = vadd.f32 0.0, %v1171
        %v1173 = vpop.f32.mrb[0].mxu0
        %v1174 = vpop.f32.mrb[0].mxu0
        %v1175 = vpop.f32.mrb[0].mxu0
        %1176 = vdwg.mxu0
        %v1177 = vpack.c.bf16 %v1167, %v1164
        %v1178 = vpack.c.bf16 %v1172, %v1172
        %v1180 = vsel %vm841, %v1177, 0
        %v1183 = vsel %vm841, %v1178, 0
        %vm1185 = vcmask 1043456
        %v1187 = vsel %vm1185, %v830, 0
        %1189 = vmatprep.subr.bf16.mxu0 0
        %1190 = vmatpush1.bf16.msra.mxu0 %v1187
        %1191 = vmatprep.subr.bf16.mxu0 0
        %1192 = vmatpush1.bf16.msra.mxu0 0
        %1193 = vmatprep.subr.bf16.mxu0 0
        %1194 = vmatpush1.bf16.msra.mxu0 0
        %1195 = vmatprep.subr.bf16.mxu0 0
        %1196 = vmatpush1.bf16.msra.mxu0 0
        %1197 = vmatprep.subr.bf16.mxu0 0
        %1198 = vmatpush1.bf16.msra.mxu0 0
        %1199 = vmatprep.subr.bf16.mxu0 0
        %1200 = vmatpush1.bf16.msra.mxu0 0
        %1201 = vmatprep.subr.bf16.mxu0 0
        %1202 = vmatpush1.bf16.msra.mxu0 0
        %1203 = vmatprep.subr.bf16.mxu0 0
        %1204 = vmatpush1.bf16.msra.mxu0 0
        %1205 = vmatprep.subr.bf16.mxu0 0
        %1206 = vmatpush1.bf16.msra.mxu0 0
        %1207 = vmatprep.subr.bf16.mxu0 0
        %1208 = vmatpush1.bf16.msra.mxu0 0
        %1209 = vmatprep.subr.bf16.mxu0 0
        %1210 = vmatpush1.bf16.msra.mxu0 0
        %1211 = vmatprep.subr.bf16.mxu0 0
        %1212 = vmatpush1.bf16.msra.mxu0 0
        %1213 = vmatprep.subr.bf16.mxu0 0
        %1214 = vmatpush1.bf16.msra.mxu0 0
        %1215 = vmatprep.subr.bf16.mxu0 0
        %1216 = vmatpush1.bf16.msra.mxu0 0
        %1217 = vmatprep.subr.bf16.mxu0 0
        %1218 = vmatpush1.bf16.msra.mxu0 0
        %1219 = vmatprep.subr.bf16.mxu0 0
        %1220 = vmatpush1.bf16.msra.mxu0 0
        %1221 = vmatprep.mubr.bf16.mxu0 0
        %1222 = vmatmul.mubr.bf16.gmra.mrb[0].mxu0 %v1180
        %v1223 = vpop.f32.mrb[0].mxu0
        %v1224 = vadd.f32 0.0, %v1223
        %v1225 = vpop.f32.mrb[0].mxu0
        %v1226 = vpop.f32.mrb[0].mxu0
        %v1227 = vadd.f32 0.0, %v1226
        %v1228 = vpop.f32.mrb[0].mxu0
        %1229 = vmatprep.mubr.bf16.mxu0 0
        %1230 = vmatmul.mubr.bf16.gmra.mrb[0].mxu0 %v1183
        %v1231 = vpop.f32.mrb[0].mxu0
        %v1232 = vadd.f32 0.0, %v1231
        %v1233 = vpop.f32.mrb[0].mxu0
        %v1234 = vpop.f32.mrb[0].mxu0
        %v1235 = vpop.f32.mrb[0].mxu0
        %1236 = vdwg.mxu0
        %v1238 = vsel %vm841, %v1007, 0
        %v1241 = vsel %vm841, %v1008, 0
        %v1244 = vsel %vm1185, %v829, 0
        %1246 = vmatprep.subr.bf16.mxu0 0
        %1247 = vmatpush1.bf16.msra.mxu0 %v1244
        %1248 = vmatprep.subr.bf16.mxu0 0
        %1249 = vmatpush1.bf16.msra.mxu0 0
        %1250 = vmatprep.subr.bf16.mxu0 0
        %1251 = vmatpush1.bf16.msra.mxu0 0
        %1252 = vmatprep.subr.bf16.mxu0 0
        %1253 = vmatpush1.bf16.msra.mxu0 0
        %1254 = vmatprep.subr.bf16.mxu0 0
        %1255 = vmatpush1.bf16.msra.mxu0 0
        %1256 = vmatprep.subr.bf16.mxu0 0
        %1257 = vmatpush1.bf16.msra.mxu0 0
        %1258 = vmatprep.subr.bf16.mxu0 0
        %1259 = vmatpush1.bf16.msra.mxu0 0
        %1260 = vmatprep.subr.bf16.mxu0 0
        %1261 = vmatpush1.bf16.msra.mxu0 0
        %1262 = vmatprep.subr.bf16.mxu0 0
        %1263 = vmatpush1.bf16.msra.mxu0 0
        %1264 = vmatprep.subr.bf16.mxu0 0
        %1265 = vmatpush1.bf16.msra.mxu0 0
        %1266 = vmatprep.subr.bf16.mxu0 0
        %1267 = vmatpush1.bf16.msra.mxu0 0
        %1268 = vmatprep.subr.bf16.mxu0 0
        %1269 = vmatpush1.bf16.msra.mxu0 0
        %1270 = vmatprep.subr.bf16.mxu0 0
        %1271 = vmatpush1.bf16.msra.mxu0 0
        %1272 = vmatprep.subr.bf16.mxu0 0
        %1273 = vmatpush1.bf16.msra.mxu0 0
        %1274 = vmatprep.subr.bf16.mxu0 0
        %1275 = vmatpush1.bf16.msra.mxu0 0
        %1276 = vmatprep.subr.bf16.mxu0 0
        %1277 = vmatpush1.bf16.msra.mxu0 0
        %1278 = vmatprep.mubr.bf16.mxu0 0
        %1279 = vmatmul.mubr.bf16.gmra.mrb[0].mxu0 %v1238
        %v1280 = vpop.f32.mrb[0].mxu0
        %v1281 = vadd.f32 %v1224, %v1280
        %v1282 = vpop.f32.mrb[0].mxu0
        %v1283 = vpop.f32.mrb[0].mxu0
        %v1284 = vadd.f32 %v1227, %v1283
        %v1285 = vpop.f32.mrb[0].mxu0
        %1286 = vmatprep.mubr.bf16.mxu0 0
        %1287 = vmatmul.mubr.bf16.gmra.mrb[0].mxu0 %v1241
        %v1288 = vpop.f32.mrb[0].mxu0
        %v1289 = vadd.f32 %v1232, %v1288
        %v1290 = vpop.f32.mrb[0].mxu0
        %v1291 = vpop.f32.mrb[0].mxu0
        %v1292 = vpop.f32.mrb[0].mxu0
        %1293 = vdwg.mxu0
        %1294 = vrot.lane.b32.xlu0 %v833, 112
        %v1295 = vpop.permute.xlu0 %1294
        %1296 = vrot.lane.b32.xlu0 %v834, 112
        %v1297 = vpop.permute.xlu0 %1296
        %1298 = vrot.lane.b32.xlu0 %v833, 80
        %v1299 = vpop.permute.xlu0 %1298
        %1300 = vrot.lane.b32.xlu0 %v834, 80
        %v1301 = vpop.permute.xlu0 %1300
        %v1303 = vsel %vm841, %v1295, 0
        %v1306 = vsel %vm841, %v1297, 0
        %v1309 = vsel %vm841, %v1299, 0
        %v1312 = vsel %vm841, %v1301, 0
        %1314 = vmatprep.subr.bf16.mxu0 0
        %1315 = vmatpush1.bf16.xpose.msra.mxu0 %v1309
        %1316 = vmatprep.subr.bf16.mxu0 0
        %1317 = vmatpush1.bf16.xpose.msra.mxu0 %v1312
        %1318 = vmatprep.subr.bf16.mxu0 0
        %1319 = vmatpush1.bf16.xpose.msra.mxu0 0
        %1320 = vmatprep.subr.bf16.mxu0 0
        %1321 = vmatpush1.bf16.xpose.msra.mxu0 0
        %1322 = vmatprep.subr.bf16.mxu0 0
        %1323 = vmatpush1.bf16.xpose.msra.mxu0 0
        %1324 = vmatprep.subr.bf16.mxu0 0
        %1325 = vmatpush1.bf16.xpose.msra.mxu0 0
        %1326 = vmatprep.subr.bf16.mxu0 0
        %1327 = vmatpush1.bf16.xpose.msra.mxu0 0
        %1328 = vmatprep.subr.bf16.mxu0 0
        %1329 = vmatpush1.bf16.xpose.msra.mxu0 0
        %1330 = vmatprep.subr.bf16.mxu0 0
        %1331 = vmatpush1.bf16.xpose.msra.mxu0 0
        %1332 = vmatprep.subr.bf16.mxu0 0
        %1333 = vmatpush1.bf16.xpose.msra.mxu0 0
        %1334 = vmatprep.subr.bf16.mxu0 0
        %1335 = vmatpush1.bf16.xpose.msra.mxu0 0
        %1336 = vmatprep.subr.bf16.mxu0 0
        %1337 = vmatpush1.bf16.xpose.msra.mxu0 0
        %1338 = vmatprep.subr.bf16.mxu0 0
        %1339 = vmatpush1.bf16.xpose.msra.mxu0 0
        %1340 = vmatprep.subr.bf16.mxu0 0
        %1341 = vmatpush1.bf16.xpose.msra.mxu0 0
        %1342 = vmatprep.subr.bf16.mxu0 0
        %1343 = vmatpush1.bf16.xpose.msra.mxu0 0
        %1344 = vmatprep.subr.bf16.mxu0 0
        %1345 = vmatpush1.bf16.xpose.msra.mxu0 0
        %1346 = vmatprep.mubr.bf16.mxu0 0
        %1347 = vmatmul.mubr.bf16.gmra.mrb[0].mxu0 %v1303
        %v1348 = vpop.f32.mrb[0].mxu0
        %v1349 = vadd.f32 0.0, %v1348
        %v1350 = vpop.f32.mrb[0].mxu0
        %v1351 = vpop.f32.mrb[0].mxu0
        %v1352 = vadd.f32 0.0, %v1351
        %v1353 = vpop.f32.mrb[0].mxu0
        %1354 = vmatprep.mubr.bf16.mxu0 0
        %1355 = vmatmul.mubr.bf16.gmra.mrb[0].mxu0 %v1306
        %v1356 = vpop.f32.mrb[0].mxu0
        %v1357 = vadd.f32 0.0, %v1356
        %v1358 = vpop.f32.mrb[0].mxu0
        %v1359 = vpop.f32.mrb[0].mxu0
        %v1360 = vpop.f32.mrb[0].mxu0
        %1361 = vdwg.mxu0
        %v1362 = vmul.f32 %v1349, 0.35355338
        %v1363 = vmul.f32 %v1352, 0.35355338
        %v1364 = vmul.f32 %v1357, 0.35355338
        %v1365 = vsel %vm905, %v1362, -inf
        %1366 = vmax.xlane.f32.xlu0 %v1365
        %v1367 = vpop.xlane.xlu0 %1366
        %v1368 = vsel %vm905, %v1363, -inf
        %1369 = vmax.xlane.f32.xlu0 %v1368
        %v1370 = vpop.xlane.xlu0 %1369
        %v1371 = vsel %vm912, %v1364, -inf
        %1372 = vmax.xlane.f32.xlu0 %v1371
        %v1373 = vpop.xlane.xlu0 %1372
        %v1374 = vsub.f32 %v1362, %v1367
        %v1375 = vsub.f32 %v1363, %v1370
        %v1376 = vsub.f32 %v1364, %v1373
        %v1377 = vmul.f32 %v1374, 1.442695
        %v1378 = vpow.pop %v1377
        %v1379 = vmul.f32 %v1375, 1.442695
        %v1380 = vpow.pop %v1379
        %v1381 = vmul.f32 %v1376, 1.442695
        %v1382 = vpow.pop %v1381
        %v1383 = vsel %vm905, %v1378, 0.0
        %1384 = vadd.xlane.f32.xlu0 %v1383
        %v1385 = vpop.xlane.xlu0 %1384
        %v1386 = vsel %vm905, %v1380, 0.0
        %1387 = vadd.xlane.f32.xlu0 %v1386
        %v1388 = vpop.xlane.xlu0 %1387
        %v1389 = vsel %vm912, %v1382, 0.0
        %1390 = vadd.xlane.f32.xlu0 %v1389
        %v1391 = vpop.xlane.xlu0 %1390
        %v1392 = vrcp.pop %v1385
        %v1393 = vrcp.pop %v1388
        %v1394 = vrcp.pop %v1391
        %v1395 = vmul.f32 %v1378, %v1392
        %v1396 = vmul.f32 %v1380, %v1393
        %v1397 = vmul.f32 %v1382, %v1394
        %v1398 = vpack.c.bf16 %v1396, %v1395
        %v1399 = vpack.c.bf16 %v1397, %v1397
        %1400 = vrot.lane.b32.xlu0 %v833, 48
        %v1401 = vpop.permute.xlu0 %1400
        %1402 = vrot.lane.b32.xlu0 %v834, 48
        %v1403 = vpop.permute.xlu0 %1402
        %v1406 = vsel %vm905, %v1398, 0
        %v1409 = vsel %vm905, %v1399, 0
        %v1412 = vand.u32 %v1403, %v955
        %1414 = vmatprep.subr.bf16.mxu0 0
        %1415 = vmatpush1.bf16.msra.mxu0 %v1401
        %1416 = vmatprep.subr.bf16.mxu0 0
        %1417 = vmatpush1.bf16.msra.mxu0 %v1412
        %1418 = vmatprep.subr.bf16.mxu0 0
        %1419 = vmatpush1.bf16.msra.mxu0 0
        %1420 = vmatprep.subr.bf16.mxu0 0
        %1421 = vmatpush1.bf16.msra.mxu0 0
        %1422 = vmatprep.subr.bf16.mxu0 0
        %1423 = vmatpush1.bf16.msra.mxu0 0
        %1424 = vmatprep.subr.bf16.mxu0 0
        %1425 = vmatpush1.bf16.msra.mxu0 0
        %1426 = vmatprep.subr.bf16.mxu0 0
        %1427 = vmatpush1.bf16.msra.mxu0 0
        %1428 = vmatprep.subr.bf16.mxu0 0
        %1429 = vmatpush1.bf16.msra.mxu0 0
        %1430 = vmatprep.subr.bf16.mxu0 0
        %1431 = vmatpush1.bf16.msra.mxu0 0
        %1432 = vmatprep.subr.bf16.mxu0 0
        %1433 = vmatpush1.bf16.msra.mxu0 0
        %1434 = vmatprep.subr.bf16.mxu0 0
        %1435 = vmatpush1.bf16.msra.mxu0 0
        %1436 = vmatprep.subr.bf16.mxu0 0
        %1437 = vmatpush1.bf16.msra.mxu0 0
        %1438 = vmatprep.subr.bf16.mxu0 0
        %1439 = vmatpush1.bf16.msra.mxu0 0
        %1440 = vmatprep.subr.bf16.mxu0 0
        %1441 = vmatpush1.bf16.msra.mxu0 0
        %1442 = vmatprep.subr.bf16.mxu0 0
        %1443 = vmatpush1.bf16.msra.mxu0 0
        %1444 = vmatprep.subr.bf16.mxu0 0
        %1445 = vmatpush1.bf16.msra.mxu0 0
        %1446 = vmatprep.mubr.bf16.mxu0 0
        %1447 = vmatmul.mubr.bf16.gmra.mrb[0].mxu0 %v1406
        %v1448 = vpop.f32.mrb[0].mxu0
        %v1449 = vadd.f32 0.0, %v1448
        %v1450 = vpop.f32.mrb[0].mxu0
        %v1451 = vpop.f32.mrb[0].mxu0
        %v1452 = vadd.f32 0.0, %v1451
        %v1453 = vpop.f32.mrb[0].mxu0
        %1454 = vmatprep.mubr.bf16.mxu0 0
        %1455 = vmatmul.mubr.bf16.gmra.mrb[0].mxu0 %v1409
        %v1456 = vpop.f32.mrb[0].mxu0
        %v1457 = vadd.f32 0.0, %v1456
        %v1458 = vpop.f32.mrb[0].mxu0
        %v1459 = vpop.f32.mrb[0].mxu0
        %v1460 = vpop.f32.mrb[0].mxu0
        %1461 = vdwg.mxu0
        %v1462 = vpack.c.bf16 %v1452, %v1449
        %v1463 = vpack.c.bf16 %v1457, %v1457
        %v1465 = vsel %vm841, %v1462, 0
        %v1468 = vsel %vm841, %v1463, 0
        %v1471 = vsel %vm1185, %v831, 0
        %1473 = vmatprep.subr.bf16.mxu0 0
        %1474 = vmatpush1.bf16.msra.mxu0 %v1471
        %1475 = vmatprep.subr.bf16.mxu0 0
        %1476 = vmatpush1.bf16.msra.mxu0 0
        %1477 = vmatprep.subr.bf16.mxu0 0
        %1478 = vmatpush1.bf16.msra.mxu0 0
        %1479 = vmatprep.subr.bf16.mxu0 0
        %1480 = vmatpush1.bf16.msra.mxu0 0
        %1481 = vmatprep.subr.bf16.mxu0 0
        %1482 = vmatpush1.bf16.msra.mxu0 0
        %1483 = vmatprep.subr.bf16.mxu0 0
        %1484 = vmatpush1.bf16.msra.mxu0 0
        %1485 = vmatprep.subr.bf16.mxu0 0
        %1486 = vmatpush1.bf16.msra.mxu0 0
        %1487 = vmatprep.subr.bf16.mxu0 0
        %1488 = vmatpush1.bf16.msra.mxu0 0
        %1489 = vmatprep.subr.bf16.mxu0 0
        %1490 = vmatpush1.bf16.msra.mxu0 0
        %1491 = vmatprep.subr.bf16.mxu0 0
        %1492 = vmatpush1.bf16.msra.mxu0 0
        %1493 = vmatprep.subr.bf16.mxu0 0
        %1494 = vmatpush1.bf16.msra.mxu0 0
        %1495 = vmatprep.subr.bf16.mxu0 0
        %1496 = vmatpush1.bf16.msra.mxu0 0
        %1497 = vmatprep.subr.bf16.mxu0 0
        %1498 = vmatpush1.bf16.msra.mxu0 0
        %1499 = vmatprep.subr.bf16.mxu0 0
        %1500 = vmatpush1.bf16.msra.mxu0 0
        %1501 = vmatprep.subr.bf16.mxu0 0
        %1502 = vmatpush1.bf16.msra.mxu0 0
        %1503 = vmatprep.subr.bf16.mxu0 0
        %1504 = vmatpush1.bf16.msra.mxu0 0
        %1505 = vmatprep.mubr.bf16.mxu0 0
        %1506 = vmatmul.mubr.bf16.gmra.mrb[0].mxu0 %v1465
        %v1507 = vpop.f32.mrb[0].mxu0
        %v1508 = vadd.f32 0.0, %v1507
        %v1509 = vpop.f32.mrb[0].mxu0
        %v1510 = vpop.f32.mrb[0].mxu0
        %v1511 = vadd.f32 0.0, %v1510
        %v1512 = vpop.f32.mrb[0].mxu0
        %1513 = vmatprep.mubr.bf16.mxu0 0
        %1514 = vmatmul.mubr.bf16.gmra.mrb[0].mxu0 %v1468
        %v1515 = vpop.f32.mrb[0].mxu0
        %v1516 = vadd.f32 0.0, %v1515
        %v1517 = vpop.f32.mrb[0].mxu0
        %v1518 = vpop.f32.mrb[0].mxu0
        %v1519 = vpop.f32.mrb[0].mxu0
        %1520 = vdwg.mxu0
        %v1521 = vadd.f32 %v1281, %v1508
        %v1522 = vadd.f32 %v1284, %v1511
        %v1523 = vadd.f32 %v1289, %v1516
        %1524 = vrot.lane.b32.xlu0 %v833, 104
        %v1525 = vpop.permute.xlu0 %1524
        %1526 = vrot.lane.b32.xlu0 %v834, 104
        %v1527 = vpop.permute.xlu0 %1526
        %1528 = vrot.lane.b32.xlu0 %v833, 72
        %v1529 = vpop.permute.xlu0 %1528
        %1530 = vrot.lane.b32.xlu0 %v834, 72
        %v1531 = vpop.permute.xlu0 %1530
        %v1533 = vsel %vm841, %v1525, 0
        %v1536 = vsel %vm841, %v1527, 0
        %v1539 = vsel %vm841, %v1529, 0
        %v1542 = vsel %vm841, %v1531, 0
        %1544 = vmatprep.subr.bf16.mxu0 0
        %1545 = vmatpush1.bf16.xpose.msra.mxu0 %v1539
        %1546 = vmatprep.subr.bf16.mxu0 0
        %1547 = vmatpush1.bf16.xpose.msra.mxu0 %v1542
        %1548 = vmatprep.subr.bf16.mxu0 0
        %1549 = vmatpush1.bf16.xpose.msra.mxu0 0
        %1550 = vmatprep.subr.bf16.mxu0 0
        %1551 = vmatpush1.bf16.xpose.msra.mxu0 0
        %1552 = vmatprep.subr.bf16.mxu0 0
        %1553 = vmatpush1.bf16.xpose.msra.mxu0 0
        %1554 = vmatprep.subr.bf16.mxu0 0
        %1555 = vmatpush1.bf16.xpose.msra.mxu0 0
        %1556 = vmatprep.subr.bf16.mxu0 0
        %1557 = vmatpush1.bf16.xpose.msra.mxu0 0
        %1558 = vmatprep.subr.bf16.mxu0 0
        %1559 = vmatpush1.bf16.xpose.msra.mxu0 0
        %1560 = vmatprep.subr.bf16.mxu0 0
        %1561 = vmatpush1.bf16.xpose.msra.mxu0 0
        %1562 = vmatprep.subr.bf16.mxu0 0
        %1563 = vmatpush1.bf16.xpose.msra.mxu0 0
        %1564 = vmatprep.subr.bf16.mxu0 0
        %1565 = vmatpush1.bf16.xpose.msra.mxu0 0
        %1566 = vmatprep.subr.bf16.mxu0 0
        %1567 = vmatpush1.bf16.xpose.msra.mxu0 0
        %1568 = vmatprep.subr.bf16.mxu0 0
        %1569 = vmatpush1.bf16.xpose.msra.mxu0 0
        %1570 = vmatprep.subr.bf16.mxu0 0
        %1571 = vmatpush1.bf16.xpose.msra.mxu0 0
        %1572 = vmatprep.subr.bf16.mxu0 0
        %1573 = vmatpush1.bf16.xpose.msra.mxu0 0
        %1574 = vmatprep.subr.bf16.mxu0 0
        %1575 = vmatpush1.bf16.xpose.msra.mxu0 0
        %1576 = vmatprep.mubr.bf16.mxu0 0
        %1577 = vmatmul.mubr.bf16.gmra.mrb[0].mxu0 %v1533
        %v1578 = vpop.f32.mrb[0].mxu0
        %v1579 = vadd.f32 0.0, %v1578
        %v1580 = vpop.f32.mrb[0].mxu0
        %v1581 = vpop.f32.mrb[0].mxu0
        %v1582 = vadd.f32 0.0, %v1581
        %v1583 = vpop.f32.mrb[0].mxu0
        %1584 = vmatprep.mubr.bf16.mxu0 0
        %1585 = vmatmul.mubr.bf16.gmra.mrb[0].mxu0 %v1536
        %v1586 = vpop.f32.mrb[0].mxu0
        %v1587 = vadd.f32 0.0, %v1586
        %v1588 = vpop.f32.mrb[0].mxu0
        %v1589 = vpop.f32.mrb[0].mxu0
        %v1590 = vpop.f32.mrb[0].mxu0
        %1591 = vdwg.mxu0
        %v1592 = vmul.f32 %v1579, 0.35355338
        %v1593 = vmul.f32 %v1582, 0.35355338
        %v1594 = vmul.f32 %v1587, 0.35355338
        %v1595 = vsel %vm905, %v1592, -inf
        %1596 = vmax.xlane.f32.xlu0 %v1595
        %v1597 = vpop.xlane.xlu0 %1596
        %v1598 = vsel %vm905, %v1593, -inf
        %1599 = vmax.xlane.f32.xlu0 %v1598
        %v1600 = vpop.xlane.xlu0 %1599
        %v1601 = vsel %vm912, %v1594, -inf
        %1602 = vmax.xlane.f32.xlu0 %v1601
        %v1603 = vpop.xlane.xlu0 %1602
        %v1604 = vsub.f32 %v1592, %v1597
        %v1605 = vsub.f32 %v1593, %v1600
        %v1606 = vsub.f32 %v1594, %v1603
        %v1607 = vmul.f32 %v1604, 1.442695
        %v1608 = vpow.pop %v1607
        %v1609 = vmul.f32 %v1605, 1.442695
        %v1610 = vpow.pop %v1609
        %v1611 = vmul.f32 %v1606, 1.442695
        %v1612 = vpow.pop %v1611
        %v1613 = vsel %vm905, %v1608, 0.0
        %1614 = vadd.xlane.f32.xlu0 %v1613
        %v1615 = vpop.xlane.xlu0 %1614
        %v1616 = vsel %vm905, %v1610, 0.0
        %1617 = vadd.xlane.f32.xlu0 %v1616
        %v1618 = vpop.xlane.xlu0 %1617
        %v1619 = vsel %vm912, %v1612, 0.0
        %1620 = vadd.xlane.f32.xlu0 %v1619
        %v1621 = vpop.xlane.xlu0 %1620
        %v1622 = vrcp.pop %v1615
        %v1623 = vrcp.pop %v1618
        %v1624 = vrcp.pop %v1621
        %v1625 = vmul.f32 %v1608, %v1622
        %v1626 = vmul.f32 %v1610, %v1623
        %v1627 = vmul.f32 %v1612, %v1624
        %v1628 = vpack.c.bf16 %v1626, %v1625
        %v1629 = vpack.c.bf16 %v1627, %v1627
        %1630 = vrot.lane.b32.xlu0 %v833, 40
        %v1631 = vpop.permute.xlu0 %1630
        %1632 = vrot.lane.b32.xlu0 %v834, 40
        %v1633 = vpop.permute.xlu0 %1632
        %v1636 = vsel %vm905, %v1628, 0
        %v1639 = vsel %vm905, %v1629, 0
        %v1642 = vand.u32 %v1633, %v955
        %1644 = vmatprep.subr.bf16.mxu0 0
        %1645 = vmatpush1.bf16.msra.mxu0 %v1631
        %1646 = vmatprep.subr.bf16.mxu0 0
        %1647 = vmatpush1.bf16.msra.mxu0 %v1642
        %1648 = vmatprep.subr.bf16.mxu0 0
        %1649 = vmatpush1.bf16.msra.mxu0 0
        %1650 = vmatprep.subr.bf16.mxu0 0
        %1651 = vmatpush1.bf16.msra.mxu0 0
        %1652 = vmatprep.subr.bf16.mxu0 0
        %1653 = vmatpush1.bf16.msra.mxu0 0
        %1654 = vmatprep.subr.bf16.mxu0 0
        %1655 = vmatpush1.bf16.msra.mxu0 0
        %1656 = vmatprep.subr.bf16.mxu0 0
        %1657 = vmatpush1.bf16.msra.mxu0 0
        %1658 = vmatprep.subr.bf16.mxu0 0
        %1659 = vmatpush1.bf16.msra.mxu0 0
        %1660 = vmatprep.subr.bf16.mxu0 0
        %1661 = vmatpush1.bf16.msra.mxu0 0
        %1662 = vmatprep.subr.bf16.mxu0 0
        %1663 = vmatpush1.bf16.msra.mxu0 0
        %1664 = vmatprep.subr.bf16.mxu0 0
        %1665 = vmatpush1.bf16.msra.mxu0 0
        %1666 = vmatprep.subr.bf16.mxu0 0
        %1667 = vmatpush1.bf16.msra.mxu0 0
        %1668 = vmatprep.subr.bf16.mxu0 0
        %1669 = vmatpush1.bf16.msra.mxu0 0
        %1670 = vmatprep.subr.bf16.mxu0 0
        %1671 = vmatpush1.bf16.msra.mxu0 0
        %1672 = vmatprep.subr.bf16.mxu0 0
        %1673 = vmatpush1.bf16.msra.mxu0 0
        %1674 = vmatprep.subr.bf16.mxu0 0
        %1675 = vmatpush1.bf16.msra.mxu0 0
        %1676 = vmatprep.mubr.bf16.mxu0 0
        %1677 = vmatmul.mubr.bf16.gmra.mrb[0].mxu0 %v1636
        %v1678 = vpop.f32.mrb[0].mxu0
        %v1679 = vadd.f32 0.0, %v1678
        %v1680 = vpop.f32.mrb[0].mxu0
        %v1681 = vpop.f32.mrb[0].mxu0
        %v1682 = vadd.f32 0.0, %v1681
        %v1683 = vpop.f32.mrb[0].mxu0
        %1684 = vmatprep.mubr.bf16.mxu0 0
        %1685 = vmatmul.mubr.bf16.gmra.mrb[0].mxu0 %v1639
        %v1686 = vpop.f32.mrb[0].mxu0
        %v1687 = vadd.f32 0.0, %v1686
        %v1688 = vpop.f32.mrb[0].mxu0
        %v1689 = vpop.f32.mrb[0].mxu0
        %v1690 = vpop.f32.mrb[0].mxu0
        %1691 = vdwg.mxu0
        %v1692 = vpack.c.bf16 %v1682, %v1679
        %v1693 = vpack.c.bf16 %v1687, %v1687
        %v1695 = vsel %vm841, %v1692, 0
        %v1698 = vsel %vm841, %v1693, 0
        %v1701 = vsel %vm1185, %v832, 0
        %1703 = vmatprep.subr.bf16.mxu0 0
        %1704 = vmatpush1.bf16.msra.mxu0 %v1701
        %1705 = vmatprep.subr.bf16.mxu0 0
        %1706 = vmatpush1.bf16.msra.mxu0 0
        %1707 = vmatprep.subr.bf16.mxu0 0
        %1708 = vmatpush1.bf16.msra.mxu0 0
        %1709 = vmatprep.subr.bf16.mxu0 0
        %1710 = vmatpush1.bf16.msra.mxu0 0
        %1711 = vmatprep.subr.bf16.mxu0 0
        %1712 = vmatpush1.bf16.msra.mxu0 0
        %1713 = vmatprep.subr.bf16.mxu0 0
        %1714 = vmatpush1.bf16.msra.mxu0 0
        %1715 = vmatprep.subr.bf16.mxu0 0
        %1716 = vmatpush1.bf16.msra.mxu0 0
        %1717 = vmatprep.subr.bf16.mxu0 0
        %1718 = vmatpush1.bf16.msra.mxu0 0
        %1719 = vmatprep.subr.bf16.mxu0 0
        %1720 = vmatpush1.bf16.msra.mxu0 0
        %1721 = vmatprep.subr.bf16.mxu0 0
        %1722 = vmatpush1.bf16.msra.mxu0 0
        %1723 = vmatprep.subr.bf16.mxu0 0
        %1724 = vmatpush1.bf16.msra.mxu0 0
        %1725 = vmatprep.subr.bf16.mxu0 0
        %1726 = vmatpush1.bf16.msra.mxu0 0
        %1727 = vmatprep.subr.bf16.mxu0 0
        %1728 = vmatpush1.bf16.msra.mxu0 0
        %1729 = vmatprep.subr.bf16.mxu0 0
        %1730 = vmatpush1.bf16.msra.mxu0 0
        %1731 = vmatprep.subr.bf16.mxu0 0
        %1732 = vmatpush1.bf16.msra.mxu0 0
        %1733 = vmatprep.subr.bf16.mxu0 0
        %1734 = vmatpush1.bf16.msra.mxu0 0
        %1735 = vmatprep.mubr.bf16.mxu0 0
        %1736 = vmatmul.mubr.bf16.gmra.mrb[0].mxu0 %v1695
        %v1737 = vpop.f32.mrb[0].mxu0
        %v1738 = vadd.f32 0.0, %v1737
        %v1739 = vpop.f32.mrb[0].mxu0
        %v1740 = vpop.f32.mrb[0].mxu0
        %v1741 = vadd.f32 0.0, %v1740
        %v1742 = vpop.f32.mrb[0].mxu0
        %1743 = vmatprep.mubr.bf16.mxu0 0
        %1744 = vmatmul.mubr.bf16.gmra.mrb[0].mxu0 %v1698
        %v1745 = vpop.f32.mrb[0].mxu0
        %v1746 = vadd.f32 0.0, %v1745
        %v1747 = vpop.f32.mrb[0].mxu0
        %v1748 = vpop.f32.mrb[0].mxu0
        %v1749 = vpop.f32.mrb[0].mxu0
        %1750 = vdwg.mxu0
        %v1751 = vadd.f32 %v1521, %v1738
        %v1752 = vadd.f32 %v1522, %v1741
        %v1753 = vadd.f32 %v1523, %v1746
        %v1754 = vadd.f32 %v675, %v1751
        %v1755 = vadd.f32 %v678, %v1752
        %v1756 = vadd.f32 %v683, %v1753
        %v1757 = vld [vmem:[%s8] sm:$0x1]
        %v1759 = vlaneseq
        %v1760 = vshrl.u32 %v1759, 7
        %v1761 = vsub.s32 0, %v1760
        %v1762 = vrot.slane %v1757, %v1761
        %v1764 = vadd.f32 %v1754, %v1762
        %v1765 = vadd.f32 %v1755, %v1762
        %v1766 = vadd.f32 %v1756, %v1762
        %v1767 = vld [vmem:[%s9] sm:$0x1]
        %v1768 = vld [vmem:[%s10] sm:$0x1]
        %v1769 = vsel %vm690, %v1764, 0.0
        %1770 = vadd.xlane.f32.xlu0 %v1769
        %v1771 = vpop.xlane.xlu0 %1770
        %v1772 = vsel %vm690, %v1765, 0.0
        %1773 = vadd.xlane.f32.xlu0 %v1772
        %v1774 = vpop.xlane.xlu0 %1773
        %v1775 = vsel %vm697, %v1766, 0.0
        %1776 = vadd.xlane.f32.xlu0 %v1775
        %v1777 = vpop.xlane.xlu0 %1776
        %v1778 = vmul.f32 %v1771, %v701
        %v1779 = vmul.f32 %v1774, %v701
        %v1780 = vmul.f32 %v1777, %v701
        %v1781 = vsub.f32 %v1764, %v1778
        %v1782 = vsub.f32 %v1765, %v1779
        %v1783 = vsub.f32 %v1766, %v1780
        %v1784 = vmul.f32 %v1781, %v1781
        %v1785 = vmul.f32 %v1782, %v1782
        %v1786 = vmul.f32 %v1783, %v1783
        %v1787 = vsel %vm690, %v1784, 0.0
        %1788 = vadd.xlane.f32.xlu0 %v1787
        %v1789 = vpop.xlane.xlu0 %1788
        %v1790 = vsel %vm690, %v1785, 0.0
        %1791 = vadd.xlane.f32.xlu0 %v1790
        %v1792 = vpop.xlane.xlu0 %1791
        %v1793 = vsel %vm697, %v1786, 0.0
        %1794 = vadd.xlane.f32.xlu0 %v1793
        %v1795 = vpop.xlane.xlu0 %1794
        %v1796 = vmul.f32 %v1789, %v701
        %v1797 = vmul.f32 %v1792, %v701
        %v1798 = vmul.f32 %v1795, %v701
        %v1799 = vadd.f32 %v1796, 1e-06
        %v1800 = vadd.f32 %v1797, 1e-06
        %v1801 = vadd.f32 %v1798, 1e-06
        %v1802 = vrsqrt.pop %v1799
        %v1803 = vrsqrt.pop %v1800
        %v1804 = vrsqrt.pop %v1801
        %v1805 = vmul.f32 %v1781, %v1802
        %v1806 = vmul.f32 %v1782, %v1803
        %v1807 = vmul.f32 %v1783, %v1804
        %v1809 = vlaneseq
        %v1810 = vshrl.u32 %v1809, 7
        %v1811 = vsub.s32 0, %v1810
        %v1812 = vrot.slane %v1767, %v1811
        %v1814 = vmul.f32 %v1805, %v1812
        %v1815 = vmul.f32 %v1806, %v1812
        %v1816 = vmul.f32 %v1807, %v1812
        %v1818 = vlaneseq
        %v1819 = vshrl.u32 %v1818, 7
        %v1820 = vsub.s32 0, %v1819
        %v1821 = vrot.slane %v1768, %v1820
        %v1823 = vadd.f32 %v1814, %v1821
        %v1824 = vadd.f32 %v1815, %v1821
        %v1825 = vadd.f32 %v1816, %v1821
        %v1826 = vld [vmem:[%s11] sm:$0xf]
        %v1827 = vld [vmem:[%s11 + $0x4] sm:$0xf]
        %v1828 = vld [vmem:[%s11 + $0x8] sm:$0xf]
        %v1829 = vld [vmem:[%s11 + $0xc] sm:$0xf]
        %v1830 = vpack.c.bf16 %v1824, %v1823
        %v1831 = vpack.c.bf16 %v1825, %v1825
        %v1832 = vld [vmem:[%s12] sm:$0x1]
        %v1834 = vlaneseq
        %v1835 = vshrl.u32 %v1834, 7
        %v1836 = vsub.s32 0, %v1835
        %v1837 = vrot.slane %v1832, %v1836
        %v1843 = vunpack.c.l.b16 %v1826
        %v1844 = vunpack.c.l.b16 %v1827
        %v1845 = vunpack.c.l.b16 %v1828
        %v1846 = vunpack.c.l.b16 %v1829
        %v1847 = vpack.c.b16 %v1844, %v1843
        %v1848 = vpack.c.b16 %v1846, %v1845
        %v1852 = vsel %vm690, %v1830, 0
        %v1855 = vsel %vm690, %v1831, 0
        %1857 = vmatprep.subr.bf16.mxu0 0
        %1858 = vmatpush1.bf16.msra.mxu0 %v1847
        %1859 = vmatprep.subr.bf16.mxu0 0
        %1860 = vmatpush1.bf16.msra.mxu0 %v1848
        %1861 = vmatprep.subr.bf16.mxu0 0
        %1862 = vmatpush1.bf16.msra.mxu0 0
        %1863 = vmatprep.subr.bf16.mxu0 0
        %1864 = vmatpush1.bf16.msra.mxu0 0
        %1865 = vmatprep.subr.bf16.mxu0 0
        %1866 = vmatpush1.bf16.msra.mxu0 0
        %1867 = vmatprep.subr.bf16.mxu0 0
        %1868 = vmatpush1.bf16.msra.mxu0 0
        %1869 = vmatprep.subr.bf16.mxu0 0
        %1870 = vmatpush1.bf16.msra.mxu0 0
        %1871 = vmatprep.subr.bf16.mxu0 0
        %1872 = vmatpush1.bf16.msra.mxu0 0
        %1873 = vmatprep.subr.bf16.mxu0 0
        %1874 = vmatpush1.bf16.msra.mxu0 0
        %1875 = vmatprep.subr.bf16.mxu0 0
        %1876 = vmatpush1.bf16.msra.mxu0 0
        %1877 = vmatprep.subr.bf16.mxu0 0
        %1878 = vmatpush1.bf16.msra.mxu0 0
        %1879 = vmatprep.subr.bf16.mxu0 0
        %1880 = vmatpush1.bf16.msra.mxu0 0
        %1881 = vmatprep.subr.bf16.mxu0 0
        %1882 = vmatpush1.bf16.msra.mxu0 0
        %1883 = vmatprep.subr.bf16.mxu0 0
        %1884 = vmatpush1.bf16.msra.mxu0 0
        %1885 = vmatprep.subr.bf16.mxu0 0
        %1886 = vmatpush1.bf16.msra.mxu0 0
        %1887 = vmatprep.subr.bf16.mxu0 0
        %1888 = vmatpush1.bf16.msra.mxu0 0
        %1889 = vmatprep.mubr.bf16.mxu0 0
        %1890 = vmatmul.mubr.bf16.gmra.mrb[0].mxu0 %v1852
        %v1891 = vpop.f32.mrb[0].mxu0
        %v1892 = vadd.f32 %v1837, %v1891
        %v1893 = vpop.f32.mrb[0].mxu0
        %v1894 = vpop.f32.mrb[0].mxu0
        %v1895 = vadd.f32 %v1837, %v1894
        %v1896 = vpop.f32.mrb[0].mxu0
        %1897 = vmatprep.mubr.bf16.mxu0 0
        %1898 = vmatmul.mubr.bf16.gmra.mrb[0].mxu0 %v1855
        %v1899 = vpop.f32.mrb[0].mxu0
        %v1900 = vadd.f32 %v1837, %v1899
        %v1901 = vpop.f32.mrb[0].mxu0
        %v1902 = vpop.f32.mrb[0].mxu0
        %v1903 = vpop.f32.mrb[0].mxu0
        %1904 = vdwg.mxu0
        %v1905 = vmul.f32 %v1892, 0.5
        %v1906 = vmul.f32 %v1895, 0.5
        %v1907 = vmul.f32 %v1900, 0.5
        %v1908 = vmul.f32 %v1892, 0.70710677
        %v1909 = vmul.f32 %v1895, 0.70710677
        %v1910 = vmul.f32 %v1900, 0.70710677
        %v1911 = verf.f32.pop %v1908
        %v1912 = verf.f32.pop %v1909
        %v1913 = verf.f32.pop %v1910
        %v1914 = vadd.f32 %v1911, 1.0
        %v1915 = vadd.f32 %v1912, 1.0
        %v1916 = vadd.f32 %v1913, 1.0
        %v1917 = vmul.f32 %v1905, %v1914
        %v1918 = vmul.f32 %v1906, %v1915
        %v1919 = vmul.f32 %v1907, %v1916
        %v1920 = vld [vmem:[%s13] sm:$0xf]
        %v1921 = vld [vmem:[%s13 + $0x4] sm:$0xf]
        %v1922 = vld [vmem:[%s13 + $0x8] sm:$0xf]
        %v1923 = vld [vmem:[%s13 + $0xc] sm:$0xf]
        %v1924 = vld [vmem:[%s13 + $0x10] sm:$0xf]
        %v1925 = vld [vmem:[%s13 + $0x14] sm:$0xf]
        %v1926 = vld [vmem:[%s13 + $0x18] sm:$0xf]
        %v1927 = vld [vmem:[%s13 + $0x1c] sm:$0xf]
        %v1928 = vld [vmem:[%s13 + $0x20] sm:$0xf]
        %v1929 = vld [vmem:[%s13 + $0x24] sm:$0xf]
        %v1930 = vld [vmem:[%s13 + $0x28] sm:$0xf]
        %v1931 = vld [vmem:[%s13 + $0x2c] sm:$0xf]
        %v1932 = vld [vmem:[%s13 + $0x30] sm:$0xf]
        %v1933 = vld [vmem:[%s13 + $0x34] sm:$0xf]
        %v1934 = vld [vmem:[%s13 + $0x38] sm:$0xf]
        %v1935 = vld [vmem:[%s13 + $0x3c] sm:$0xf]
        %v1936 = vpack.c.bf16 %v1918, %v1917
        %v1937 = vpack.c.bf16 %v1919, %v1919
        %v1954 = vunpack.c.l.b16 %v1920
        %v1955 = vunpack.c.l.b16 %v1921
        %v1956 = vunpack.c.l.b16 %v1922
        %v1957 = vunpack.c.l.b16 %v1923
        %v1958 = vunpack.c.l.b16 %v1924
        %v1959 = vunpack.c.l.b16 %v1925
        %v1960 = vunpack.c.l.b16 %v1926
        %v1961 = vunpack.c.l.b16 %v1927
        %v1962 = vunpack.c.l.b16 %v1928
        %v1963 = vunpack.c.l.b16 %v1929
        %v1964 = vunpack.c.l.b16 %v1930
        %v1965 = vunpack.c.l.b16 %v1931
        %v1966 = vunpack.c.l.b16 %v1932
        %v1967 = vunpack.c.l.b16 %v1933
        %v1968 = vunpack.c.l.b16 %v1934
        %v1969 = vunpack.c.l.b16 %v1935
        %v1970 = vpack.c.b16 %v1955, %v1954
        %v1971 = vpack.c.b16 %v1957, %v1956
        %v1972 = vpack.c.b16 %v1959, %v1958
        %v1973 = vpack.c.b16 %v1961, %v1960
        %v1974 = vpack.c.b16 %v1963, %v1962
        %v1975 = vpack.c.b16 %v1965, %v1964
        %v1976 = vpack.c.b16 %v1967, %v1966
        %v1977 = vpack.c.b16 %v1969, %v1968
        %1986 = vmatprep.subr.bf16.mxu0 0
        %1987 = vmatpush1.bf16.msra.mxu0 %v1970
        %1988 = vmatprep.subr.bf16.mxu0 0
        %1989 = vmatpush1.bf16.msra.mxu0 %v1971
        %1990 = vmatprep.subr.bf16.mxu0 0
        %1991 = vmatpush1.bf16.msra.mxu0 %v1972
        %1992 = vmatprep.subr.bf16.mxu0 0
        %1993 = vmatpush1.bf16.msra.mxu0 %v1973
        %1994 = vmatprep.subr.bf16.mxu0 0
        %1995 = vmatpush1.bf16.msra.mxu0 %v1974
        %1996 = vmatprep.subr.bf16.mxu0 0
        %1997 = vmatpush1.bf16.msra.mxu0 %v1975
        %1998 = vmatprep.subr.bf16.mxu0 0
        %1999 = vmatpush1.bf16.msra.mxu0 %v1976
        %2000 = vmatprep.subr.bf16.mxu0 0
        %2001 = vmatpush1.bf16.msra.mxu0 %v1977
        %2002 = vmatprep.subr.bf16.mxu0 0
        %2003 = vmatpush1.bf16.msra.mxu0 0
        %2004 = vmatprep.subr.bf16.mxu0 0
        %2005 = vmatpush1.bf16.msra.mxu0 0
        %2006 = vmatprep.subr.bf16.mxu0 0
        %2007 = vmatpush1.bf16.msra.mxu0 0
        %2008 = vmatprep.subr.bf16.mxu0 0
        %2009 = vmatpush1.bf16.msra.mxu0 0
        %2010 = vmatprep.subr.bf16.mxu0 0
        %2011 = vmatpush1.bf16.msra.mxu0 0
        %2012 = vmatprep.subr.bf16.mxu0 0
        %2013 = vmatpush1.bf16.msra.mxu0 0
        %2014 = vmatprep.subr.bf16.mxu0 0
        %2015 = vmatpush1.bf16.msra.mxu0 0
        %2016 = vmatprep.subr.bf16.mxu0 0
        %2017 = vmatpush1.bf16.msra.mxu0 0
        %2018 = vmatprep.mubr.bf16.mxu0 0
        %2019 = vmatmul.mubr.bf16.gmra.mrb[0].mxu0 %v1936
        %v2020 = vpop.f32.mrb[0].mxu0
        %v2021 = vadd.f32 0.0, %v2020
        %v2022 = vpop.f32.mrb[0].mxu0
        %v2023 = vpop.f32.mrb[0].mxu0
        %v2024 = vadd.f32 0.0, %v2023
        %v2025 = vpop.f32.mrb[0].mxu0
        %2026 = vmatprep.mubr.bf16.mxu0 0
        %2027 = vmatmul.mubr.bf16.gmra.mrb[0].mxu0 %v1937
        %v2028 = vpop.f32.mrb[0].mxu0
        %v2029 = vadd.f32 0.0, %v2028
        %v2030 = vpop.f32.mrb[0].mxu0
        %v2031 = vpop.f32.mrb[0].mxu0
        %v2032 = vpop.f32.mrb[0].mxu0
        %2033 = vdwg.mxu0
        %v2034 = vadd.f32 %v1764, %v2021
        %v2035 = vadd.f32 %v1765, %v2024
        %v2036 = vadd.f32 %v1766, %v2029
        %v2037 = vld [vmem:[%s14] sm:$0x1]
        %v2039 = vlaneseq
        %v2040 = vshrl.u32 %v2039, 7
        %v2041 = vsub.s32 0, %v2040
        %v2042 = vrot.slane %v2037, %v2041
        %v2044 = vadd.f32 %v2034, %v2042
        %v2045 = vadd.f32 %v2035, %v2042
        %v2046 = vadd.f32 %v2036, %v2042
        %s2047 = scalar_lea.vmem %s3, 1
        %v2048 = vld [vmem:[%s2047] sm:$0x1]
        %s2049 = scalar_lea.vmem %s4, 1
        %v2050 = vld [vmem:[%s2049] sm:$0x1]
        %v2051 = vsel %vm690, %v2044, 0.0
        %2052 = vadd.xlane.f32.xlu0 %v2051
        %v2053 = vpop.xlane.xlu0 %2052
        %v2054 = vsel %vm690, %v2045, 0.0
        %2055 = vadd.xlane.f32.xlu0 %v2054
        %v2056 = vpop.xlane.xlu0 %2055
        %v2057 = vsel %vm697, %v2046, 0.0
        %2058 = vadd.xlane.f32.xlu0 %v2057
        %v2059 = vpop.xlane.xlu0 %2058
        %v2060 = vmul.f32 %v2053, %v701
        %v2061 = vmul.f32 %v2056, %v701
        %v2062 = vmul.f32 %v2059, %v701
        %v2063 = vsub.f32 %v2044, %v2060
        %v2064 = vsub.f32 %v2045, %v2061
        %v2065 = vsub.f32 %v2046, %v2062
        %v2066 = vmul.f32 %v2063, %v2063
        %v2067 = vmul.f32 %v2064, %v2064
        %v2068 = vmul.f32 %v2065, %v2065
        %v2069 = vsel %vm690, %v2066, 0.0
        %2070 = vadd.xlane.f32.xlu0 %v2069
        %v2071 = vpop.xlane.xlu0 %2070
        %v2072 = vsel %vm690, %v2067, 0.0
        %2073 = vadd.xlane.f32.xlu0 %v2072
        %v2074 = vpop.xlane.xlu0 %2073
        %v2075 = vsel %vm697, %v2068, 0.0
        %2076 = vadd.xlane.f32.xlu0 %v2075
        %v2077 = vpop.xlane.xlu0 %2076
        %v2078 = vmul.f32 %v2071, %v701
        %v2079 = vmul.f32 %v2074, %v701
        %v2080 = vmul.f32 %v2077, %v701
        %v2081 = vadd.f32 %v2078, 1e-06
        %v2082 = vadd.f32 %v2079, 1e-06
        %v2083 = vadd.f32 %v2080, 1e-06
        %v2084 = vrsqrt.pop %v2081
        %v2085 = vrsqrt.pop %v2082
        %v2086 = vrsqrt.pop %v2083
        %v2087 = vmul.f32 %v2063, %v2084
        %v2088 = vmul.f32 %v2064, %v2085
        %v2089 = vmul.f32 %v2065, %v2086
        %v2091 = vlaneseq
        %v2092 = vshrl.u32 %v2091, 7
        %v2093 = vsub.s32 0, %v2092
        %v2094 = vrot.slane %v2048, %v2093
        %v2096 = vmul.f32 %v2087, %v2094
        %v2097 = vmul.f32 %v2088, %v2094
        %v2098 = vmul.f32 %v2089, %v2094
        %v2100 = vlaneseq
        %v2101 = vshrl.u32 %v2100, 7
        %v2102 = vsub.s32 0, %v2101
        %v2103 = vrot.slane %v2050, %v2102
        %v2105 = vadd.f32 %v2096, %v2103
        %v2106 = vadd.f32 %v2097, %v2103
        %v2107 = vadd.f32 %v2098, %v2103
        %s2108 = scalar_lea.vmem %s5, 16
        %v2109 = vld [vmem:[%s2108] sm:$0xf]
        %v2110 = vld [vmem:[%s2108 + $0x4] sm:$0xf]
        %v2111 = vld [vmem:[%s2108 + $0x8] sm:$0xf]
        %v2112 = vld [vmem:[%s2108 + $0xc] sm:$0xf]
        %v2113 = vpack.c.bf16 %v2106, %v2105
        %v2114 = vpack.c.bf16 %v2107, %v2107
        %s2115 = scalar_lea.vmem %s6, 1
        %v2116 = vld [vmem:[%s2115] sm:$0x1]
        %v2118 = vlaneseq
        %v2119 = vshrl.u32 %v2118, 7
        %v2120 = vsub.s32 0, %v2119
        %v2121 = vrot.slane %v2116, %v2120
        %v2127 = vunpack.c.l.b16 %v2109
        %v2128 = vunpack.c.l.b16 %v2110
        %v2129 = vunpack.c.l.b16 %v2111
        %v2130 = vunpack.c.l.b16 %v2112
        %v2131 = vpack.c.b16 %v2128, %v2127
        %v2132 = vpack.c.b16 %v2130, %v2129
        %v2136 = vsel %vm690, %v2113, 0
        %v2139 = vsel %vm690, %v2114, 0
        %2141 = vmatprep.subr.bf16.mxu0 0
        %2142 = vmatpush1.bf16.msra.mxu0 %v2131
        %2143 = vmatprep.subr.bf16.mxu0 0
        %2144 = vmatpush1.bf16.msra.mxu0 %v2132
        %2145 = vmatprep.subr.bf16.mxu0 0
        %2146 = vmatpush1.bf16.msra.mxu0 0
        %2147 = vmatprep.subr.bf16.mxu0 0
        %2148 = vmatpush1.bf16.msra.mxu0 0
        %2149 = vmatprep.subr.bf16.mxu0 0
        %2150 = vmatpush1.bf16.msra.mxu0 0
        %2151 = vmatprep.subr.bf16.mxu0 0
        %2152 = vmatpush1.bf16.msra.mxu0 0
        %2153 = vmatprep.subr.bf16.mxu0 0
        %2154 = vmatpush1.bf16.msra.mxu0 0
        %2155 = vmatprep.subr.bf16.mxu0 0
        %2156 = vmatpush1.bf16.msra.mxu0 0
        %2157 = vmatprep.subr.bf16.mxu0 0
        %2158 = vmatpush1.bf16.msra.mxu0 0
        %2159 = vmatprep.subr.bf16.mxu0 0
        %2160 = vmatpush1.bf16.msra.mxu0 0
        %2161 = vmatprep.subr.bf16.mxu0 0
        %2162 = vmatpush1.bf16.msra.mxu0 0
        %2163 = vmatprep.subr.bf16.mxu0 0
        %2164 = vmatpush1.bf16.msra.mxu0 0
        %2165 = vmatprep.subr.bf16.mxu0 0
        %2166 = vmatpush1.bf16.msra.mxu0 0
        %2167 = vmatprep.subr.bf16.mxu0 0
        %2168 = vmatpush1.bf16.msra.mxu0 0
        %2169 = vmatprep.subr.bf16.mxu0 0
        %2170 = vmatpush1.bf16.msra.mxu0 0
        %2171 = vmatprep.subr.bf16.mxu0 0
        %2172 = vmatpush1.bf16.msra.mxu0 0
        %2173 = vmatprep.mubr.bf16.mxu0 0
        %2174 = vmatmul.mubr.bf16.gmra.mrb[0].mxu0 %v2136
        %v2175 = vpop.f32.mrb[0].mxu0
        %v2176 = vadd.f32 %v2121, %v2175
        %v2177 = vpop.f32.mrb[0].mxu0
        %v2178 = vpop.f32.mrb[0].mxu0
        %v2179 = vadd.f32 %v2121, %v2178
        %v2180 = vpop.f32.mrb[0].mxu0
        %2181 = vmatprep.mubr.bf16.mxu0 0
        %2182 = vmatmul.mubr.bf16.gmra.mrb[0].mxu0 %v2139
        %v2183 = vpop.f32.mrb[0].mxu0
        %v2184 = vadd.f32 %v2121, %v2183
        %v2185 = vpop.f32.mrb[0].mxu0
        %v2186 = vpop.f32.mrb[0].mxu0
        %v2187 = vpop.f32.mrb[0].mxu0
        %2188 = vdwg.mxu0
        %s2189 = scalar_lea.vmem %s7, 16
        %v2190 = vld [vmem:[%s2189] sm:$0xf]
        %v2191 = vld [vmem:[%s2189 + $0x4] sm:$0xf]
        %v2192 = vld [vmem:[%s2189 + $0x8] sm:$0xf]
        %v2193 = vld [vmem:[%s2189 + $0xc] sm:$0xf]
        %v2194 = vpack.c.bf16 %v2179, %v2176
        %v2195 = vpack.c.bf16 %v2184, %v2184
        %2198 = vrot.lane.b32.xlu0 %v2194, 96
        %v2199 = vpop.permute.xlu0 %2198
        %2200 = vrot.lane.b32.xlu0 %v2195, 96
        %v2201 = vpop.permute.xlu0 %2200
        %v2203 = vsel %vm841, %v2194, 0
        %v2206 = vsel %vm841, %v2195, 0
        %v2209 = vsel %vm841, %v2199, 0
        %v2212 = vsel %vm841, %v2201, 0
        %2214 = vmatprep.subr.bf16.mxu0 0
        %2215 = vmatpush1.bf16.xpose.msra.mxu0 %v2209
        %2216 = vmatprep.subr.bf16.mxu0 0
        %2217 = vmatpush1.bf16.xpose.msra.mxu0 %v2212
        %2218 = vmatprep.subr.bf16.mxu0 0
        %2219 = vmatpush1.bf16.xpose.msra.mxu0 0
        %2220 = vmatprep.subr.bf16.mxu0 0
        %2221 = vmatpush1.bf16.xpose.msra.mxu0 0
        %2222 = vmatprep.subr.bf16.mxu0 0
        %2223 = vmatpush1.bf16.xpose.msra.mxu0 0
        %2224 = vmatprep.subr.bf16.mxu0 0
        %2225 = vmatpush1.bf16.xpose.msra.mxu0 0
        %2226 = vmatprep.subr.bf16.mxu0 0
        %2227 = vmatpush1.bf16.xpose.msra.mxu0 0
        %2228 = vmatprep.subr.bf16.mxu0 0
        %2229 = vmatpush1.bf16.xpose.msra.mxu0 0
        %2230 = vmatprep.subr.bf16.mxu0 0
        %2231 = vmatpush1.bf16.xpose.msra.mxu0 0
        %2232 = vmatprep.subr.bf16.mxu0 0
        %2233 = vmatpush1.bf16.xpose.msra.mxu0 0
        %2234 = vmatprep.subr.bf16.mxu0 0
        %2235 = vmatpush1.bf16.xpose.msra.mxu0 0
        %2236 = vmatprep.subr.bf16.mxu0 0
        %2237 = vmatpush1.bf16.xpose.msra.mxu0 0
        %2238 = vmatprep.subr.bf16.mxu0 0
        %2239 = vmatpush1.bf16.xpose.msra.mxu0 0
        %2240 = vmatprep.subr.bf16.mxu0 0
        %2241 = vmatpush1.bf16.xpose.msra.mxu0 0
        %2242 = vmatprep.subr.bf16.mxu0 0
        %2243 = vmatpush1.bf16.xpose.msra.mxu0 0
        %2244 = vmatprep.subr.bf16.mxu0 0
        %2245 = vmatpush1.bf16.xpose.msra.mxu0 0
        %2246 = vmatprep.mubr.bf16.mxu0 0
        %2247 = vmatmul.mubr.bf16.gmra.mrb[0].mxu0 %v2203
        %v2248 = vpop.f32.mrb[0].mxu0
        %v2249 = vadd.f32 0.0, %v2248
        %v2250 = vpop.f32.mrb[0].mxu0
        %v2251 = vpop.f32.mrb[0].mxu0
        %v2252 = vadd.f32 0.0, %v2251
        %v2253 = vpop.f32.mrb[0].mxu0
        %2254 = vmatprep.mubr.bf16.mxu0 0
        %2255 = vmatmul.mubr.bf16.gmra.mrb[0].mxu0 %v2206
        %v2256 = vpop.f32.mrb[0].mxu0
        %v2257 = vadd.f32 0.0, %v2256
        %v2258 = vpop.f32.mrb[0].mxu0
        %v2259 = vpop.f32.mrb[0].mxu0
        %v2260 = vpop.f32.mrb[0].mxu0
        %2261 = vdwg.mxu0
        %v2262 = vmul.f32 %v2249, 0.35355338
        %v2263 = vmul.f32 %v2252, 0.35355338
        %v2264 = vmul.f32 %v2257, 0.35355338
        %v2265 = vsel %vm905, %v2262, -inf
        %2266 = vmax.xlane.f32.xlu0 %v2265
        %v2267 = vpop.xlane.xlu0 %2266
        %v2268 = vsel %vm905, %v2263, -inf
        %2269 = vmax.xlane.f32.xlu0 %v2268
        %v2270 = vpop.xlane.xlu0 %2269
        %v2271 = vsel %vm912, %v2264, -inf
        %2272 = vmax.xlane.f32.xlu0 %v2271
        %v2273 = vpop.xlane.xlu0 %2272
        %v2274 = vsub.f32 %v2262, %v2267
        %v2275 = vsub.f32 %v2263, %v2270
        %v2276 = vsub.f32 %v2264, %v2273
        %v2277 = vmul.f32 %v2274, 1.442695
        %v2278 = vpow.pop %v2277
        %v2279 = vmul.f32 %v2275, 1.442695
        %v2280 = vpow.pop %v2279
        %v2281 = vmul.f32 %v2276, 1.442695
        %v2282 = vpow.pop %v2281
        %v2283 = vsel %vm905, %v2278, 0.0
        %2284 = vadd.xlane.f32.xlu0 %v2283
        %v2285 = vpop.xlane.xlu0 %2284
        %v2286 = vsel %vm905, %v2280, 0.0
        %2287 = vadd.xlane.f32.xlu0 %v2286
        %v2288 = vpop.xlane.xlu0 %2287
        %v2289 = vsel %vm912, %v2282, 0.0
        %2290 = vadd.xlane.f32.xlu0 %v2289
        %v2291 = vpop.xlane.xlu0 %2290
        %v2292 = vrcp.pop %v2285
        %v2293 = vrcp.pop %v2288
        %v2294 = vrcp.pop %v2291
        %v2295 = vmul.f32 %v2278, %v2292
        %v2296 = vmul.f32 %v2280, %v2293
        %v2297 = vmul.f32 %v2282, %v2294
        %v2298 = vpack.c.bf16 %v2296, %v2295
        %v2299 = vpack.c.bf16 %v2297, %v2297
        %2300 = vrot.lane.b32.xlu0 %v2194, 64
        %v2301 = vpop.permute.xlu0 %2300
        %2302 = vrot.lane.b32.xlu0 %v2195, 64
        %v2303 = vpop.permute.xlu0 %2302
        %v2306 = vsel %vm905, %v2298, 0
        %v2309 = vsel %vm905, %v2299, 0
        %v2312 = vand.u32 %v2303, %v955
        %2314 = vmatprep.subr.bf16.mxu0 0
        %2315 = vmatpush1.bf16.msra.mxu0 %v2301
        %2316 = vmatprep.subr.bf16.mxu0 0
        %2317 = vmatpush1.bf16.msra.mxu0 %v2312
        %2318 = vmatprep.subr.bf16.mxu0 0
        %2319 = vmatpush1.bf16.msra.mxu0 0
        %2320 = vmatprep.subr.bf16.mxu0 0
        %2321 = vmatpush1.bf16.msra.mxu0 0
        %2322 = vmatprep.subr.bf16.mxu0 0
        %2323 = vmatpush1.bf16.msra.mxu0 0
        %2324 = vmatprep.subr.bf16.mxu0 0
        %2325 = vmatpush1.bf16.msra.mxu0 0
        %2326 = vmatprep.subr.bf16.mxu0 0
        %2327 = vmatpush1.bf16.msra.mxu0 0
        %2328 = vmatprep.subr.bf16.mxu0 0
        %2329 = vmatpush1.bf16.msra.mxu0 0
        %2330 = vmatprep.subr.bf16.mxu0 0
        %2331 = vmatpush1.bf16.msra.mxu0 0
        %2332 = vmatprep.subr.bf16.mxu0 0
        %2333 = vmatpush1.bf16.msra.mxu0 0
        %2334 = vmatprep.subr.bf16.mxu0 0
        %2335 = vmatpush1.bf16.msra.mxu0 0
        %2336 = vmatprep.subr.bf16.mxu0 0
        %2337 = vmatpush1.bf16.msra.mxu0 0
        %2338 = vmatprep.subr.bf16.mxu0 0
        %2339 = vmatpush1.bf16.msra.mxu0 0
        %2340 = vmatprep.subr.bf16.mxu0 0
        %2341 = vmatpush1.bf16.msra.mxu0 0
        %2342 = vmatprep.subr.bf16.mxu0 0
        %2343 = vmatpush1.bf16.msra.mxu0 0
        %2344 = vmatprep.subr.bf16.mxu0 0
        %2345 = vmatpush1.bf16.msra.mxu0 0
        %2346 = vmatprep.mubr.bf16.mxu0 0
        %2347 = vmatmul.mubr.bf16.gmra.mrb[0].mxu0 %v2306
        %v2348 = vpop.f32.mrb[0].mxu0
        %v2349 = vadd.f32 0.0, %v2348
        %v2350 = vpop.f32.mrb[0].mxu0
        %v2351 = vpop.f32.mrb[0].mxu0
        %v2352 = vadd.f32 0.0, %v2351
        %v2353 = vpop.f32.mrb[0].mxu0
        %2354 = vmatprep.mubr.bf16.mxu0 0
        %2355 = vmatmul.mubr.bf16.gmra.mrb[0].mxu0 %v2309
        %v2356 = vpop.f32.mrb[0].mxu0
        %v2357 = vadd.f32 0.0, %v2356
        %v2358 = vpop.f32.mrb[0].mxu0
        %v2359 = vpop.f32.mrb[0].mxu0
        %v2360 = vpop.f32.mrb[0].mxu0
        %2361 = vdwg.mxu0
        %v2362 = vpack.c.bf16 %v2352, %v2349
        %v2363 = vpack.c.bf16 %v2357, %v2357
        %2364 = vrot.lane.b32.xlu0 %v2194, 120
        %v2365 = vpop.permute.xlu0 %2364
        %2366 = vrot.lane.b32.xlu0 %v2195, 120
        %v2367 = vpop.permute.xlu0 %2366
        %2368 = vrot.lane.b32.xlu0 %v2194, 88
        %v2369 = vpop.permute.xlu0 %2368
        %2370 = vrot.lane.b32.xlu0 %v2195, 88
        %v2371 = vpop.permute.xlu0 %2370
        %v2373 = vsel %vm841, %v2365, 0
        %v2376 = vsel %vm841, %v2367, 0
        %v2379 = vsel %vm841, %v2369, 0
        %v2382 = vsel %vm841, %v2371, 0
        %2384 = vmatprep.subr.bf16.mxu0 0
        %2385 = vmatpush1.bf16.xpose.msra.mxu0 %v2379
        %2386 = vmatprep.subr.bf16.mxu0 0
        %2387 = vmatpush1.bf16.xpose.msra.mxu0 %v2382
        %2388 = vmatprep.subr.bf16.mxu0 0
        %2389 = vmatpush1.bf16.xpose.msra.mxu0 0
        %2390 = vmatprep.subr.bf16.mxu0 0
        %2391 = vmatpush1.bf16.xpose.msra.mxu0 0
        %2392 = vmatprep.subr.bf16.mxu0 0
        %2393 = vmatpush1.bf16.xpose.msra.mxu0 0
        %2394 = vmatprep.subr.bf16.mxu0 0
        %2395 = vmatpush1.bf16.xpose.msra.mxu0 0
        %2396 = vmatprep.subr.bf16.mxu0 0
        %2397 = vmatpush1.bf16.xpose.msra.mxu0 0
        %2398 = vmatprep.subr.bf16.mxu0 0
        %2399 = vmatpush1.bf16.xpose.msra.mxu0 0
        %2400 = vmatprep.subr.bf16.mxu0 0
        %2401 = vmatpush1.bf16.xpose.msra.mxu0 0
        %2402 = vmatprep.subr.bf16.mxu0 0
        %2403 = vmatpush1.bf16.xpose.msra.mxu0 0
        %2404 = vmatprep.subr.bf16.mxu0 0
        %2405 = vmatpush1.bf16.xpose.msra.mxu0 0
        %2406 = vmatprep.subr.bf16.mxu0 0
        %2407 = vmatpush1.bf16.xpose.msra.mxu0 0
        %2408 = vmatprep.subr.bf16.mxu0 0
        %2409 = vmatpush1.bf16.xpose.msra.mxu0 0
        %2410 = vmatprep.subr.bf16.mxu0 0
        %2411 = vmatpush1.bf16.xpose.msra.mxu0 0
        %2412 = vmatprep.subr.bf16.mxu0 0
        %2413 = vmatpush1.bf16.xpose.msra.mxu0 0
        %2414 = vmatprep.subr.bf16.mxu0 0
        %2415 = vmatpush1.bf16.xpose.msra.mxu0 0
        %2416 = vmatprep.mubr.bf16.mxu0 0
        %2417 = vmatmul.mubr.bf16.gmra.mrb[0].mxu0 %v2373
        %v2418 = vpop.f32.mrb[0].mxu0
        %v2419 = vadd.f32 0.0, %v2418
        %v2420 = vpop.f32.mrb[0].mxu0
        %v2421 = vpop.f32.mrb[0].mxu0
        %v2422 = vadd.f32 0.0, %v2421
        %v2423 = vpop.f32.mrb[0].mxu0
        %2424 = vmatprep.mubr.bf16.mxu0 0
        %2425 = vmatmul.mubr.bf16.gmra.mrb[0].mxu0 %v2376
        %v2426 = vpop.f32.mrb[0].mxu0
        %v2427 = vadd.f32 0.0, %v2426
        %v2428 = vpop.f32.mrb[0].mxu0
        %v2429 = vpop.f32.mrb[0].mxu0
        %v2430 = vpop.f32.mrb[0].mxu0
        %2431 = vdwg.mxu0
        %v2432 = vmul.f32 %v2419, 0.35355338
        %v2433 = vmul.f32 %v2422, 0.35355338
        %v2434 = vmul.f32 %v2427, 0.35355338
        %v2435 = vsel %vm905, %v2432, -inf
        %2436 = vmax.xlane.f32.xlu0 %v2435
        %v2437 = vpop.xlane.xlu0 %2436
        %v2438 = vsel %vm905, %v2433, -inf
        %2439 = vmax.xlane.f32.xlu0 %v2438
        %v2440 = vpop.xlane.xlu0 %2439
        %v2441 = vsel %vm912, %v2434, -inf
        %2442 = vmax.xlane.f32.xlu0 %v2441
        %v2443 = vpop.xlane.xlu0 %2442
        %v2444 = vsub.f32 %v2432, %v2437
        %v2445 = vsub.f32 %v2433, %v2440
        %v2446 = vsub.f32 %v2434, %v2443
        %v2447 = vmul.f32 %v2444, 1.442695
        %v2448 = vpow.pop %v2447
        %v2449 = vmul.f32 %v2445, 1.442695
        %v2450 = vpow.pop %v2449
        %v2451 = vmul.f32 %v2446, 1.442695
        %v2452 = vpow.pop %v2451
        %v2453 = vsel %vm905, %v2448, 0.0
        %2454 = vadd.xlane.f32.xlu0 %v2453
        %v2455 = vpop.xlane.xlu0 %2454
        %v2456 = vsel %vm905, %v2450, 0.0
        %2457 = vadd.xlane.f32.xlu0 %v2456
        %v2458 = vpop.xlane.xlu0 %2457
        %v2459 = vsel %vm912, %v2452, 0.0
        %2460 = vadd.xlane.f32.xlu0 %v2459
        %v2461 = vpop.xlane.xlu0 %2460
        %v2462 = vrcp.pop %v2455
        %v2463 = vrcp.pop %v2458
        %v2464 = vrcp.pop %v2461
        %v2465 = vmul.f32 %v2448, %v2462
        %v2466 = vmul.f32 %v2450, %v2463
        %v2467 = vmul.f32 %v2452, %v2464
        %v2468 = vpack.c.bf16 %v2466, %v2465
        %v2469 = vpack.c.bf16 %v2467, %v2467
        %2470 = vrot.lane.b32.xlu0 %v2194, 56
        %v2471 = vpop.permute.xlu0 %2470
        %2472 = vrot.lane.b32.xlu0 %v2195, 56
        %v2473 = vpop.permute.xlu0 %2472
        %v2476 = vsel %vm905, %v2468, 0
        %v2479 = vsel %vm905, %v2469, 0
        %v2482 = vand.u32 %v2473, %v955
        %2484 = vmatprep.subr.bf16.mxu0 0
        %2485 = vmatpush1.bf16.msra.mxu0 %v2471
        %2486 = vmatprep.subr.bf16.mxu0 0
        %2487 = vmatpush1.bf16.msra.mxu0 %v2482
        %2488 = vmatprep.subr.bf16.mxu0 0
        %2489 = vmatpush1.bf16.msra.mxu0 0
        %2490 = vmatprep.subr.bf16.mxu0 0
        %2491 = vmatpush1.bf16.msra.mxu0 0
        %2492 = vmatprep.subr.bf16.mxu0 0
        %2493 = vmatpush1.bf16.msra.mxu0 0
        %2494 = vmatprep.subr.bf16.mxu0 0
        %2495 = vmatpush1.bf16.msra.mxu0 0
        %2496 = vmatprep.subr.bf16.mxu0 0
        %2497 = vmatpush1.bf16.msra.mxu0 0
        %2498 = vmatprep.subr.bf16.mxu0 0
        %2499 = vmatpush1.bf16.msra.mxu0 0
        %2500 = vmatprep.subr.bf16.mxu0 0
        %2501 = vmatpush1.bf16.msra.mxu0 0
        %2502 = vmatprep.subr.bf16.mxu0 0
        %2503 = vmatpush1.bf16.msra.mxu0 0
        %2504 = vmatprep.subr.bf16.mxu0 0
        %2505 = vmatpush1.bf16.msra.mxu0 0
        %2506 = vmatprep.subr.bf16.mxu0 0
        %2507 = vmatpush1.bf16.msra.mxu0 0
        %2508 = vmatprep.subr.bf16.mxu0 0
        %2509 = vmatpush1.bf16.msra.mxu0 0
        %2510 = vmatprep.subr.bf16.mxu0 0
        %2511 = vmatpush1.bf16.msra.mxu0 0
        %2512 = vmatprep.subr.bf16.mxu0 0
        %2513 = vmatpush1.bf16.msra.mxu0 0
        %2514 = vmatprep.subr.bf16.mxu0 0
        %2515 = vmatpush1.bf16.msra.mxu0 0
        %2516 = vmatprep.mubr.bf16.mxu0 0
        %2517 = vmatmul.mubr.bf16.gmra.mrb[0].mxu0 %v2476
        %v2518 = vpop.f32.mrb[0].mxu0
        %v2519 = vadd.f32 0.0, %v2518
        %v2520 = vpop.f32.mrb[0].mxu0
        %v2521 = vpop.f32.mrb[0].mxu0
        %v2522 = vadd.f32 0.0, %v2521
        %v2523 = vpop.f32.mrb[0].mxu0
        %2524 = vmatprep.mubr.bf16.mxu0 0
        %2525 = vmatmul.mubr.bf16.gmra.mrb[0].mxu0 %v2479
        %v2526 = vpop.f32.mrb[0].mxu0
        %v2527 = vadd.f32 0.0, %v2526
        %v2528 = vpop.f32.mrb[0].mxu0
        %v2529 = vpop.f32.mrb[0].mxu0
        %v2530 = vpop.f32.mrb[0].mxu0
        %2531 = vdwg.mxu0
        %v2532 = vpack.c.bf16 %v2522, %v2519
        %v2533 = vpack.c.bf16 %v2527, %v2527
        %v2535 = vsel %vm841, %v2532, 0
        %v2538 = vsel %vm841, %v2533, 0
        %v2541 = vsel %vm1185, %v2191, 0
        %2543 = vmatprep.subr.bf16.mxu0 0
        %2544 = vmatpush1.bf16.msra.mxu0 %v2541
        %2545 = vmatprep.subr.bf16.mxu0 0
        %2546 = vmatpush1.bf16.msra.mxu0 0
        %2547 = vmatprep.subr.bf16.mxu0 0
        %2548 = vmatpush1.bf16.msra.mxu0 0
        %2549 = vmatprep.subr.bf16.mxu0 0
        %2550 = vmatpush1.bf16.msra.mxu0 0
        %2551 = vmatprep.subr.bf16.mxu0 0
        %2552 = vmatpush1.bf16.msra.mxu0 0
        %2553 = vmatprep.subr.bf16.mxu0 0
        %2554 = vmatpush1.bf16.msra.mxu0 0
        %2555 = vmatprep.subr.bf16.mxu0 0
        %2556 = vmatpush1.bf16.msra.mxu0 0
        %2557 = vmatprep.subr.bf16.mxu0 0
        %2558 = vmatpush1.bf16.msra.mxu0 0
        %2559 = vmatprep.subr.bf16.mxu0 0
        %2560 = vmatpush1.bf16.msra.mxu0 0
        %2561 = vmatprep.subr.bf16.mxu0 0
        %2562 = vmatpush1.bf16.msra.mxu0 0
        %2563 = vmatprep.subr.bf16.mxu0 0
        %2564 = vmatpush1.bf16.msra.mxu0 0
        %2565 = vmatprep.subr.bf16.mxu0 0
        %2566 = vmatpush1.bf16.msra.mxu0 0
        %2567 = vmatprep.subr.bf16.mxu0 0
        %2568 = vmatpush1.bf16.msra.mxu0 0
        %2569 = vmatprep.subr.bf16.mxu0 0
        %2570 = vmatpush1.bf16.msra.mxu0 0
        %2571 = vmatprep.subr.bf16.mxu0 0
        %2572 = vmatpush1.bf16.msra.mxu0 0
        %2573 = vmatprep.subr.bf16.mxu0 0
        %2574 = vmatpush1.bf16.msra.mxu0 0
        %2575 = vmatprep.mubr.bf16.mxu0 0
        %2576 = vmatmul.mubr.bf16.gmra.mrb[0].mxu0 %v2535
        %v2577 = vpop.f32.mrb[0].mxu0
        %v2578 = vadd.f32 0.0, %v2577
        %v2579 = vpop.f32.mrb[0].mxu0
        %v2580 = vpop.f32.mrb[0].mxu0
        %v2581 = vadd.f32 0.0, %v2580
        %v2582 = vpop.f32.mrb[0].mxu0
        %2583 = vmatprep.mubr.bf16.mxu0 0
        %2584 = vmatmul.mubr.bf16.gmra.mrb[0].mxu0 %v2538
        %v2585 = vpop.f32.mrb[0].mxu0
        %v2586 = vadd.f32 0.0, %v2585
        %v2587 = vpop.f32.mrb[0].mxu0
        %v2588 = vpop.f32.mrb[0].mxu0
        %v2589 = vpop.f32.mrb[0].mxu0
        %2590 = vdwg.mxu0
        %v2592 = vsel %vm841, %v2362, 0
        %v2595 = vsel %vm841, %v2363, 0
        %v2598 = vsel %vm1185, %v2190, 0
        %2600 = vmatprep.subr.bf16.mxu0 0
        %2601 = vmatpush1.bf16.msra.mxu0 %v2598
        %2602 = vmatprep.subr.bf16.mxu0 0
        %2603 = vmatpush1.bf16.msra.mxu0 0
        %2604 = vmatprep.subr.bf16.mxu0 0
        %2605 = vmatpush1.bf16.msra.mxu0 0
        %2606 = vmatprep.subr.bf16.mxu0 0
        %2607 = vmatpush1.bf16.msra.mxu0 0
        %2608 = vmatprep.subr.bf16.mxu0 0
        %2609 = vmatpush1.bf16.msra.mxu0 0
        %2610 = vmatprep.subr.bf16.mxu0 0
        %2611 = vmatpush1.bf16.msra.mxu0 0
        %2612 = vmatprep.subr.bf16.mxu0 0
        %2613 = vmatpush1.bf16.msra.mxu0 0
        %2614 = vmatprep.subr.bf16.mxu0 0
        %2615 = vmatpush1.bf16.msra.mxu0 0
        %2616 = vmatprep.subr.bf16.mxu0 0
        %2617 = vmatpush1.bf16.msra.mxu0 0
        %2618 = vmatprep.subr.bf16.mxu0 0
        %2619 = vmatpush1.bf16.msra.mxu0 0
        %2620 = vmatprep.subr.bf16.mxu0 0
        %2621 = vmatpush1.bf16.msra.mxu0 0
        %2622 = vmatprep.subr.bf16.mxu0 0
        %2623 = vmatpush1.bf16.msra.mxu0 0
        %2624 = vmatprep.subr.bf16.mxu0 0
        %2625 = vmatpush1.bf16.msra.mxu0 0
        %2626 = vmatprep.subr.bf16.mxu0 0
        %2627 = vmatpush1.bf16.msra.mxu0 0
        %2628 = vmatprep.subr.bf16.mxu0 0
        %2629 = vmatpush1.bf16.msra.mxu0 0
        %2630 = vmatprep.subr.bf16.mxu0 0
        %2631 = vmatpush1.bf16.msra.mxu0 0
        %2632 = vmatprep.mubr.bf16.mxu0 0
        %2633 = vmatmul.mubr.bf16.gmra.mrb[0].mxu0 %v2592
        %v2634 = vpop.f32.mrb[0].mxu0
        %v2635 = vadd.f32 %v2578, %v2634
        %v2636 = vpop.f32.mrb[0].mxu0
        %v2637 = vpop.f32.mrb[0].mxu0
        %v2638 = vadd.f32 %v2581, %v2637
        %v2639 = vpop.f32.mrb[0].mxu0
        %2640 = vmatprep.mubr.bf16.mxu0 0
        %2641 = vmatmul.mubr.bf16.gmra.mrb[0].mxu0 %v2595
        %v2642 = vpop.f32.mrb[0].mxu0
        %v2643 = vadd.f32 %v2586, %v2642
        %v2644 = vpop.f32.mrb[0].mxu0
        %v2645 = vpop.f32.mrb[0].mxu0
        %v2646 = vpop.f32.mrb[0].mxu0
        %2647 = vdwg.mxu0
        %2648 = vrot.lane.b32.xlu0 %v2194, 112
        %v2649 = vpop.permute.xlu0 %2648
        %2650 = vrot.lane.b32.xlu0 %v2195, 112
        %v2651 = vpop.permute.xlu0 %2650
        %2652 = vrot.lane.b32.xlu0 %v2194, 80
        %v2653 = vpop.permute.xlu0 %2652
        %2654 = vrot.lane.b32.xlu0 %v2195, 80
        %v2655 = vpop.permute.xlu0 %2654
        %v2657 = vsel %vm841, %v2649, 0
        %v2660 = vsel %vm841, %v2651, 0
        %v2663 = vsel %vm841, %v2653, 0
        %v2666 = vsel %vm841, %v2655, 0
        %2668 = vmatprep.subr.bf16.mxu0 0
        %2669 = vmatpush1.bf16.xpose.msra.mxu0 %v2663
        %2670 = vmatprep.subr.bf16.mxu0 0
        %2671 = vmatpush1.bf16.xpose.msra.mxu0 %v2666
        %2672 = vmatprep.subr.bf16.mxu0 0
        %2673 = vmatpush1.bf16.xpose.msra.mxu0 0
        %2674 = vmatprep.subr.bf16.mxu0 0
        %2675 = vmatpush1.bf16.xpose.msra.mxu0 0
        %2676 = vmatprep.subr.bf16.mxu0 0
        %2677 = vmatpush1.bf16.xpose.msra.mxu0 0
        %2678 = vmatprep.subr.bf16.mxu0 0
        %2679 = vmatpush1.bf16.xpose.msra.mxu0 0
        %2680 = vmatprep.subr.bf16.mxu0 0
        %2681 = vmatpush1.bf16.xpose.msra.mxu0 0
        %2682 = vmatprep.subr.bf16.mxu0 0
        %2683 = vmatpush1.bf16.xpose.msra.mxu0 0
        %2684 = vmatprep.subr.bf16.mxu0 0
        %2685 = vmatpush1.bf16.xpose.msra.mxu0 0
        %2686 = vmatprep.subr.bf16.mxu0 0
        %2687 = vmatpush1.bf16.xpose.msra.mxu0 0
        %2688 = vmatprep.subr.bf16.mxu0 0
        %2689 = vmatpush1.bf16.xpose.msra.mxu0 0
        %2690 = vmatprep.subr.bf16.mxu0 0
        %2691 = vmatpush1.bf16.xpose.msra.mxu0 0
        %2692 = vmatprep.subr.bf16.mxu0 0
        %2693 = vmatpush1.bf16.xpose.msra.mxu0 0
        %2694 = vmatprep.subr.bf16.mxu0 0
        %2695 = vmatpush1.bf16.xpose.msra.mxu0 0
        %2696 = vmatprep.subr.bf16.mxu0 0
        %2697 = vmatpush1.bf16.xpose.msra.mxu0 0
        %2698 = vmatprep.subr.bf16.mxu0 0
        %2699 = vmatpush1.bf16.xpose.msra.mxu0 0
        %2700 = vmatprep.mubr.bf16.mxu0 0
        %2701 = vmatmul.mubr.bf16.gmra.mrb[0].mxu0 %v2657
        %v2702 = vpop.f32.mrb[0].mxu0
        %v2703 = vadd.f32 0.0, %v2702
        %v2704 = vpop.f32.mrb[0].mxu0
        %v2705 = vpop.f32.mrb[0].mxu0
        %v2706 = vadd.f32 0.0, %v2705
        %v2707 = vpop.f32.mrb[0].mxu0
        %2708 = vmatprep.mubr.bf16.mxu0 0
        %2709 = vmatmul.mubr.bf16.gmra.mrb[0].mxu0 %v2660
        %v2710 = vpop.f32.mrb[0].mxu0
        %v2711 = vadd.f32 0.0, %v2710
        %v2712 = vpop.f32.mrb[0].mxu0
        %v2713 = vpop.f32.mrb[0].mxu0
        %v2714 = vpop.f32.mrb[0].mxu0
        %2715 = vdwg.mxu0
        %v2716 = vmul.f32 %v2703, 0.35355338
        %v2717 = vmul.f32 %v2706, 0.35355338
        %v2718 = vmul.f32 %v2711, 0.35355338
        %v2719 = vsel %vm905, %v2716, -inf
        %2720 = vmax.xlane.f32.xlu0 %v2719
        %v2721 = vpop.xlane.xlu0 %2720
        %v2722 = vsel %vm905, %v2717, -inf
        %2723 = vmax.xlane.f32.xlu0 %v2722
        %v2724 = vpop.xlane.xlu0 %2723
        %v2725 = vsel %vm912, %v2718, -inf
        %2726 = vmax.xlane.f32.xlu0 %v2725
        %v2727 = vpop.xlane.xlu0 %2726
        %v2728 = vsub.f32 %v2716, %v2721
        %v2729 = vsub.f32 %v2717, %v2724
        %v2730 = vsub.f32 %v2718, %v2727
        %v2731 = vmul.f32 %v2728, 1.442695
        %v2732 = vpow.pop %v2731
        %v2733 = vmul.f32 %v2729, 1.442695
        %v2734 = vpow.pop %v2733
        %v2735 = vmul.f32 %v2730, 1.442695
        %v2736 = vpow.pop %v2735
        %v2737 = vsel %vm905, %v2732, 0.0
        %2738 = vadd.xlane.f32.xlu0 %v2737
        %v2739 = vpop.xlane.xlu0 %2738
        %v2740 = vsel %vm905, %v2734, 0.0
        %2741 = vadd.xlane.f32.xlu0 %v2740
        %v2742 = vpop.xlane.xlu0 %2741
        %v2743 = vsel %vm912, %v2736, 0.0
        %2744 = vadd.xlane.f32.xlu0 %v2743
        %v2745 = vpop.xlane.xlu0 %2744
        %v2746 = vrcp.pop %v2739
        %v2747 = vrcp.pop %v2742
        %v2748 = vrcp.pop %v2745
        %v2749 = vmul.f32 %v2732, %v2746
        %v2750 = vmul.f32 %v2734, %v2747
        %v2751 = vmul.f32 %v2736, %v2748
        %v2752 = vpack.c.bf16 %v2750, %v2749
        %v2753 = vpack.c.bf16 %v2751, %v2751
        %2754 = vrot.lane.b32.xlu0 %v2194, 48
        %v2755 = vpop.permute.xlu0 %2754
        %2756 = vrot.lane.b32.xlu0 %v2195, 48
        %v2757 = vpop.permute.xlu0 %2756
        %v2760 = vsel %vm905, %v2752, 0
        %v2763 = vsel %vm905, %v2753, 0
        %v2766 = vand.u32 %v2757, %v955
        %2768 = vmatprep.subr.bf16.mxu0 0
        %2769 = vmatpush1.bf16.msra.mxu0 %v2755
        %2770 = vmatprep.subr.bf16.mxu0 0
        %2771 = vmatpush1.bf16.msra.mxu0 %v2766
        %2772 = vmatprep.subr.bf16.mxu0 0
        %2773 = vmatpush1.bf16.msra.mxu0 0
        %2774 = vmatprep.subr.bf16.mxu0 0
        %2775 = vmatpush1.bf16.msra.mxu0 0
        %2776 = vmatprep.subr.bf16.mxu0 0
        %2777 = vmatpush1.bf16.msra.mxu0 0
        %2778 = vmatprep.subr.bf16.mxu0 0
        %2779 = vmatpush1.bf16.msra.mxu0 0
        %2780 = vmatprep.subr.bf16.mxu0 0
        %2781 = vmatpush1.bf16.msra.mxu0 0
        %2782 = vmatprep.subr.bf16.mxu0 0
        %2783 = vmatpush1.bf16.msra.mxu0 0
        %2784 = vmatprep.subr.bf16.mxu0 0
        %2785 = vmatpush1.bf16.msra.mxu0 0
        %2786 = vmatprep.subr.bf16.mxu0 0
        %2787 = vmatpush1.bf16.msra.mxu0 0
        %2788 = vmatprep.subr.bf16.mxu0 0
        %2789 = vmatpush1.bf16.msra.mxu0 0
        %2790 = vmatprep.subr.bf16.mxu0 0
        %2791 = vmatpush1.bf16.msra.mxu0 0
        %2792 = vmatprep.subr.bf16.mxu0 0
        %2793 = vmatpush1.bf16.msra.mxu0 0
        %2794 = vmatprep.subr.bf16.mxu0 0
        %2795 = vmatpush1.bf16.msra.mxu0 0
        %2796 = vmatprep.subr.bf16.mxu0 0
        %2797 = vmatpush1.bf16.msra.mxu0 0
        %2798 = vmatprep.subr.bf16.mxu0 0
        %2799 = vmatpush1.bf16.msra.mxu0 0
        %2800 = vmatprep.mubr.bf16.mxu0 0
        %2801 = vmatmul.mubr.bf16.gmra.mrb[0].mxu0 %v2760
        %v2802 = vpop.f32.mrb[0].mxu0
        %v2803 = vadd.f32 0.0, %v2802
        %v2804 = vpop.f32.mrb[0].mxu0
        %v2805 = vpop.f32.mrb[0].mxu0
        %v2806 = vadd.f32 0.0, %v2805
        %v2807 = vpop.f32.mrb[0].mxu0
        %2808 = vmatprep.mubr.bf16.mxu0 0
        %2809 = vmatmul.mubr.bf16.gmra.mrb[0].mxu0 %v2763
        %v2810 = vpop.f32.mrb[0].mxu0
        %v2811 = vadd.f32 0.0, %v2810
        %v2812 = vpop.f32.mrb[0].mxu0
        %v2813 = vpop.f32.mrb[0].mxu0
        %v2814 = vpop.f32.mrb[0].mxu0
        %2815 = vdwg.mxu0
        %v2816 = vpack.c.bf16 %v2806, %v2803
        %v2817 = vpack.c.bf16 %v2811, %v2811
        %v2819 = vsel %vm841, %v2816, 0
        %v2822 = vsel %vm841, %v2817, 0
        %v2825 = vsel %vm1185, %v2192, 0
        %2827 = vmatprep.subr.bf16.mxu0 0
        %2828 = vmatpush1.bf16.msra.mxu0 %v2825
        %2829 = vmatprep.subr.bf16.mxu0 0
        %2830 = vmatpush1.bf16.msra.mxu0 0
        %2831 = vmatprep.subr.bf16.mxu0 0
        %2832 = vmatpush1.bf16.msra.mxu0 0
        %2833 = vmatprep.subr.bf16.mxu0 0
        %2834 = vmatpush1.bf16.msra.mxu0 0
        %2835 = vmatprep.subr.bf16.mxu0 0
        %2836 = vmatpush1.bf16.msra.mxu0 0
        %2837 = vmatprep.subr.bf16.mxu0 0
        %2838 = vmatpush1.bf16.msra.mxu0 0
        %2839 = vmatprep.subr.bf16.mxu0 0
        %2840 = vmatpush1.bf16.msra.mxu0 0
        %2841 = vmatprep.subr.bf16.mxu0 0
        %2842 = vmatpush1.bf16.msra.mxu0 0
        %2843 = vmatprep.subr.bf16.mxu0 0
        %2844 = vmatpush1.bf16.msra.mxu0 0
        %2845 = vmatprep.subr.bf16.mxu0 0
        %2846 = vmatpush1.bf16.msra.mxu0 0
        %2847 = vmatprep.subr.bf16.mxu0 0
        %2848 = vmatpush1.bf16.msra.mxu0 0
        %2849 = vmatprep.subr.bf16.mxu0 0
        %2850 = vmatpush1.bf16.msra.mxu0 0
        %2851 = vmatprep.subr.bf16.mxu0 0
        %2852 = vmatpush1.bf16.msra.mxu0 0
        %2853 = vmatprep.subr.bf16.mxu0 0
        %2854 = vmatpush1.bf16.msra.mxu0 0
        %2855 = vmatprep.subr.bf16.mxu0 0
        %2856 = vmatpush1.bf16.msra.mxu0 0
        %2857 = vmatprep.subr.bf16.mxu0 0
        %2858 = vmatpush1.bf16.msra.mxu0 0
        %2859 = vmatprep.mubr.bf16.mxu0 0
        %2860 = vmatmul.mubr.bf16.gmra.mrb[0].mxu0 %v2819
        %v2861 = vpop.f32.mrb[0].mxu0
        %v2862 = vadd.f32 0.0, %v2861
        %v2863 = vpop.f32.mrb[0].mxu0
        %v2864 = vpop.f32.mrb[0].mxu0
        %v2865 = vadd.f32 0.0, %v2864
        %v2866 = vpop.f32.mrb[0].mxu0
        %2867 = vmatprep.mubr.bf16.mxu0 0
        %2868 = vmatmul.mubr.bf16.gmra.mrb[0].mxu0 %v2822
        %v2869 = vpop.f32.mrb[0].mxu0
        %v2870 = vadd.f32 0.0, %v2869
        %v2871 = vpop.f32.mrb[0].mxu0
        %v2872 = vpop.f32.mrb[0].mxu0
        %v2873 = vpop.f32.mrb[0].mxu0
        %2874 = vdwg.mxu0
        %v2875 = vadd.f32 %v2635, %v2862
        %v2876 = vadd.f32 %v2638, %v2865
        %v2877 = vadd.f32 %v2643, %v2870
        %2878 = vrot.lane.b32.xlu0 %v2194, 104
        %v2879 = vpop.permute.xlu0 %2878
        %2880 = vrot.lane.b32.xlu0 %v2195, 104
        %v2881 = vpop.permute.xlu0 %2880
        %2882 = vrot.lane.b32.xlu0 %v2194, 72
        %v2883 = vpop.permute.xlu0 %2882
        %2884 = vrot.lane.b32.xlu0 %v2195, 72
        %v2885 = vpop.permute.xlu0 %2884
        %v2887 = vsel %vm841, %v2879, 0
        %v2890 = vsel %vm841, %v2881, 0
        %v2893 = vsel %vm841, %v2883, 0
        %v2896 = vsel %vm841, %v2885, 0
        %2898 = vmatprep.subr.bf16.mxu0 0
        %2899 = vmatpush1.bf16.xpose.msra.mxu0 %v2893
        %2900 = vmatprep.subr.bf16.mxu0 0
        %2901 = vmatpush1.bf16.xpose.msra.mxu0 %v2896
        %2902 = vmatprep.subr.bf16.mxu0 0
        %2903 = vmatpush1.bf16.xpose.msra.mxu0 0
        %2904 = vmatprep.subr.bf16.mxu0 0
        %2905 = vmatpush1.bf16.xpose.msra.mxu0 0
        %2906 = vmatprep.subr.bf16.mxu0 0
        %2907 = vmatpush1.bf16.xpose.msra.mxu0 0
        %2908 = vmatprep.subr.bf16.mxu0 0
        %2909 = vmatpush1.bf16.xpose.msra.mxu0 0
        %2910 = vmatprep.subr.bf16.mxu0 0
        %2911 = vmatpush1.bf16.xpose.msra.mxu0 0
        %2912 = vmatprep.subr.bf16.mxu0 0
        %2913 = vmatpush1.bf16.xpose.msra.mxu0 0
        %2914 = vmatprep.subr.bf16.mxu0 0
        %2915 = vmatpush1.bf16.xpose.msra.mxu0 0
        %2916 = vmatprep.subr.bf16.mxu0 0
        %2917 = vmatpush1.bf16.xpose.msra.mxu0 0
        %2918 = vmatprep.subr.bf16.mxu0 0
        %2919 = vmatpush1.bf16.xpose.msra.mxu0 0
        %2920 = vmatprep.subr.bf16.mxu0 0
        %2921 = vmatpush1.bf16.xpose.msra.mxu0 0
        %2922 = vmatprep.subr.bf16.mxu0 0
        %2923 = vmatpush1.bf16.xpose.msra.mxu0 0
        %2924 = vmatprep.subr.bf16.mxu0 0
        %2925 = vmatpush1.bf16.xpose.msra.mxu0 0
        %2926 = vmatprep.subr.bf16.mxu0 0
        %2927 = vmatpush1.bf16.xpose.msra.mxu0 0
        %2928 = vmatprep.subr.bf16.mxu0 0
        %2929 = vmatpush1.bf16.xpose.msra.mxu0 0
        %2930 = vmatprep.mubr.bf16.mxu0 0
        %2931 = vmatmul.mubr.bf16.gmra.mrb[0].mxu0 %v2887
        %v2932 = vpop.f32.mrb[0].mxu0
        %v2933 = vadd.f32 0.0, %v2932
        %v2934 = vpop.f32.mrb[0].mxu0
        %v2935 = vpop.f32.mrb[0].mxu0
        %v2936 = vadd.f32 0.0, %v2935
        %v2937 = vpop.f32.mrb[0].mxu0
        %2938 = vmatprep.mubr.bf16.mxu0 0
        %2939 = vmatmul.mubr.bf16.gmra.mrb[0].mxu0 %v2890
        %v2940 = vpop.f32.mrb[0].mxu0
        %v2941 = vadd.f32 0.0, %v2940
        %v2942 = vpop.f32.mrb[0].mxu0
        %v2943 = vpop.f32.mrb[0].mxu0
        %v2944 = vpop.f32.mrb[0].mxu0
        %2945 = vdwg.mxu0
        %v2946 = vmul.f32 %v2933, 0.35355338
        %v2947 = vmul.f32 %v2936, 0.35355338
        %v2948 = vmul.f32 %v2941, 0.35355338
        %v2949 = vsel %vm905, %v2946, -inf
        %2950 = vmax.xlane.f32.xlu0 %v2949
        %v2951 = vpop.xlane.xlu0 %2950
        %v2952 = vsel %vm905, %v2947, -inf
        %2953 = vmax.xlane.f32.xlu0 %v2952
        %v2954 = vpop.xlane.xlu0 %2953
        %v2955 = vsel %vm912, %v2948, -inf
        %2956 = vmax.xlane.f32.xlu0 %v2955
        %v2957 = vpop.xlane.xlu0 %2956
        %v2958 = vsub.f32 %v2946, %v2951
        %v2959 = vsub.f32 %v2947, %v2954
        %v2960 = vsub.f32 %v2948, %v2957
        %v2961 = vmul.f32 %v2958, 1.442695
        %v2962 = vpow.pop %v2961
        %v2963 = vmul.f32 %v2959, 1.442695
        %v2964 = vpow.pop %v2963
        %v2965 = vmul.f32 %v2960, 1.442695
        %v2966 = vpow.pop %v2965
        %v2967 = vsel %vm905, %v2962, 0.0
        %2968 = vadd.xlane.f32.xlu0 %v2967
        %v2969 = vpop.xlane.xlu0 %2968
        %v2970 = vsel %vm905, %v2964, 0.0
        %2971 = vadd.xlane.f32.xlu0 %v2970
        %v2972 = vpop.xlane.xlu0 %2971
        %v2973 = vsel %vm912, %v2966, 0.0
        %2974 = vadd.xlane.f32.xlu0 %v2973
        %v2975 = vpop.xlane.xlu0 %2974
        %v2976 = vrcp.pop %v2969
        %v2977 = vrcp.pop %v2972
        %v2978 = vrcp.pop %v2975
        %v2979 = vmul.f32 %v2962, %v2976
        %v2980 = vmul.f32 %v2964, %v2977
        %v2981 = vmul.f32 %v2966, %v2978
        %v2982 = vpack.c.bf16 %v2980, %v2979
        %v2983 = vpack.c.bf16 %v2981, %v2981
        %2984 = vrot.lane.b32.xlu0 %v2194, 40
        %v2985 = vpop.permute.xlu0 %2984
        %2986 = vrot.lane.b32.xlu0 %v2195, 40
        %v2987 = vpop.permute.xlu0 %2986
        %v2990 = vsel %vm905, %v2982, 0
        %v2993 = vsel %vm905, %v2983, 0
        %v2996 = vand.u32 %v2987, %v955
        %2998 = vmatprep.subr.bf16.mxu0 0
        %2999 = vmatpush1.bf16.msra.mxu0 %v2985
        %3000 = vmatprep.subr.bf16.mxu0 0
        %3001 = vmatpush1.bf16.msra.mxu0 %v2996
        %3002 = vmatprep.subr.bf16.mxu0 0
        %3003 = vmatpush1.bf16.msra.mxu0 0
        %3004 = vmatprep.subr.bf16.mxu0 0
        %3005 = vmatpush1.bf16.msra.mxu0 0
        %3006 = vmatprep.subr.bf16.mxu0 0
        %3007 = vmatpush1.bf16.msra.mxu0 0
        %3008 = vmatprep.subr.bf16.mxu0 0
        %3009 = vmatpush1.bf16.msra.mxu0 0
        %3010 = vmatprep.subr.bf16.mxu0 0
        %3011 = vmatpush1.bf16.msra.mxu0 0
        %3012 = vmatprep.subr.bf16.mxu0 0
        %3013 = vmatpush1.bf16.msra.mxu0 0
        %3014 = vmatprep.subr.bf16.mxu0 0
        %3015 = vmatpush1.bf16.msra.mxu0 0
        %3016 = vmatprep.subr.bf16.mxu0 0
        %3017 = vmatpush1.bf16.msra.mxu0 0
        %3018 = vmatprep.subr.bf16.mxu0 0
        %3019 = vmatpush1.bf16.msra.mxu0 0
        %3020 = vmatprep.subr.bf16.mxu0 0
        %3021 = vmatpush1.bf16.msra.mxu0 0
        %3022 = vmatprep.subr.bf16.mxu0 0
        %3023 = vmatpush1.bf16.msra.mxu0 0
        %3024 = vmatprep.subr.bf16.mxu0 0
        %3025 = vmatpush1.bf16.msra.mxu0 0
        %3026 = vmatprep.subr.bf16.mxu0 0
        %3027 = vmatpush1.bf16.msra.mxu0 0
        %3028 = vmatprep.subr.bf16.mxu0 0
        %3029 = vmatpush1.bf16.msra.mxu0 0
        %3030 = vmatprep.mubr.bf16.mxu0 0
        %3031 = vmatmul.mubr.bf16.gmra.mrb[0].mxu0 %v2990
        %v3032 = vpop.f32.mrb[0].mxu0
        %v3033 = vadd.f32 0.0, %v3032
        %v3034 = vpop.f32.mrb[0].mxu0
        %v3035 = vpop.f32.mrb[0].mxu0
        %v3036 = vadd.f32 0.0, %v3035
        %v3037 = vpop.f32.mrb[0].mxu0
        %3038 = vmatprep.mubr.bf16.mxu0 0
        %3039 = vmatmul.mubr.bf16.gmra.mrb[0].mxu0 %v2993
        %v3040 = vpop.f32.mrb[0].mxu0
        %v3041 = vadd.f32 0.0, %v3040
        %v3042 = vpop.f32.mrb[0].mxu0
        %v3043 = vpop.f32.mrb[0].mxu0
        %v3044 = vpop.f32.mrb[0].mxu0
        %3045 = vdwg.mxu0
        %v3046 = vpack.c.bf16 %v3036, %v3033
        %v3047 = vpack.c.bf16 %v3041, %v3041
        %v3049 = vsel %vm841, %v3046, 0
        %v3052 = vsel %vm841, %v3047, 0
        %v3055 = vsel %vm1185, %v2193, 0
        %3057 = vmatprep.subr.bf16.mxu0 0
        %3058 = vmatpush1.bf16.msra.mxu0 %v3055
        %3059 = vmatprep.subr.bf16.mxu0 0
        %3060 = vmatpush1.bf16.msra.mxu0 0
        %3061 = vmatprep.subr.bf16.mxu0 0
        %3062 = vmatpush1.bf16.msra.mxu0 0
        %3063 = vmatprep.subr.bf16.mxu0 0
        %3064 = vmatpush1.bf16.msra.mxu0 0
        %3065 = vmatprep.subr.bf16.mxu0 0
        %3066 = vmatpush1.bf16.msra.mxu0 0
        %3067 = vmatprep.subr.bf16.mxu0 0
        %3068 = vmatpush1.bf16.msra.mxu0 0
        %3069 = vmatprep.subr.bf16.mxu0 0
        %3070 = vmatpush1.bf16.msra.mxu0 0
        %3071 = vmatprep.subr.bf16.mxu0 0
        %3072 = vmatpush1.bf16.msra.mxu0 0
        %3073 = vmatprep.subr.bf16.mxu0 0
        %3074 = vmatpush1.bf16.msra.mxu0 0
        %3075 = vmatprep.subr.bf16.mxu0 0
        %3076 = vmatpush1.bf16.msra.mxu0 0
        %3077 = vmatprep.subr.bf16.mxu0 0
        %3078 = vmatpush1.bf16.msra.mxu0 0
        %3079 = vmatprep.subr.bf16.mxu0 0
        %3080 = vmatpush1.bf16.msra.mxu0 0
        %3081 = vmatprep.subr.bf16.mxu0 0
        %3082 = vmatpush1.bf16.msra.mxu0 0
        %3083 = vmatprep.subr.bf16.mxu0 0
        %3084 = vmatpush1.bf16.msra.mxu0 0
        %3085 = vmatprep.subr.bf16.mxu0 0
        %3086 = vmatpush1.bf16.msra.mxu0 0
        %3087 = vmatprep.subr.bf16.mxu0 0
        %3088 = vmatpush1.bf16.msra.mxu0 0
        %3089 = vmatprep.mubr.bf16.mxu0 0
        %3090 = vmatmul.mubr.bf16.gmra.mrb[0].mxu0 %v3049
        %v3091 = vpop.f32.mrb[0].mxu0
        %v3092 = vadd.f32 0.0, %v3091
        %v3093 = vpop.f32.mrb[0].mxu0
        %v3094 = vpop.f32.mrb[0].mxu0
        %v3095 = vadd.f32 0.0, %v3094
        %v3096 = vpop.f32.mrb[0].mxu0
        %3097 = vmatprep.mubr.bf16.mxu0 0
        %3098 = vmatmul.mubr.bf16.gmra.mrb[0].mxu0 %v3052
        %v3099 = vpop.f32.mrb[0].mxu0
        %v3100 = vadd.f32 0.0, %v3099
        %v3101 = vpop.f32.mrb[0].mxu0
        %v3102 = vpop.f32.mrb[0].mxu0
        %v3103 = vpop.f32.mrb[0].mxu0
        %3104 = vdwg.mxu0
        %v3105 = vadd.f32 %v2875, %v3092
        %v3106 = vadd.f32 %v2876, %v3095
        %v3107 = vadd.f32 %v2877, %v3100
        %v3108 = vadd.f32 %v2044, %v3105
        %v3109 = vadd.f32 %v2045, %v3106
        %v3110 = vadd.f32 %v2046, %v3107
        %s3111 = scalar_lea.vmem %s8, 1
        %v3112 = vld [vmem:[%s3111] sm:$0x1]
        %v3114 = vlaneseq
        %v3115 = vshrl.u32 %v3114, 7
        %v3116 = vsub.s32 0, %v3115
        %v3117 = vrot.slane %v3112, %v3116
        %v3119 = vadd.f32 %v3108, %v3117
        %v3120 = vadd.f32 %v3109, %v3117
        %v3121 = vadd.f32 %v3110, %v3117
        %s3122 = scalar_lea.vmem %s9, 1
        %v3123 = vld [vmem:[%s3122] sm:$0x1]
        %s3124 = scalar_lea.vmem %s10, 1
        %v3125 = vld [vmem:[%s3124] sm:$0x1]
        %v3126 = vsel %vm690, %v3119, 0.0
        %3127 = vadd.xlane.f32.xlu0 %v3126
        %v3128 = vpop.xlane.xlu0 %3127
        %v3129 = vsel %vm690, %v3120, 0.0
        %3130 = vadd.xlane.f32.xlu0 %v3129
        %v3131 = vpop.xlane.xlu0 %3130
        %v3132 = vsel %vm697, %v3121, 0.0
        %3133 = vadd.xlane.f32.xlu0 %v3132
        %v3134 = vpop.xlane.xlu0 %3133
        %v3135 = vmul.f32 %v3128, %v701
        %v3136 = vmul.f32 %v3131, %v701
        %v3137 = vmul.f32 %v3134, %v701
        %v3138 = vsub.f32 %v3119, %v3135
        %v3139 = vsub.f32 %v3120, %v3136
        %v3140 = vsub.f32 %v3121, %v3137
        %v3141 = vmul.f32 %v3138, %v3138
        %v3142 = vmul.f32 %v3139, %v3139
        %v3143 = vmul.f32 %v3140, %v3140
        %v3144 = vsel %vm690, %v3141, 0.0
        %3145 = vadd.xlane.f32.xlu0 %v3144
        %v3146 = vpop.xlane.xlu0 %3145
        %v3147 = vsel %vm690, %v3142, 0.0
        %3148 = vadd.xlane.f32.xlu0 %v3147
        %v3149 = vpop.xlane.xlu0 %3148
        %v3150 = vsel %vm697, %v3143, 0.0
        %3151 = vadd.xlane.f32.xlu0 %v3150
        %v3152 = vpop.xlane.xlu0 %3151
        %v3153 = vmul.f32 %v3146, %v701
        %v3154 = vmul.f32 %v3149, %v701
        %v3155 = vmul.f32 %v3152, %v701
        %v3156 = vadd.f32 %v3153, 1e-06
        %v3157 = vadd.f32 %v3154, 1e-06
        %v3158 = vadd.f32 %v3155, 1e-06
        %v3159 = vrsqrt.pop %v3156
        %v3160 = vrsqrt.pop %v3157
        %v3161 = vrsqrt.pop %v3158
        %v3162 = vmul.f32 %v3138, %v3159
        %v3163 = vmul.f32 %v3139, %v3160
        %v3164 = vmul.f32 %v3140, %v3161
        %v3166 = vlaneseq
        %v3167 = vshrl.u32 %v3166, 7
        %v3168 = vsub.s32 0, %v3167
        %v3169 = vrot.slane %v3123, %v3168
        %v3171 = vmul.f32 %v3162, %v3169
        %v3172 = vmul.f32 %v3163, %v3169
        %v3173 = vmul.f32 %v3164, %v3169
        %v3175 = vlaneseq
        %v3176 = vshrl.u32 %v3175, 7
        %v3177 = vsub.s32 0, %v3176
        %v3178 = vrot.slane %v3125, %v3177
        %v3180 = vadd.f32 %v3171, %v3178
        %v3181 = vadd.f32 %v3172, %v3178
        %v3182 = vadd.f32 %v3173, %v3178
        %s3183 = scalar_lea.vmem %s11, 16
        %v3184 = vld [vmem:[%s3183] sm:$0xf]
        %v3185 = vld [vmem:[%s3183 + $0x4] sm:$0xf]
        %v3186 = vld [vmem:[%s3183 + $0x8] sm:$0xf]
        %v3187 = vld [vmem:[%s3183 + $0xc] sm:$0xf]
        %v3188 = vpack.c.bf16 %v3181, %v3180
        %v3189 = vpack.c.bf16 %v3182, %v3182
        %s3190 = scalar_lea.vmem %s12, 1
        %v3191 = vld [vmem:[%s3190] sm:$0x1]
        %v3193 = vlaneseq
        %v3194 = vshrl.u32 %v3193, 7
        %v3195 = vsub.s32 0, %v3194
        %v3196 = vrot.slane %v3191, %v3195
        %v3202 = vunpack.c.l.b16 %v3184
        %v3203 = vunpack.c.l.b16 %v3185
        %v3204 = vunpack.c.l.b16 %v3186
        %v3205 = vunpack.c.l.b16 %v3187
        %v3206 = vpack.c.b16 %v3203, %v3202
        %v3207 = vpack.c.b16 %v3205, %v3204
        %v3211 = vsel %vm690, %v3188, 0
        %v3214 = vsel %vm690, %v3189, 0
        %3216 = vmatprep.subr.bf16.mxu0 0
        %3217 = vmatpush1.bf16.msra.mxu0 %v3206
        %3218 = vmatprep.subr.bf16.mxu0 0
        %3219 = vmatpush1.bf16.msra.mxu0 %v3207
        %3220 = vmatprep.subr.bf16.mxu0 0
        %3221 = vmatpush1.bf16.msra.mxu0 0
        %3222 = vmatprep.subr.bf16.mxu0 0
        %3223 = vmatpush1.bf16.msra.mxu0 0
        %3224 = vmatprep.subr.bf16.mxu0 0
        %3225 = vmatpush1.bf16.msra.mxu0 0
        %3226 = vmatprep.subr.bf16.mxu0 0
        %3227 = vmatpush1.bf16.msra.mxu0 0
        %3228 = vmatprep.subr.bf16.mxu0 0
        %3229 = vmatpush1.bf16.msra.mxu0 0
        %3230 = vmatprep.subr.bf16.mxu0 0
        %3231 = vmatpush1.bf16.msra.mxu0 0
        %3232 = vmatprep.subr.bf16.mxu0 0
        %3233 = vmatpush1.bf16.msra.mxu0 0
        %3234 = vmatprep.subr.bf16.mxu0 0
        %3235 = vmatpush1.bf16.msra.mxu0 0
        %3236 = vmatprep.subr.bf16.mxu0 0
        %3237 = vmatpush1.bf16.msra.mxu0 0
        %3238 = vmatprep.subr.bf16.mxu0 0
        %3239 = vmatpush1.bf16.msra.mxu0 0
        %3240 = vmatprep.subr.bf16.mxu0 0
        %3241 = vmatpush1.bf16.msra.mxu0 0
        %3242 = vmatprep.subr.bf16.mxu0 0
        %3243 = vmatpush1.bf16.msra.mxu0 0
        %3244 = vmatprep.subr.bf16.mxu0 0
        %3245 = vmatpush1.bf16.msra.mxu0 0
        %3246 = vmatprep.subr.bf16.mxu0 0
        %3247 = vmatpush1.bf16.msra.mxu0 0
        %3248 = vmatprep.mubr.bf16.mxu0 0
        %3249 = vmatmul.mubr.bf16.gmra.mrb[0].mxu0 %v3211
        %v3250 = vpop.f32.mrb[0].mxu0
        %v3251 = vadd.f32 %v3196, %v3250
        %v3252 = vpop.f32.mrb[0].mxu0
        %v3253 = vpop.f32.mrb[0].mxu0
        %v3254 = vadd.f32 %v3196, %v3253
        %v3255 = vpop.f32.mrb[0].mxu0
        %3256 = vmatprep.mubr.bf16.mxu0 0
        %3257 = vmatmul.mubr.bf16.gmra.mrb[0].mxu0 %v3214
        %v3258 = vpop.f32.mrb[0].mxu0
        %v3259 = vadd.f32 %v3196, %v3258
        %v3260 = vpop.f32.mrb[0].mxu0
        %v3261 = vpop.f32.mrb[0].mxu0
        %v3262 = vpop.f32.mrb[0].mxu0
        %3263 = vdwg.mxu0
        %v3264 = vmul.f32 %v3251, 0.5
        %v3265 = vmul.f32 %v3254, 0.5
        %v3266 = vmul.f32 %v3259, 0.5
        %v3267 = vmul.f32 %v3251, 0.70710677
        %v3268 = vmul.f32 %v3254, 0.70710677
        %v3269 = vmul.f32 %v3259, 0.70710677
        %v3270 = verf.f32.pop %v3267
        %v3271 = verf.f32.pop %v3268
        %v3272 = verf.f32.pop %v3269
        %v3273 = vadd.f32 %v3270, 1.0
        %v3274 = vadd.f32 %v3271, 1.0
        %v3275 = vadd.f32 %v3272, 1.0
        %v3276 = vmul.f32 %v3264, %v3273
        %v3277 = vmul.f32 %v3265, %v3274
        %v3278 = vmul.f32 %v3266, %v3275
        %s3279 = scalar_lea.vmem %s13, 64
        %v3280 = vld [vmem:[%s3279] sm:$0xf]
        %v3281 = vld [vmem:[%s3279 + $0x4] sm:$0xf]
        %v3282 = vld [vmem:[%s3279 + $0x8] sm:$0xf]
        %v3283 = vld [vmem:[%s3279 + $0xc] sm:$0xf]
        %v3284 = vld [vmem:[%s3279 + $0x10] sm:$0xf]
        %v3285 = vld [vmem:[%s3279 + $0x14] sm:$0xf]
        %v3286 = vld [vmem:[%s3279 + $0x18] sm:$0xf]
        %v3287 = vld [vmem:[%s3279 + $0x1c] sm:$0xf]
        %v3288 = vld [vmem:[%s3279 + $0x20] sm:$0xf]
        %v3289 = vld [vmem:[%s3279 + $0x24] sm:$0xf]
        %v3290 = vld [vmem:[%s3279 + $0x28] sm:$0xf]
        %v3291 = vld [vmem:[%s3279 + $0x2c] sm:$0xf]
        %v3292 = vld [vmem:[%s3279 + $0x30] sm:$0xf]
        %v3293 = vld [vmem:[%s3279 + $0x34] sm:$0xf]
        %v3294 = vld [vmem:[%s3279 + $0x38] sm:$0xf]
        %v3295 = vld [vmem:[%s3279 + $0x3c] sm:$0xf]
        %v3296 = vpack.c.bf16 %v3277, %v3276
        %v3297 = vpack.c.bf16 %v3278, %v3278
        %v3314 = vunpack.c.l.b16 %v3280
        %v3315 = vunpack.c.l.b16 %v3281
        %v3316 = vunpack.c.l.b16 %v3282
        %v3317 = vunpack.c.l.b16 %v3283
        %v3318 = vunpack.c.l.b16 %v3284
        %v3319 = vunpack.c.l.b16 %v3285
        %v3320 = vunpack.c.l.b16 %v3286
        %v3321 = vunpack.c.l.b16 %v3287
        %v3322 = vunpack.c.l.b16 %v3288
        %v3323 = vunpack.c.l.b16 %v3289
        %v3324 = vunpack.c.l.b16 %v3290
        %v3325 = vunpack.c.l.b16 %v3291
        %v3326 = vunpack.c.l.b16 %v3292
        %v3327 = vunpack.c.l.b16 %v3293
        %v3328 = vunpack.c.l.b16 %v3294
        %v3329 = vunpack.c.l.b16 %v3295
        %v3330 = vpack.c.b16 %v3315, %v3314
        %v3331 = vpack.c.b16 %v3317, %v3316
        %v3332 = vpack.c.b16 %v3319, %v3318
        %v3333 = vpack.c.b16 %v3321, %v3320
        %v3334 = vpack.c.b16 %v3323, %v3322
        %v3335 = vpack.c.b16 %v3325, %v3324
        %v3336 = vpack.c.b16 %v3327, %v3326
        %v3337 = vpack.c.b16 %v3329, %v3328
        %3346 = vmatprep.subr.bf16.mxu0 0
        %3347 = vmatpush1.bf16.msra.mxu0 %v3330
        %3348 = vmatprep.subr.bf16.mxu0 0
        %3349 = vmatpush1.bf16.msra.mxu0 %v3331
        %3350 = vmatprep.subr.bf16.mxu0 0
        %3351 = vmatpush1.bf16.msra.mxu0 %v3332
        %3352 = vmatprep.subr.bf16.mxu0 0
        %3353 = vmatpush1.bf16.msra.mxu0 %v3333
        %3354 = vmatprep.subr.bf16.mxu0 0
        %3355 = vmatpush1.bf16.msra.mxu0 %v3334
        %3356 = vmatprep.subr.bf16.mxu0 0
        %3357 = vmatpush1.bf16.msra.mxu0 %v3335
        %3358 = vmatprep.subr.bf16.mxu0 0
        %3359 = vmatpush1.bf16.msra.mxu0 %v3336
        %3360 = vmatprep.subr.bf16.mxu0 0
        %3361 = vmatpush1.bf16.msra.mxu0 %v3337
        %3362 = vmatprep.subr.bf16.mxu0 0
        %3363 = vmatpush1.bf16.msra.mxu0 0
        %3364 = vmatprep.subr.bf16.mxu0 0
        %3365 = vmatpush1.bf16.msra.mxu0 0
        %3366 = vmatprep.subr.bf16.mxu0 0
        %3367 = vmatpush1.bf16.msra.mxu0 0
        %3368 = vmatprep.subr.bf16.mxu0 0
        %3369 = vmatpush1.bf16.msra.mxu0 0
        %3370 = vmatprep.subr.bf16.mxu0 0
        %3371 = vmatpush1.bf16.msra.mxu0 0
        %3372 = vmatprep.subr.bf16.mxu0 0
        %3373 = vmatpush1.bf16.msra.mxu0 0
        %3374 = vmatprep.subr.bf16.mxu0 0
        %3375 = vmatpush1.bf16.msra.mxu0 0
        %3376 = vmatprep.subr.bf16.mxu0 0
        %3377 = vmatpush1.bf16.msra.mxu0 0
        %3378 = vmatprep.mubr.bf16.mxu0 0
        %3379 = vmatmul.mubr.bf16.gmra.mrb[0].mxu0 %v3296
        %v3380 = vpop.f32.mrb[0].mxu0
        %v3381 = vadd.f32 0.0, %v3380
        %v3382 = vpop.f32.mrb[0].mxu0
        %v3383 = vpop.f32.mrb[0].mxu0
        %v3384 = vpop.f32.mrb[0].mxu0
        %3385 = vmatprep.mubr.bf16.mxu0 0
        %3386 = vmatmul.mubr.bf16.gmra.mrb[0].mxu0 %v3297
        %v3387 = vpop.f32.mrb[0].mxu0
        %v3388 = vpop.f32.mrb[0].mxu0
        %v3389 = vpop.f32.mrb[0].mxu0
        %v3390 = vpop.f32.mrb[0].mxu0
        %3391 = vdwg.mxu0
        %v3392 = vadd.f32 %v3119, %v3381
        %s3393 = scalar_lea.vmem %s14, 1
        %v3394 = vld [vmem:[%s3393] sm:$0x1]
        %v3396 = vlaneseq
        %v3397 = vshrl.u32 %v3396, 7
        %v3398 = vsub.s32 0, %v3397
        %v3399 = vrot.slane %v3394, %v3398
        %v3401 = vadd.f32 %v3392, %v3399
        %v3402 = vld [vmem:[%s15] sm:$0x1]
        %v3403 = vld [vmem:[%s16] sm:$0x1]
        %v3404 = vsel %vm697, %v3401, 0.0
        %3405 = vadd.xlane.f32.xlu0 %v3404
        %v3406 = vpop.xlane.xlu0 %3405
        %v3407 = vmul.f32 %v3406, %v701
        %v3408 = vsub.f32 %v3401, %v3407
        %v3409 = vmul.f32 %v3408, %v3408
        %v3410 = vsel %vm697, %v3409, 0.0
        %3411 = vadd.xlane.f32.xlu0 %v3410
        %v3412 = vpop.xlane.xlu0 %3411
        %v3413 = vmul.f32 %v3412, %v701
        %v3414 = vadd.f32 %v3413, 1e-06
        %v3415 = vrsqrt.pop %v3414
        %v3416 = vmul.f32 %v3408, %v3415
        %v3417 = vmul.f32 %v3416, %v3402
        %v3418 = vadd.f32 %v3417, %v3403
        %v3419 = vld [vmem:[%s17] sm:$0xf]
        %v3420 = vld [vmem:[%s17 + $0x4] sm:$0xf]
        %v3421 = vld [vmem:[%s17 + $0x8] sm:$0xf]
        %v3422 = vld [vmem:[%s17 + $0xc] sm:$0xf]
        %v3423 = vpack.c.bf16 %v3418, %v3418
        %v3424 = vld [vmem:[%s18] sm:$0x1]
        %v3429 = vunpack.c.l.b16 %v3419
        %v3430 = vunpack.c.l.b16 %v3420
        %v3431 = vunpack.c.l.b16 %v3421
        %v3432 = vunpack.c.l.b16 %v3422
        %v3433 = vpack.c.b16 %v3430, %v3429
        %v3434 = vpack.c.b16 %v3432, %v3431
        %v3438 = vsel %vm690, %v3423, 0
        %3440 = vmatprep.subr.bf16.mxu0 0
        %3441 = vmatpush1.bf16.msra.mxu0 %v3433
        %3442 = vmatprep.subr.bf16.mxu0 0
        %3443 = vmatpush1.bf16.msra.mxu0 %v3434
        %3444 = vmatprep.subr.bf16.mxu0 0
        %3445 = vmatpush1.bf16.msra.mxu0 0
        %3446 = vmatprep.subr.bf16.mxu0 0
        %3447 = vmatpush1.bf16.msra.mxu0 0
        %3448 = vmatprep.subr.bf16.mxu0 0
        %3449 = vmatpush1.bf16.msra.mxu0 0
        %3450 = vmatprep.subr.bf16.mxu0 0
        %3451 = vmatpush1.bf16.msra.mxu0 0
        %3452 = vmatprep.subr.bf16.mxu0 0
        %3453 = vmatpush1.bf16.msra.mxu0 0
        %3454 = vmatprep.subr.bf16.mxu0 0
        %3455 = vmatpush1.bf16.msra.mxu0 0
        %3456 = vmatprep.subr.bf16.mxu0 0
        %3457 = vmatpush1.bf16.msra.mxu0 0
        %3458 = vmatprep.subr.bf16.mxu0 0
        %3459 = vmatpush1.bf16.msra.mxu0 0
        %3460 = vmatprep.subr.bf16.mxu0 0
        %3461 = vmatpush1.bf16.msra.mxu0 0
        %3462 = vmatprep.subr.bf16.mxu0 0
        %3463 = vmatpush1.bf16.msra.mxu0 0
        %3464 = vmatprep.subr.bf16.mxu0 0
        %3465 = vmatpush1.bf16.msra.mxu0 0
        %3466 = vmatprep.subr.bf16.mxu0 0
        %3467 = vmatpush1.bf16.msra.mxu0 0
        %3468 = vmatprep.subr.bf16.mxu0 0
        %3469 = vmatpush1.bf16.msra.mxu0 0
        %3470 = vmatprep.subr.bf16.mxu0 0
        %3471 = vmatpush1.bf16.msra.mxu0 0
        %3472 = vmatprep.mubr.bf16.mxu0 0
        %3473 = vmatmul.mubr.bf16.gmra.mrb[0].mxu0 %v3438
        %v3474 = vpop.f32.mrb[0].mxu0
        %v3475 = vadd.f32 %v3424, %v3474
        %v3476 = vpop.f32.mrb[0].mxu0
        %v3477 = vpop.f32.mrb[0].mxu0
        %v3478 = vpop.f32.mrb[0].mxu0
        %3479 = vdwg.mxu0
        %3480 = vst [vmem:[%s594] sm:$0x1] %v3475
        %s3481 = sand.u32 %s445, 1
        %s3482 = scalar_lea.sflag [#allocation3], %s3481
        %s3483 = sand.u32 %s445, 1
        %s3484 = scalar_lea.vmem [#allocation2], %s3483
        // Predicated region
        $region97: #{vit_forward.1} parent=95 // pred_check
          %p3485 = pneg %p455
        $region98: #{vit_forward.1} parent=95 // pred_check_branch
          %3487 = sbr.rel (%p3485) target = $region100
        $region99: #{vit_forward.1} parent=95 // pred_region
          %s3489 = ssub.s32 16, 16
          %3490 = vsyncadd %s3482, %s3489
          %s3491 = smul.addr %s33, 16
          %s3492 = scalar_lea.hbm %s19, %s3491
          %s3494 = sshll.u32 %s3484, 4
          %s3495 = int_to_ptr.vmem [resolvable:$true] %s3494
          %3497 = dma.vmem_to_hbm [thread:$0]  %s3495, 16, %s3492, %s3482
        $region100: #{vit_forward.1} parent=95 // pred_fallthru
          _
      $region96: #{vit_forward.1} parent=5 // pred_fallthru
        _
      %p3498 = scmp.le.s32.totalorder 2, %s28
      // Predicated region
      $region101: #{vit_forward.1} parent=5 // pred_check
        %p3499 = pneg %p3498
      $region102: #{vit_forward.1} parent=5 // pred_check_branch
        %3501 = sbr.rel (%p3499) target = $region104
      $region103: #{vit_forward.1} parent=5 // pred_region
        %s3502 = ssub.s32 %s28, 2
        // Predicated region
        $region105: #{vit_forward.1} parent=103 // pred_check
          %p3503 = pneg %p461
        $region106: #{vit_forward.1} parent=103 // pred_check_branch
          %3505 = sbr.rel (%p3503) target = $region108
        $region107: #{vit_forward.1} parent=103 // pred_region
          %s3506 = sand.u32 %s446, 1
          %s3507 = scalar_lea.sflag [#allocation3], %s3506
          %s3508 = sand.u32 %s446, 1
          %s3509 = scalar_lea.vmem [#allocation2], %s3508
          %3510 = dma.done %s3507, 16
        $region108: #{vit_forward.1} parent=103 // pred_fallthru
          _
      $region104: #{vit_forward.1} parent=5 // pred_fallthru
        _
    $region6: #{vit_forward.1} parent=1 // loop_footer
      %s32 = sadd.s32 1, %s28
    $region7: #{vit_forward.1} parent=1 // loop_footer_branch
      %27 = sbr.rel target = $region3
    $region8: #{vit_forward.1} parent=1 // loop_exit
      _
    %3511 = vsyncpa [#allocation3], 1
    %s3512 = scalar_lea.sflag [#allocation3], 1
    %3513 = vsyncpa %s3512, 1

</llo_original>
